<compile_context>
chip_gen: v7x
topology: tpu7x:2x2x1
jax: 0.10.0
libtpu: 0.0.40
codegen_flags: <defaults>
</compile_context>

<pallas_src>
import functools

import jax
import jax.numpy as jnp
from jax.experimental import pallas as pl
from jax.experimental.pallas import tpu as pltpu

EPS = 1e-12


def mha_block_kernel(x_ref, wq_ref, wk_ref, wv_ref, bq_ref, bk_ref, bv_ref,
                     wo_ref, bo_ref, gamma_ref, beta_ref, o_ref, *,
                     num_heads, true_embed_dim, eps):
    """A block of Bb batch elements: self-attention + residual + gLN.

    Shapes (Ep = embed dim zero-padded to a multiple of 128, hd = head dim):
      x_ref          (Bb, T, Ep)
      wq/wk/wv_ref   (H, Ep, hd)   pre-transposed; q branch pre-scaled by 1/sqrt(hd)
      bq/bk/bv_ref   (H, 1, hd)
      wo_ref         (H, hd, Ep)   per-head rows of out_proj.weight.T (output padded)
      bo_ref         (1, Ep)
      gamma/beta_ref (1, 1, Ep)
      o_ref          (Bb, T, Ep)
    """
    Bb, T, Ep = x_ref.shape
    x = x_ref[...]                              # keep input dtype for the MXU
    x2 = x.reshape(Bb * T, Ep)

    # Accumulate the output projection head by head: replaces the lane-slice +
    # concatenate of the packed formulation with MXU matmuls plus a VPU add.
    attn = jnp.zeros((Bb * T, Ep), jnp.float32)
    for h in range(num_heads):                  # unrolled; H is small and static
        qh = (jnp.dot(x2, wq_ref[h], preferred_element_type=jnp.float32)
              + bq_ref[h]).reshape(Bb, T, -1)
        kh = (jnp.dot(x2, wk_ref[h], preferred_element_type=jnp.float32)
              + bk_ref[h]).reshape(Bb, T, -1)
        vh = (jnp.dot(x2, wv_ref[h], preferred_element_type=jnp.float32)
              + bv_ref[h]).reshape(Bb, T, -1)

        # scores: contraction over head_dim, batched over the Bb block; no .T
        s = jnp.einsum('bqd,bkd->bqk', qh, kh,
                       preferred_element_type=jnp.float32)
        s = s - jnp.max(s, axis=-1, keepdims=True)
        p = jnp.exp(s)
        ctx = jnp.einsum('bqk,bkd->bqd', p, vh,
                         preferred_element_type=jnp.float32)
        # normalize AFTER the PV matmul: (Bb, T, hd) multiply by an EUP
        # approximate reciprocal instead of dividing the (T, T) prob matrix.
        ctx = ctx * pl.reciprocal(jnp.sum(p, axis=-1, keepdims=True),
                                  approx=True)

        attn = attn + jnp.dot(ctx.reshape(Bb * T, -1), wo_ref[h],
                              preferred_element_type=jnp.float32)

    # output bias + residual
    y = (attn + bo_ref[...] + x2.astype(jnp.float32)).reshape(Bb, T, Ep)

    # gLN: statistics over all (T, E_true) elements of each batch element.
    # Padded channels of y are exactly zero, so sums over the padded tile
    # divided by the true element count are exact; single-pass variance.
    inv_cnt = 1.0 / float(T * true_embed_dim)
    s1 = jnp.sum(jnp.sum(y, axis=2, keepdims=True), axis=1, keepdims=True)
    s2 = jnp.sum(jnp.sum(y * y, axis=2, keepdims=True), axis=1, keepdims=True)
    mean = s1 * inv_cnt
    var = s2 * inv_cnt - mean * mean
    y_norm = (y - mean) * jax.lax.rsqrt(var + eps)
    o_ref[...] = (y_norm * gamma_ref[...] + beta_ref[...]).astype(o_ref.dtype)


def _pick_block_batch(batch, target):
    """Largest divisor of `batch` <= target, preferring >= 2 grid steps so both
    v7x TensorCores get work on the parallel batch axis."""
    divisors = [d for d in range(1, batch + 1)
                if batch % d == 0 and d <= max(1, target)]
    multi_step = [d for d in divisors if batch // d >= 2]
    pool = multi_step if multi_step else divisors
    return max(pool)


def _prepare_params(params, *, num_heads, embed_dim, padded_dim):
    """Pre-transpose / pre-split per head / pre-scale the PyTorch parameters."""
    in_w, in_b, out_w, out_b, gamma, beta = params
    E, Ep, H = embed_dim, padded_dim, num_heads
    hd = E // H
    scale = 1.0 / float(hd) ** 0.5
    pad_e = Ep - E

    wq, wk, wv = in_w[:E], in_w[E:2 * E], in_w[2 * E:]
    bq, bk, bv = in_b[:E], in_b[E:2 * E], in_b[2 * E:]
    wq, bq = wq * scale, bq * scale            # fold 1/sqrt(hd) into the q branch

    def split_w(w):                            # (E, E) -> (H, Ep, hd)
        wt = jnp.pad(w.T, ((0, pad_e), (0, 0)))              # pad input channels
        return jnp.transpose(wt.reshape(Ep, H, hd), (1, 0, 2))

    def split_b(b):                            # (E,) -> (H, 1, hd)
        return b.reshape(H, hd)[:, None, :]

    wo = jnp.pad(out_w.T, ((0, 0), (0, pad_e))).reshape(H, hd, Ep)
    bo = jnp.pad(out_b, (0, pad_e)).reshape(1, Ep)
    gamma_p = jnp.pad(gamma, (0, pad_e)).reshape(1, 1, Ep)
    beta_p = jnp.pad(beta, (0, pad_e)).reshape(1, 1, Ep)
    return (split_w(wq), split_w(wk), split_w(wv),
            split_b(bq), split_b(bk), split_b(bv), wo, bo, gamma_p, beta_p)


def multihead_attention_block(x_tbe, params, *, num_heads, eps=EPS,
                              block_batch=8):
    """x_tbe: (T, B, E) float32 -> (T, B, E) float32."""
    T, B, E = x_tbe.shape
    assert E % num_heads == 0
    hd = E // num_heads
    Ep = ((E + 127) // 128) * 128              # lane-dense channel padding

    x = jnp.transpose(x_tbe, (1, 0, 2))        # (B, T, E)
    if Ep != E:
        x = jnp.pad(x, ((0, 0), (0, 0), (0, Ep - E)))

    (wq, wk, wv, bq, bk, bv, wo, bo, gamma_p, beta_p) = _prepare_params(
        params, num_heads=num_heads, embed_dim=E, padded_dim=Ep)

    bb = _pick_block_batch(B, block_batch)
    grid = (B // bb,)

    # Scoped-VMEM budget: double-buffered x/out blocks + weights + f32
    # temporaries, with headroom; capped at 64 MiB so it is valid on v7x.
    block_elems = bb * T * Ep
    weight_elems = 4 * num_heads * hd * Ep + 3 * num_heads * hd + 3 * Ep
    est_bytes = 4 * (14 * block_elems + 2 * weight_elems
                     + 4 * num_heads * bb * T * T)
    vmem_limit = int(min(64 * 1024 * 1024,
                         max(32 * 1024 * 1024, 2 * est_bytes)))

    kernel = functools.partial(mha_block_kernel, num_heads=num_heads,
                               true_embed_dim=E, eps=eps)
    out = pl.pallas_call(
        kernel,
        out_shape=jax.ShapeDtypeStruct((B, T, Ep), x_tbe.dtype),
        grid=grid,
        in_specs=[
            pl.BlockSpec((bb, T, Ep), lambda b: (b, 0, 0)),          # x block
            pl.BlockSpec((num_heads, Ep, hd), lambda b: (0, 0, 0)),  # Wq (per head)
            pl.BlockSpec((num_heads, Ep, hd), lambda b: (0, 0, 0)),  # Wk
            pl.BlockSpec((num_heads, Ep, hd), lambda b: (0, 0, 0)),  # Wv
            pl.BlockSpec((num_heads, 1, hd), lambda b: (0, 0, 0)),   # bq
            pl.BlockSpec((num_heads, 1, hd), lambda b: (0, 0, 0)),   # bk
            pl.BlockSpec((num_heads, 1, hd), lambda b: (0, 0, 0)),   # bv
            pl.BlockSpec((num_heads, hd, Ep), lambda b: (0, 0, 0)),  # Wo (per head)
            pl.BlockSpec((1, Ep), lambda b: (0, 0)),                 # bo
            pl.BlockSpec((1, 1, Ep), lambda b: (0, 0, 0)),           # gLN gamma
            pl.BlockSpec((1, 1, Ep), lambda b: (0, 0, 0)),           # gLN beta
        ],
        out_specs=pl.BlockSpec((bb, T, Ep), lambda b: (b, 0, 0)),
        compiler_params=pltpu.CompilerParams(
            dimension_semantics=("parallel",),
            vmem_limit_bytes=vmem_limit),
    )(x, wq, wk, wv, bq, bk, bv, wo, bo, gamma_p, beta_p)

    if Ep != E:
        out = out[:, :, :E]
    return jnp.transpose(out, (1, 0, 2))       # back to (T, B, E)


def reference_jax(x_tbe, params, *, num_heads, eps=EPS):
    """Pure-JAX reference mirroring nn.MultiheadAttention + residual + gLN."""
    in_w, in_b, out_w, out_b, gamma, beta = params
    T, B, E = x_tbe.shape
    hd = E // num_heads
    x = jnp.transpose(x_tbe, (1, 0, 2))        # (B, T, E)
    qkv = jnp.einsum('bte,fe->btf', x, in_w) + in_b
    q, k, v = qkv[..., :E] / hd ** 0.5, qkv[..., E:2 * E], qkv[..., 2 * E:]

    def split_heads(a):
        return a.reshape(B, T, num_heads, hd).transpose(0, 2, 1, 3)

    q, k, v = split_heads(q), split_heads(k), split_heads(v)
    s = jnp.einsum('bhtd,bhsd->bhts', q, k)
    p = jax.nn.softmax(s, axis=-1)
    ctx = jnp.einsum('bhts,bhsd->bhtd', p, v).transpose(0, 2, 1, 3).reshape(B, T, E)
    y = jnp.einsum('bte,fe->btf', ctx, out_w) + out_b + x
    mean = jnp.mean(y, axis=(1, 2), keepdims=True)
    var = jnp.mean((y - mean) ** 2, axis=(1, 2), keepdims=True)
    y = (y - mean) / jnp.sqrt(var + eps) * gamma + beta
    return jnp.transpose(y, (1, 0, 2))


def init_params(key, embed_dim):
    ks = jax.random.split(key, 4)
    in_w = 0.05 * jax.random.normal(ks[0], (3 * embed_dim, embed_dim), jnp.float32)
    in_b = 0.01 * jax.random.normal(ks[1], (3 * embed_dim,), jnp.float32)
    out_w = 0.05 * jax.random.normal(ks[2], (embed_dim, embed_dim), jnp.float32)
    out_b = 0.01 * jax.random.normal(ks[3], (embed_dim,), jnp.float32)
    gamma = jnp.ones((embed_dim,), jnp.float32)
    beta = jnp.zeros((embed_dim,), jnp.float32)
    return (in_w, in_b, out_w, out_b, gamma, beta)


if __name__ == "__main__":
    T, B, E, H = 8, 2, 32, 4          # seq=8, batch=2, embed_dim=32, heads=4
    key = jax.random.PRNGKey(0)
    kx, kp = jax.random.split(key)
    x = jax.random.normal(kx, (T, B, E), jnp.float32)
    params = init_params(kp, E)

    out = multihead_attention_block(x, params, num_heads=H)
    out = jax.block_until_ready(out)

    ref = reference_jax(x, params, num_heads=H)
    assert out.shape == (T, B, E)
    assert jnp.allclose(out, ref, atol=2e-3, rtol=2e-3), "mismatch vs JAX reference"

    print("KERNEL_OK")
</pallas_src>

<mosaic_0001>
module attributes {stable_mosaic.version = 11 : i64} {
  func.func @mha_block_kernel(%arg0: i32, %arg1: memref<1x8x128xf32, #tpu.memory_space<vmem>>, %arg2: memref<4x128x8xf32, #tpu.memory_space<vmem>>, %arg3: memref<4x128x8xf32, #tpu.memory_space<vmem>>, %arg4: memref<4x128x8xf32, #tpu.memory_space<vmem>>, %arg5: memref<4x1x8xf32, #tpu.memory_space<vmem>>, %arg6: memref<4x1x8xf32, #tpu.memory_space<vmem>>, %arg7: memref<4x1x8xf32, #tpu.memory_space<vmem>>, %arg8: memref<4x8x128xf32, #tpu.memory_space<vmem>>, %arg9: memref<1x128xf32, #tpu.memory_space<vmem>>, %arg10: memref<1x1x128xf32, #tpu.memory_space<vmem>>, %arg11: memref<1x1x128xf32, #tpu.memory_space<vmem>>, %arg12: memref<1x8x128xf32, #tpu.memory_space<vmem>>) attributes {dimension_semantics = [#tpu.dimension_semantics<parallel>], iteration_bounds = array<i64: 2>, scalar_prefetch = 0 : i64, scratch_operands = 0 : i64, tpu.core_type = #tpu.core_type<tc>, window_params = [{transform_indices = @transform_0, window_bounds = array<i64: 1, 8, 128>}, {pipeline_mode = #tpu.pipeline_mode<synchronous>, transform_indices = @transform_1, window_bounds = array<i64: 4, 128, 8>}, {pipeline_mode = #tpu.pipeline_mode<synchronous>, transform_indices = @transform_2, window_bounds = array<i64: 4, 128, 8>}, {pipeline_mode = #tpu.pipeline_mode<synchronous>, transform_indices = @transform_3, window_bounds = array<i64: 4, 128, 8>}, {pipeline_mode = #tpu.pipeline_mode<synchronous>, transform_indices = @transform_4, window_bounds = array<i64: 4, 1, 8>}, {pipeline_mode = #tpu.pipeline_mode<synchronous>, transform_indices = @transform_5, window_bounds = array<i64: 4, 1, 8>}, {pipeline_mode = #tpu.pipeline_mode<synchronous>, transform_indices = @transform_6, window_bounds = array<i64: 4, 1, 8>}, {pipeline_mode = #tpu.pipeline_mode<synchronous>, transform_indices = @transform_7, window_bounds = array<i64: 4, 8, 128>}, {pipeline_mode = #tpu.pipeline_mode<synchronous>, transform_indices = @transform_8, window_bounds = array<i64: 1, 128>}, {pipeline_mode = #tpu.pipeline_mode<synchronous>, transform_indices = @transform_9, window_bounds = array<i64: 1, 1, 128>}, {pipeline_mode = #tpu.pipeline_mode<synchronous>, transform_indices = @transform_10, window_bounds = array<i64: 1, 1, 128>}, {transform_indices = @transform_11, window_bounds = array<i64: 1, 8, 128>}]} {
    %c0 = arith.constant 0 : index
    %c0_0 = arith.constant 0 : index
    %c0_1 = arith.constant 0 : index
    %0 = vector.load %arg1[%c0, %c0_0, %c0_1] : memref<1x8x128xf32, #tpu.memory_space<vmem>>, vector<1x8x128xf32>
    %1 = vector.shape_cast %0 : vector<1x8x128xf32> to vector<8x128xf32>
    %cst = arith.constant 0.000000e+00 : f32
    %2 = vector.broadcast %cst : f32 to vector<8x128xf32>
    %c0_2 = arith.constant 0 : index
    %c0_3 = arith.constant 0 : index
    %c0_4 = arith.constant 0 : index
    %3 = vector.load %arg2[%c0_2, %c0_3, %c0_4] : memref<4x128x8xf32, #tpu.memory_space<vmem>>, vector<1x128x8xf32>
    %4 = vector.shape_cast %3 : vector<1x128x8xf32> to vector<128x8xf32>
    %cst_5 = arith.constant dense<0.000000e+00> : vector<8x8xf32>
    %5 = tpu.matmul %1, %4, %cst_5 {dimension_numbers = #tpu.dot_dimension_numbers<[1], [0], [0], [1], [0, 0, 1, 1], [], []>} : vector<8x128xf32>, vector<128x8xf32>, vector<8x8xf32> -> vector<8x8xf32>
    %c0_6 = arith.constant 0 : index
    %c0_7 = arith.constant 0 : index
    %c0_8 = arith.constant 0 : index
    %6 = vector.load %arg5[%c0_6, %c0_7, %c0_8] : memref<4x1x8xf32, #tpu.memory_space<vmem>>, vector<1x1x8xf32>
    %7 = vector.shape_cast %6 : vector<1x1x8xf32> to vector<1x8xf32>
    %8 = vector.broadcast %7 : vector<1x8xf32> to vector<8x8xf32>
    %9 = arith.addf %5, %8 : vector<8x8xf32>
    %10 = vector.shape_cast %9 : vector<8x8xf32> to vector<1x8x8xf32>
    %c0_9 = arith.constant 0 : index
    %c0_10 = arith.constant 0 : index
    %c0_11 = arith.constant 0 : index
    %11 = vector.load %arg3[%c0_9, %c0_10, %c0_11] : memref<4x128x8xf32, #tpu.memory_space<vmem>>, vector<1x128x8xf32>
    %12 = vector.shape_cast %11 : vector<1x128x8xf32> to vector<128x8xf32>
    %cst_12 = arith.constant dense<0.000000e+00> : vector<8x8xf32>
    %13 = tpu.matmul %1, %12, %cst_12 {dimension_numbers = #tpu.dot_dimension_numbers<[1], [0], [0], [1], [0, 0, 1, 1], [], []>} : vector<8x128xf32>, vector<128x8xf32>, vector<8x8xf32> -> vector<8x8xf32>
    %c0_13 = arith.constant 0 : index
    %c0_14 = arith.constant 0 : index
    %c0_15 = arith.constant 0 : index
    %14 = vector.load %arg6[%c0_13, %c0_14, %c0_15] : memref<4x1x8xf32, #tpu.memory_space<vmem>>, vector<1x1x8xf32>
    %15 = vector.shape_cast %14 : vector<1x1x8xf32> to vector<1x8xf32>
    %16 = vector.broadcast %15 : vector<1x8xf32> to vector<8x8xf32>
    %17 = arith.addf %13, %16 : vector<8x8xf32>
    %18 = vector.shape_cast %17 : vector<8x8xf32> to vector<1x8x8xf32>
    %c0_16 = arith.constant 0 : index
    %c0_17 = arith.constant 0 : index
    %c0_18 = arith.constant 0 : index
    %19 = vector.load %arg4[%c0_16, %c0_17, %c0_18] : memref<4x128x8xf32, #tpu.memory_space<vmem>>, vector<1x128x8xf32>
    %20 = vector.shape_cast %19 : vector<1x128x8xf32> to vector<128x8xf32>
    %cst_19 = arith.constant dense<0.000000e+00> : vector<8x8xf32>
    %21 = tpu.matmul %1, %20, %cst_19 {dimension_numbers = #tpu.dot_dimension_numbers<[1], [0], [0], [1], [0, 0, 1, 1], [], []>} : vector<8x128xf32>, vector<128x8xf32>, vector<8x8xf32> -> vector<8x8xf32>
    %c0_20 = arith.constant 0 : index
    %c0_21 = arith.constant 0 : index
    %c0_22 = arith.constant 0 : index
    %22 = vector.load %arg7[%c0_20, %c0_21, %c0_22] : memref<4x1x8xf32, #tpu.memory_space<vmem>>, vector<1x1x8xf32>
    %23 = vector.shape_cast %22 : vector<1x1x8xf32> to vector<1x8xf32>
    %24 = vector.broadcast %23 : vector<1x8xf32> to vector<8x8xf32>
    %25 = arith.addf %21, %24 : vector<8x8xf32>
    %26 = vector.shape_cast %25 : vector<8x8xf32> to vector<1x8x8xf32>
    "tpu.trace_start"() <{level = 10 : i32, message = "bqd,bkd->bqk"}> : () -> ()
    %cst_23 = arith.constant dense<0.000000e+00> : vector<1x8x8xf32>
    %27 = tpu.matmul %10, %18, %cst_23 {dimension_numbers = #tpu.dot_dimension_numbers<[2], [2], [1], [1], [0, 0, 0, 1, 1, 1], [0], [0]>} : vector<1x8x8xf32>, vector<1x8x8xf32>, vector<1x8x8xf32> -> vector<1x8x8xf32>
    "tpu.trace_stop"() : () -> ()
    %cst_24 = arith.constant dense<0xFF800000> : vector<1x8xf32>
    %28 = vector.multi_reduction <maximumf>, %27, %cst_24 [2] : vector<1x8x8xf32> to vector<1x8xf32>
    %29 = vector.shape_cast %28 : vector<1x8xf32> to vector<1x8x1xf32>
    %30 = vector.broadcast %29 : vector<1x8x1xf32> to vector<1x8x8xf32>
    %31 = arith.subf %27, %30 : vector<1x8x8xf32>
    %32 = math.exp %31 : vector<1x8x8xf32>
    "tpu.trace_start"() <{level = 10 : i32, message = "bqk,bkd->bqd"}> : () -> ()
    %cst_25 = arith.constant dense<0.000000e+00> : vector<1x8x8xf32>
    %33 = tpu.matmul %32, %26, %cst_25 {dimension_numbers = #tpu.dot_dimension_numbers<[2], [1], [1], [2], [0, 0, 0, 1, 1, 2], [0], [0]>} : vector<1x8x8xf32>, vector<1x8x8xf32>, vector<1x8x8xf32> -> vector<1x8x8xf32>
    "tpu.trace_stop"() : () -> ()
    %cst_26 = arith.constant dense<0.000000e+00> : vector<1x8xf32>
    %34 = vector.multi_reduction <add>, %32, %cst_26 [2] : vector<1x8x8xf32> to vector<1x8xf32>
    %35 = vector.shape_cast %34 : vector<1x8xf32> to vector<1x8x1xf32>
    %36 = tpu.reciprocal %35 {approx = true} : vector<1x8x1xf32> -> vector<1x8x1xf32>
    %37 = vector.broadcast %36 : vector<1x8x1xf32> to vector<1x8x8xf32>
    %38 = arith.mulf %33, %37 : vector<1x8x8xf32>
    %39 = vector.shape_cast %38 : vector<1x8x8xf32> to vector<8x8xf32>
    %c0_27 = arith.constant 0 : index
    %c0_28 = arith.constant 0 : index
    %c0_29 = arith.constant 0 : index
    %40 = vector.load %arg8[%c0_27, %c0_28, %c0_29] : memref<4x8x128xf32, #tpu.memory_space<vmem>>, vector<1x8x128xf32>
    %41 = vector.shape_cast %40 : vector<1x8x128xf32> to vector<8x128xf32>
    %cst_30 = arith.constant dense<0.000000e+00> : vector<8x128xf32>
    %42 = tpu.matmul %39, %41, %cst_30 {dimension_numbers = #tpu.dot_dimension_numbers<[1], [0], [0], [1], [0, 0, 1, 1], [], []>} : vector<8x8xf32>, vector<8x128xf32>, vector<8x128xf32> -> vector<8x128xf32>
    %43 = arith.addf %2, %42 : vector<8x128xf32>
    %c1 = arith.constant 1 : index
    %c0_31 = arith.constant 0 : index
    %c0_32 = arith.constant 0 : index
    %44 = vector.load %arg2[%c1, %c0_31, %c0_32] : memref<4x128x8xf32, #tpu.memory_space<vmem>>, vector<1x128x8xf32>
    %45 = vector.shape_cast %44 : vector<1x128x8xf32> to vector<128x8xf32>
    %cst_33 = arith.constant dense<0.000000e+00> : vector<8x8xf32>
    %46 = tpu.matmul %1, %45, %cst_33 {dimension_numbers = #tpu.dot_dimension_numbers<[1], [0], [0], [1], [0, 0, 1, 1], [], []>} : vector<8x128xf32>, vector<128x8xf32>, vector<8x8xf32> -> vector<8x8xf32>
    %c1_34 = arith.constant 1 : index
    %c0_35 = arith.constant 0 : index
    %c0_36 = arith.constant 0 : index
    %47 = vector.load %arg5[%c1_34, %c0_35, %c0_36] : memref<4x1x8xf32, #tpu.memory_space<vmem>>, vector<1x1x8xf32>
    %48 = vector.shape_cast %47 : vector<1x1x8xf32> to vector<1x8xf32>
    %49 = vector.broadcast %48 : vector<1x8xf32> to vector<8x8xf32>
    %50 = arith.addf %46, %49 : vector<8x8xf32>
    %51 = vector.shape_cast %50 : vector<8x8xf32> to vector<1x8x8xf32>
    %c1_37 = arith.constant 1 : index
    %c0_38 = arith.constant 0 : index
    %c0_39 = arith.constant 0 : index
    %52 = vector.load %arg3[%c1_37, %c0_38, %c0_39] : memref<4x128x8xf32, #tpu.memory_space<vmem>>, vector<1x128x8xf32>
    %53 = vector.shape_cast %52 : vector<1x128x8xf32> to vector<128x8xf32>
    %cst_40 = arith.constant dense<0.000000e+00> : vector<8x8xf32>
    %54 = tpu.matmul %1, %53, %cst_40 {dimension_numbers = #tpu.dot_dimension_numbers<[1], [0], [0], [1], [0, 0, 1, 1], [], []>} : vector<8x128xf32>, vector<128x8xf32>, vector<8x8xf32> -> vector<8x8xf32>
    %c1_41 = arith.constant 1 : index
    %c0_42 = arith.constant 0 : index
    %c0_43 = arith.constant 0 : index
    %55 = vector.load %arg6[%c1_41, %c0_42, %c0_43] : memref<4x1x8xf32, #tpu.memory_space<vmem>>, vector<1x1x8xf32>
    %56 = vector.shape_cast %55 : vector<1x1x8xf32> to vector<1x8xf32>
    %57 = vector.broadcast %56 : vector<1x8xf32> to vector<8x8xf32>
    %58 = arith.addf %54, %57 : vector<8x8xf32>
    %59 = vector.shape_cast %58 : vector<8x8xf32> to vector<1x8x8xf32>
    %c1_44 = arith.constant 1 : index
    %c0_45 = arith.constant 0 : index
    %c0_46 = arith.constant 0 : index
    %60 = vector.load %arg4[%c1_44, %c0_45, %c0_46] : memref<4x128x8xf32, #tpu.memory_space<vmem>>, vector<1x128x8xf32>
    %61 = vector.shape_cast %60 : vector<1x128x8xf32> to vector<128x8xf32>
    %cst_47 = arith.constant dense<0.000000e+00> : vector<8x8xf32>
    %62 = tpu.matmul %1, %61, %cst_47 {dimension_numbers = #tpu.dot_dimension_numbers<[1], [0], [0], [1], [0, 0, 1, 1], [], []>} : vector<8x128xf32>, vector<128x8xf32>, vector<8x8xf32> -> vector<8x8xf32>
    %c1_48 = arith.constant 1 : index
    %c0_49 = arith.constant 0 : index
    %c0_50 = arith.constant 0 : index
    %63 = vector.load %arg7[%c1_48, %c0_49, %c0_50] : memref<4x1x8xf32, #tpu.memory_space<vmem>>, vector<1x1x8xf32>
    %64 = vector.shape_cast %63 : vector<1x1x8xf32> to vector<1x8xf32>
    %65 = vector.broadcast %64 : vector<1x8xf32> to vector<8x8xf32>
    %66 = arith.addf %62, %65 : vector<8x8xf32>
    %67 = vector.shape_cast %66 : vector<8x8xf32> to vector<1x8x8xf32>
    "tpu.trace_start"() <{level = 10 : i32, message = "bqd,bkd->bqk"}> : () -> ()
    %cst_51 = arith.constant dense<0.000000e+00> : vector<1x8x8xf32>
    %68 = tpu.matmul %51, %59, %cst_51 {dimension_numbers = #tpu.dot_dimension_numbers<[2], [2], [1], [1], [0, 0, 0, 1, 1, 1], [0], [0]>} : vector<1x8x8xf32>, vector<1x8x8xf32>, vector<1x8x8xf32> -> vector<1x8x8xf32>
    "tpu.trace_stop"() : () -> ()
    %cst_52 = arith.constant dense<0xFF800000> : vector<1x8xf32>
    %69 = vector.multi_reduction <maximumf>, %68, %cst_52 [2] : vector<1x8x8xf32> to vector<1x8xf32>
    %70 = vector.shape_cast %69 : vector<1x8xf32> to vector<1x8x1xf32>
    %71 = vector.broadcast %70 : vector<1x8x1xf32> to vector<1x8x8xf32>
    %72 = arith.subf %68, %71 : vector<1x8x8xf32>
    %73 = math.exp %72 : vector<1x8x8xf32>
    "tpu.trace_start"() <{level = 10 : i32, message = "bqk,bkd->bqd"}> : () -> ()
    %cst_53 = arith.constant dense<0.000000e+00> : vector<1x8x8xf32>
    %74 = tpu.matmul %73, %67, %cst_53 {dimension_numbers = #tpu.dot_dimension_numbers<[2], [1], [1], [2], [0, 0, 0, 1, 1, 2], [0], [0]>} : vector<1x8x8xf32>, vector<1x8x8xf32>, vector<1x8x8xf32> -> vector<1x8x8xf32>
    "tpu.trace_stop"() : () -> ()
    %cst_54 = arith.constant dense<0.000000e+00> : vector<1x8xf32>
    %75 = vector.multi_reduction <add>, %73, %cst_54 [2] : vector<1x8x8xf32> to vector<1x8xf32>
    %76 = vector.shape_cast %75 : vector<1x8xf32> to vector<1x8x1xf32>
    %77 = tpu.reciprocal %76 {approx = true} : vector<1x8x1xf32> -> vector<1x8x1xf32>
    %78 = vector.broadcast %77 : vector<1x8x1xf32> to vector<1x8x8xf32>
    %79 = arith.mulf %74, %78 : vector<1x8x8xf32>
    %80 = vector.shape_cast %79 : vector<1x8x8xf32> to vector<8x8xf32>
    %c1_55 = arith.constant 1 : index
    %c0_56 = arith.constant 0 : index
    %c0_57 = arith.constant 0 : index
    %81 = vector.load %arg8[%c1_55, %c0_56, %c0_57] : memref<4x8x128xf32, #tpu.memory_space<vmem>>, vector<1x8x128xf32>
    %82 = vector.shape_cast %81 : vector<1x8x128xf32> to vector<8x128xf32>
    %cst_58 = arith.constant dense<0.000000e+00> : vector<8x128xf32>
    %83 = tpu.matmul %80, %82, %cst_58 {dimension_numbers = #tpu.dot_dimension_numbers<[1], [0], [0], [1], [0, 0, 1, 1], [], []>} : vector<8x8xf32>, vector<8x128xf32>, vector<8x128xf32> -> vector<8x128xf32>
    %84 = arith.addf %43, %83 : vector<8x128xf32>
    %c2 = arith.constant 2 : index
    %c0_59 = arith.constant 0 : index
    %c0_60 = arith.constant 0 : index
    %85 = vector.load %arg2[%c2, %c0_59, %c0_60] : memref<4x128x8xf32, #tpu.memory_space<vmem>>, vector<1x128x8xf32>
    %86 = vector.shape_cast %85 : vector<1x128x8xf32> to vector<128x8xf32>
    %cst_61 = arith.constant dense<0.000000e+00> : vector<8x8xf32>
    %87 = tpu.matmul %1, %86, %cst_61 {dimension_numbers = #tpu.dot_dimension_numbers<[1], [0], [0], [1], [0, 0, 1, 1], [], []>} : vector<8x128xf32>, vector<128x8xf32>, vector<8x8xf32> -> vector<8x8xf32>
    %c2_62 = arith.constant 2 : index
    %c0_63 = arith.constant 0 : index
    %c0_64 = arith.constant 0 : index
    %88 = vector.load %arg5[%c2_62, %c0_63, %c0_64] : memref<4x1x8xf32, #tpu.memory_space<vmem>>, vector<1x1x8xf32>
    %89 = vector.shape_cast %88 : vector<1x1x8xf32> to vector<1x8xf32>
    %90 = vector.broadcast %89 : vector<1x8xf32> to vector<8x8xf32>
    %91 = arith.addf %87, %90 : vector<8x8xf32>
    %92 = vector.shape_cast %91 : vector<8x8xf32> to vector<1x8x8xf32>
    %c2_65 = arith.constant 2 : index
    %c0_66 = arith.constant 0 : index
    %c0_67 = arith.constant 0 : index
    %93 = vector.load %arg3[%c2_65, %c0_66, %c0_67] : memref<4x128x8xf32, #tpu.memory_space<vmem>>, vector<1x128x8xf32>
    %94 = vector.shape_cast %93 : vector<1x128x8xf32> to vector<128x8xf32>
    %cst_68 = arith.constant dense<0.000000e+00> : vector<8x8xf32>
    %95 = tpu.matmul %1, %94, %cst_68 {dimension_numbers = #tpu.dot_dimension_numbers<[1], [0], [0], [1], [0, 0, 1, 1], [], []>} : vector<8x128xf32>, vector<128x8xf32>, vector<8x8xf32> -> vector<8x8xf32>
    %c2_69 = arith.constant 2 : index
    %c0_70 = arith.constant 0 : index
    %c0_71 = arith.constant 0 : index
    %96 = vector.load %arg6[%c2_69, %c0_70, %c0_71] : memref<4x1x8xf32, #tpu.memory_space<vmem>>, vector<1x1x8xf32>
    %97 = vector.shape_cast %96 : vector<1x1x8xf32> to vector<1x8xf32>
    %98 = vector.broadcast %97 : vector<1x8xf32> to vector<8x8xf32>
    %99 = arith.addf %95, %98 : vector<8x8xf32>
    %100 = vector.shape_cast %99 : vector<8x8xf32> to vector<1x8x8xf32>
    %c2_72 = arith.constant 2 : index
    %c0_73 = arith.constant 0 : index
    %c0_74 = arith.constant 0 : index
    %101 = vector.load %arg4[%c2_72, %c0_73, %c0_74] : memref<4x128x8xf32, #tpu.memory_space<vmem>>, vector<1x128x8xf32>
    %102 = vector.shape_cast %101 : vector<1x128x8xf32> to vector<128x8xf32>
    %cst_75 = arith.constant dense<0.000000e+00> : vector<8x8xf32>
    %103 = tpu.matmul %1, %102, %cst_75 {dimension_numbers = #tpu.dot_dimension_numbers<[1], [0], [0], [1], [0, 0, 1, 1], [], []>} : vector<8x128xf32>, vector<128x8xf32>, vector<8x8xf32> -> vector<8x8xf32>
    %c2_76 = arith.constant 2 : index
    %c0_77 = arith.constant 0 : index
    %c0_78 = arith.constant 0 : index
    %104 = vector.load %arg7[%c2_76, %c0_77, %c0_78] : memref<4x1x8xf32, #tpu.memory_space<vmem>>, vector<1x1x8xf32>
    %105 = vector.shape_cast %104 : vector<1x1x8xf32> to vector<1x8xf32>
    %106 = vector.broadcast %105 : vector<1x8xf32> to vector<8x8xf32>
    %107 = arith.addf %103, %106 : vector<8x8xf32>
    %108 = vector.shape_cast %107 : vector<8x8xf32> to vector<1x8x8xf32>
    "tpu.trace_start"() <{level = 10 : i32, message = "bqd,bkd->bqk"}> : () -> ()
    %cst_79 = arith.constant dense<0.000000e+00> : vector<1x8x8xf32>
    %109 = tpu.matmul %92, %100, %cst_79 {dimension_numbers = #tpu.dot_dimension_numbers<[2], [2], [1], [1], [0, 0, 0, 1, 1, 1], [0], [0]>} : vector<1x8x8xf32>, vector<1x8x8xf32>, vector<1x8x8xf32> -> vector<1x8x8xf32>
    "tpu.trace_stop"() : () -> ()
    %cst_80 = arith.constant dense<0xFF800000> : vector<1x8xf32>
    %110 = vector.multi_reduction <maximumf>, %109, %cst_80 [2] : vector<1x8x8xf32> to vector<1x8xf32>
    %111 = vector.shape_cast %110 : vector<1x8xf32> to vector<1x8x1xf32>
    %112 = vector.broadcast %111 : vector<1x8x1xf32> to vector<1x8x8xf32>
    %113 = arith.subf %109, %112 : vector<1x8x8xf32>
    %114 = math.exp %113 : vector<1x8x8xf32>
    "tpu.trace_start"() <{level = 10 : i32, message = "bqk,bkd->bqd"}> : () -> ()
    %cst_81 = arith.constant dense<0.000000e+00> : vector<1x8x8xf32>
    %115 = tpu.matmul %114, %108, %cst_81 {dimension_numbers = #tpu.dot_dimension_numbers<[2], [1], [1], [2], [0, 0, 0, 1, 1, 2], [0], [0]>} : vector<1x8x8xf32>, vector<1x8x8xf32>, vector<1x8x8xf32> -> vector<1x8x8xf32>
    "tpu.trace_stop"() : () -> ()
    %cst_82 = arith.constant dense<0.000000e+00> : vector<1x8xf32>
    %116 = vector.multi_reduction <add>, %114, %cst_82 [2] : vector<1x8x8xf32> to vector<1x8xf32>
    %117 = vector.shape_cast %116 : vector<1x8xf32> to vector<1x8x1xf32>
    %118 = tpu.reciprocal %117 {approx = true} : vector<1x8x1xf32> -> vector<1x8x1xf32>
    %119 = vector.broadcast %118 : vector<1x8x1xf32> to vector<1x8x8xf32>
    %120 = arith.mulf %115, %119 : vector<1x8x8xf32>
    %121 = vector.shape_cast %120 : vector<1x8x8xf32> to vector<8x8xf32>
    %c2_83 = arith.constant 2 : index
    %c0_84 = arith.constant 0 : index
    %c0_85 = arith.constant 0 : index
    %122 = vector.load %arg8[%c2_83, %c0_84, %c0_85] : memref<4x8x128xf32, #tpu.memory_space<vmem>>, vector<1x8x128xf32>
    %123 = vector.shape_cast %122 : vector<1x8x128xf32> to vector<8x128xf32>
    %cst_86 = arith.constant dense<0.000000e+00> : vector<8x128xf32>
    %124 = tpu.matmul %121, %123, %cst_86 {dimension_numbers = #tpu.dot_dimension_numbers<[1], [0], [0], [1], [0, 0, 1, 1], [], []>} : vector<8x8xf32>, vector<8x128xf32>, vector<8x128xf32> -> vector<8x128xf32>
    %125 = arith.addf %84, %124 : vector<8x128xf32>
    %c3 = arith.constant 3 : index
    %c0_87 = arith.constant 0 : index
    %c0_88 = arith.constant 0 : index
    %126 = vector.load %arg2[%c3, %c0_87, %c0_88] : memref<4x128x8xf32, #tpu.memory_space<vmem>>, vector<1x128x8xf32>
    %127 = vector.shape_cast %126 : vector<1x128x8xf32> to vector<128x8xf32>
    %cst_89 = arith.constant dense<0.000000e+00> : vector<8x8xf32>
    %128 = tpu.matmul %1, %127, %cst_89 {dimension_numbers = #tpu.dot_dimension_numbers<[1], [0], [0], [1], [0, 0, 1, 1], [], []>} : vector<8x128xf32>, vector<128x8xf32>, vector<8x8xf32> -> vector<8x8xf32>
    %c3_90 = arith.constant 3 : index
    %c0_91 = arith.constant 0 : index
    %c0_92 = arith.constant 0 : index
    %129 = vector.load %arg5[%c3_90, %c0_91, %c0_92] : memref<4x1x8xf32, #tpu.memory_space<vmem>>, vector<1x1x8xf32>
    %130 = vector.shape_cast %129 : vector<1x1x8xf32> to vector<1x8xf32>
    %131 = vector.broadcast %130 : vector<1x8xf32> to vector<8x8xf32>
    %132 = arith.addf %128, %131 : vector<8x8xf32>
    %133 = vector.shape_cast %132 : vector<8x8xf32> to vector<1x8x8xf32>
    %c3_93 = arith.constant 3 : index
    %c0_94 = arith.constant 0 : index
    %c0_95 = arith.constant 0 : index
    %134 = vector.load %arg3[%c3_93, %c0_94, %c0_95] : memref<4x128x8xf32, #tpu.memory_space<vmem>>, vector<1x128x8xf32>
    %135 = vector.shape_cast %134 : vector<1x128x8xf32> to vector<128x8xf32>
    %cst_96 = arith.constant dense<0.000000e+00> : vector<8x8xf32>
    %136 = tpu.matmul %1, %135, %cst_96 {dimension_numbers = #tpu.dot_dimension_numbers<[1], [0], [0], [1], [0, 0, 1, 1], [], []>} : vector<8x128xf32>, vector<128x8xf32>, vector<8x8xf32> -> vector<8x8xf32>
    %c3_97 = arith.constant 3 : index
    %c0_98 = arith.constant 0 : index
    %c0_99 = arith.constant 0 : index
    %137 = vector.load %arg6[%c3_97, %c0_98, %c0_99] : memref<4x1x8xf32, #tpu.memory_space<vmem>>, vector<1x1x8xf32>
    %138 = vector.shape_cast %137 : vector<1x1x8xf32> to vector<1x8xf32>
    %139 = vector.broadcast %138 : vector<1x8xf32> to vector<8x8xf32>
    %140 = arith.addf %136, %139 : vector<8x8xf32>
    %141 = vector.shape_cast %140 : vector<8x8xf32> to vector<1x8x8xf32>
    %c3_100 = arith.constant 3 : index
    %c0_101 = arith.constant 0 : index
    %c0_102 = arith.constant 0 : index
    %142 = vector.load %arg4[%c3_100, %c0_101, %c0_102] : memref<4x128x8xf32, #tpu.memory_space<vmem>>, vector<1x128x8xf32>
    %143 = vector.shape_cast %142 : vector<1x128x8xf32> to vector<128x8xf32>
    %cst_103 = arith.constant dense<0.000000e+00> : vector<8x8xf32>
    %144 = tpu.matmul %1, %143, %cst_103 {dimension_numbers = #tpu.dot_dimension_numbers<[1], [0], [0], [1], [0, 0, 1, 1], [], []>} : vector<8x128xf32>, vector<128x8xf32>, vector<8x8xf32> -> vector<8x8xf32>
    %c3_104 = arith.constant 3 : index
    %c0_105 = arith.constant 0 : index
    %c0_106 = arith.constant 0 : index
    %145 = vector.load %arg7[%c3_104, %c0_105, %c0_106] : memref<4x1x8xf32, #tpu.memory_space<vmem>>, vector<1x1x8xf32>
    %146 = vector.shape_cast %145 : vector<1x1x8xf32> to vector<1x8xf32>
    %147 = vector.broadcast %146 : vector<1x8xf32> to vector<8x8xf32>
    %148 = arith.addf %144, %147 : vector<8x8xf32>
    %149 = vector.shape_cast %148 : vector<8x8xf32> to vector<1x8x8xf32>
    "tpu.trace_start"() <{level = 10 : i32, message = "bqd,bkd->bqk"}> : () -> ()
    %cst_107 = arith.constant dense<0.000000e+00> : vector<1x8x8xf32>
    %150 = tpu.matmul %133, %141, %cst_107 {dimension_numbers = #tpu.dot_dimension_numbers<[2], [2], [1], [1], [0, 0, 0, 1, 1, 1], [0], [0]>} : vector<1x8x8xf32>, vector<1x8x8xf32>, vector<1x8x8xf32> -> vector<1x8x8xf32>
    "tpu.trace_stop"() : () -> ()
    %cst_108 = arith.constant dense<0xFF800000> : vector<1x8xf32>
    %151 = vector.multi_reduction <maximumf>, %150, %cst_108 [2] : vector<1x8x8xf32> to vector<1x8xf32>
    %152 = vector.shape_cast %151 : vector<1x8xf32> to vector<1x8x1xf32>
    %153 = vector.broadcast %152 : vector<1x8x1xf32> to vector<1x8x8xf32>
    %154 = arith.subf %150, %153 : vector<1x8x8xf32>
    %155 = math.exp %154 : vector<1x8x8xf32>
    "tpu.trace_start"() <{level = 10 : i32, message = "bqk,bkd->bqd"}> : () -> ()
    %cst_109 = arith.constant dense<0.000000e+00> : vector<1x8x8xf32>
    %156 = tpu.matmul %155, %149, %cst_109 {dimension_numbers = #tpu.dot_dimension_numbers<[2], [1], [1], [2], [0, 0, 0, 1, 1, 2], [0], [0]>} : vector<1x8x8xf32>, vector<1x8x8xf32>, vector<1x8x8xf32> -> vector<1x8x8xf32>
    "tpu.trace_stop"() : () -> ()
    %cst_110 = arith.constant dense<0.000000e+00> : vector<1x8xf32>
    %157 = vector.multi_reduction <add>, %155, %cst_110 [2] : vector<1x8x8xf32> to vector<1x8xf32>
    %158 = vector.shape_cast %157 : vector<1x8xf32> to vector<1x8x1xf32>
    %159 = tpu.reciprocal %158 {approx = true} : vector<1x8x1xf32> -> vector<1x8x1xf32>
    %160 = vector.broadcast %159 : vector<1x8x1xf32> to vector<1x8x8xf32>
    %161 = arith.mulf %156, %160 : vector<1x8x8xf32>
    %162 = vector.shape_cast %161 : vector<1x8x8xf32> to vector<8x8xf32>
    %c3_111 = arith.constant 3 : index
    %c0_112 = arith.constant 0 : index
    %c0_113 = arith.constant 0 : index
    %163 = vector.load %arg8[%c3_111, %c0_112, %c0_113] : memref<4x8x128xf32, #tpu.memory_space<vmem>>, vector<1x8x128xf32>
    %164 = vector.shape_cast %163 : vector<1x8x128xf32> to vector<8x128xf32>
    %cst_114 = arith.constant dense<0.000000e+00> : vector<8x128xf32>
    %165 = tpu.matmul %162, %164, %cst_114 {dimension_numbers = #tpu.dot_dimension_numbers<[1], [0], [0], [1], [0, 0, 1, 1], [], []>} : vector<8x8xf32>, vector<8x128xf32>, vector<8x128xf32> -> vector<8x128xf32>
    %166 = arith.addf %125, %165 : vector<8x128xf32>
    %c0_115 = arith.constant 0 : index
    %c0_116 = arith.constant 0 : index
    %167 = vector.load %arg9[%c0_115, %c0_116] : memref<1x128xf32, #tpu.memory_space<vmem>>, vector<1x128xf32>
    %168 = vector.broadcast %167 : vector<1x128xf32> to vector<8x128xf32>
    %169 = arith.addf %166, %168 : vector<8x128xf32>
    %170 = arith.addf %169, %1 : vector<8x128xf32>
    %171 = vector.shape_cast %170 : vector<8x128xf32> to vector<1x8x128xf32>
    %cst_117 = arith.constant dense<0.000000e+00> : vector<1x8xf32>
    %172 = vector.multi_reduction <add>, %171, %cst_117 [2] : vector<1x8x128xf32> to vector<1x8xf32>
    %173 = vector.shape_cast %172 : vector<1x8xf32> to vector<1x8x1xf32>
    %cst_118 = arith.constant dense<0.000000e+00> : vector<1x1xf32>
    %174 = vector.multi_reduction <add>, %173, %cst_118 [1] : vector<1x8x1xf32> to vector<1x1xf32>
    %175 = vector.shape_cast %174 : vector<1x1xf32> to vector<1x1x1xf32>
    %176 = arith.mulf %171, %171 : vector<1x8x128xf32>
    %cst_119 = arith.constant dense<0.000000e+00> : vector<1x8xf32>
    %177 = vector.multi_reduction <add>, %176, %cst_119 [2] : vector<1x8x128xf32> to vector<1x8xf32>
    %178 = vector.shape_cast %177 : vector<1x8xf32> to vector<1x8x1xf32>
    %cst_120 = arith.constant dense<0.000000e+00> : vector<1x1xf32>
    %179 = vector.multi_reduction <add>, %178, %cst_120 [1] : vector<1x8x1xf32> to vector<1x1xf32>
    %180 = vector.shape_cast %179 : vector<1x1xf32> to vector<1x1x1xf32>
    %cst_121 = arith.constant 3.906250e-03 : f32
    %181 = vector.broadcast %cst_121 : f32 to vector<1x1x1xf32>
    %182 = arith.mulf %175, %181 : vector<1x1x1xf32>
    %cst_122 = arith.constant 3.906250e-03 : f32
    %183 = vector.broadcast %cst_122 : f32 to vector<1x1x1xf32>
    %184 = arith.mulf %180, %183 : vector<1x1x1xf32>
    %185 = arith.mulf %182, %182 : vector<1x1x1xf32>
    %186 = arith.subf %184, %185 : vector<1x1x1xf32>
    %187 = vector.broadcast %182 : vector<1x1x1xf32> to vector<1x8x128xf32>
    %188 = arith.subf %171, %187 : vector<1x8x128xf32>
    %cst_123 = arith.constant 9.99999996E-13 : f32
    %189 = vector.broadcast %cst_123 : f32 to vector<1x1x1xf32>
    %190 = arith.addf %186, %189 : vector<1x1x1xf32>
    %191 = math.rsqrt %190 : vector<1x1x1xf32>
    %192 = vector.broadcast %191 : vector<1x1x1xf32> to vector<1x8x128xf32>
    %193 = arith.mulf %188, %192 : vector<1x8x128xf32>
    %c0_124 = arith.constant 0 : index
    %c0_125 = arith.constant 0 : index
    %c0_126 = arith.constant 0 : index
    %194 = vector.load %arg10[%c0_124, %c0_125, %c0_126] : memref<1x1x128xf32, #tpu.memory_space<vmem>>, vector<1x1x128xf32>
    %195 = vector.broadcast %194 : vector<1x1x128xf32> to vector<1x8x128xf32>
    %196 = arith.mulf %193, %195 : vector<1x8x128xf32>
    %c0_127 = arith.constant 0 : index
    %c0_128 = arith.constant 0 : index
    %c0_129 = arith.constant 0 : index
    %197 = vector.load %arg11[%c0_127, %c0_128, %c0_129] : memref<1x1x128xf32, #tpu.memory_space<vmem>>, vector<1x1x128xf32>
    %198 = vector.broadcast %197 : vector<1x1x128xf32> to vector<1x8x128xf32>
    %199 = arith.addf %196, %198 : vector<1x8x128xf32>
    %c0_130 = arith.constant 0 : index
    %c0_131 = arith.constant 0 : index
    %c0_132 = arith.constant 0 : index
    %200 = vector.load %arg12[%c0_130, %c0_131, %c0_132] : memref<1x8x128xf32, #tpu.memory_space<vmem>>, vector<1x8x128xf32>
    tpu.vector_store %arg12[%c0_130, %c0_131, %c0_132], %199 {strides = array<i32>} : memref<1x8x128xf32, #tpu.memory_space<vmem>>, vector<1x8x128xf32>,
    return
  }
  func.func @transform_0(%arg0: i32) -> (i32, i32, i32) {
    %c0_i32 = arith.constant 0 : i32
    %c0_i32_0 = arith.constant 0 : i32
    %c0_i32_1 = arith.constant 0 : i32
    return %arg0, %c0_i32, %c0_i32_0 : i32, i32, i32
  }
  func.func @transform_1(%arg0: i32) -> (i32, i32, i32) {
    %c0_i32 = arith.constant 0 : i32
    %c0_i32_0 = arith.constant 0 : i32
    %c0_i32_1 = arith.constant 0 : i32
    %c0_i32_2 = arith.constant 0 : i32
    return %c0_i32, %c0_i32_0, %c0_i32_1 : i32, i32, i32
  }
  func.func @transform_2(%arg0: i32) -> (i32, i32, i32) {
    %c0_i32 = arith.constant 0 : i32
    %c0_i32_0 = arith.constant 0 : i32
    %c0_i32_1 = arith.constant 0 : i32
    %c0_i32_2 = arith.constant 0 : i32
    return %c0_i32, %c0_i32_0, %c0_i32_1 : i32, i32, i32
  }
  func.func @transform_3(%arg0: i32) -> (i32, i32, i32) {
    %c0_i32 = arith.constant 0 : i32
    %c0_i32_0 = arith.constant 0 : i32
    %c0_i32_1 = arith.constant 0 : i32
    %c0_i32_2 = arith.constant 0 : i32
    return %c0_i32, %c0_i32_0, %c0_i32_1 : i32, i32, i32
  }
  func.func @transform_4(%arg0: i32) -> (i32, i32, i32) {
    %c0_i32 = arith.constant 0 : i32
    %c0_i32_0 = arith.constant 0 : i32
    %c0_i32_1 = arith.constant 0 : i32
    %c0_i32_2 = arith.constant 0 : i32
    return %c0_i32, %c0_i32_0, %c0_i32_1 : i32, i32, i32
  }
  func.func @transform_5(%arg0: i32) -> (i32, i32, i32) {
    %c0_i32 = arith.constant 0 : i32
    %c0_i32_0 = arith.constant 0 : i32
    %c0_i32_1 = arith.constant 0 : i32
    %c0_i32_2 = arith.constant 0 : i32
    return %c0_i32, %c0_i32_0, %c0_i32_1 : i32, i32, i32
  }
  func.func @transform_6(%arg0: i32) -> (i32, i32, i32) {
    %c0_i32 = arith.constant 0 : i32
    %c0_i32_0 = arith.constant 0 : i32
    %c0_i32_1 = arith.constant 0 : i32
    %c0_i32_2 = arith.constant 0 : i32
    return %c0_i32, %c0_i32_0, %c0_i32_1 : i32, i32, i32
  }
  func.func @transform_7(%arg0: i32) -> (i32, i32, i32) {
    %c0_i32 = arith.constant 0 : i32
    %c0_i32_0 = arith.constant 0 : i32
    %c0_i32_1 = arith.constant 0 : i32
    %c0_i32_2 = arith.constant 0 : i32
    return %c0_i32, %c0_i32_0, %c0_i32_1 : i32, i32, i32
  }
  func.func @transform_8(%arg0: i32) -> (i32, i32) {
    %c0_i32 = arith.constant 0 : i32
    %c0_i32_0 = arith.constant 0 : i32
    %c0_i32_1 = arith.constant 0 : i32
    return %c0_i32, %c0_i32_0 : i32, i32
  }
  func.func @transform_9(%arg0: i32) -> (i32, i32, i32) {
    %c0_i32 = arith.constant 0 : i32
    %c0_i32_0 = arith.constant 0 : i32
    %c0_i32_1 = arith.constant 0 : i32
    %c0_i32_2 = arith.constant 0 : i32
    return %c0_i32, %c0_i32_0, %c0_i32_1 : i32, i32, i32
  }
  func.func @transform_10(%arg0: i32) -> (i32, i32, i32) {
    %c0_i32 = arith.constant 0 : i32
    %c0_i32_0 = arith.constant 0 : i32
    %c0_i32_1 = arith.constant 0 : i32
    %c0_i32_2 = arith.constant 0 : i32
    return %c0_i32, %c0_i32_0, %c0_i32_1 : i32, i32, i32
  }
  func.func @transform_11(%arg0: i32) -> (i32, i32, i32) {
    %c0_i32 = arith.constant 0 : i32
    %c0_i32_0 = arith.constant 0 : i32
    %c0_i32_1 = arith.constant 0 : i32
    return %arg0, %c0_i32, %c0_i32_0 : i32, i32, i32
  }
}

</mosaic_0001>

<llo_original>
// kernel: tpu_custom_call.1
$region0: #{tpu_custom_call.1}
  #allocation0 [shape = 'u32[]', space=smem, size = 0x4, offset = 0x4, fixed_abs, tag = 'smem constant byte address 0x4 - core index']
  #allocation1 [shape = 'u32[144,128]{1,0:T(1,128)}', space=vmem, size = 0x12000, scoped, tag = 'internal scratch']
  %s0 = inlined_call_operand.vmem [shape: f32[2,8,128], index: 0, kind: input, shape index: {}]
  %s1 = inlined_call_operand.vmem [shape: f32[4,128,8], index: 1, kind: input, shape index: {}]
  %s2 = inlined_call_operand.vmem [shape: f32[4,128,8], index: 2, kind: input, shape index: {}]
  %s3 = inlined_call_operand.vmem [shape: f32[4,128,8], index: 3, kind: input, shape index: {}]
  %s4 = inlined_call_operand.vmem [shape: f32[4,1,8], index: 4, kind: input, shape index: {}]
  %s5 = inlined_call_operand.vmem [shape: f32[4,1,8], index: 5, kind: input, shape index: {}]
  %s6 = inlined_call_operand.vmem [shape: f32[4,1,8], index: 6, kind: input, shape index: {}]
  %s7 = inlined_call_operand.vmem [shape: f32[4,8,128], index: 7, kind: input, shape index: {}]
  %s8 = inlined_call_operand.vmem [shape: f32[1,128], index: 8, kind: input, shape index: {}]
  %s9 = inlined_call_operand.vmem [shape: f32[1,1,128], index: 9, kind: input, shape index: {}]
  %s10 = inlined_call_operand.vmem [shape: f32[1,1,128], index: 10, kind: input, shape index: {}]
  %s11 = inlined_call_operand.hbm [shape: f32[2,8,128], index: 11, kind: output, shape index: {}]
  %s12 = sld [smem:[#allocation0]]
  $region77: #{tpu_custom_call.1} parent=0
    _
  %s14 = ssub.s32 1, %s12
  %s15 = scalar_select 0, %s14, %s12
  $region1: #{tpu_custom_call.1} parent=0
    #allocation2 [shape = 'u8[8192]{0}', space=vmem, size = 0x2000, scoped, tag = 'output window, operand 0']
    #allocation3 [shape = 's32[2]{0}', space=sflag, size = 0x8, scoped, tag = 'scoped memory for tpu_custom_call.1']
    %16 = vsyncpa [#allocation3], 0
    %s17 = scalar_lea.sflag [#allocation3], 1
    %18 = vsyncpa %s17, 0
    loop: start=0, step=1, limit=4
    $region2: #{tpu_custom_call.1} parent=1 // loop_pre_header
      _
    $region3: #{tpu_custom_call.1} parent=1 // loop_header
      %s20 = sphi 0, %s24
      %p21 = scmp.ge.s32.totalorder %s20, 4
      %s30 = sphi 0, %s32
      %s33 = sphi 0, %s30
      %s34 = sphi 0, %s33
      %s50 = sphi 0, %s34
      %s54 = sphi 0, %s54
      %s56 = sphi 0, %s54
      %s57 = sphi 0, %s56
      %s71 = sphi 0, %s57
      %s75 = sphi 0, %s75
      %s77 = sphi 0, %s75
      %s78 = sphi 0, %s77
      %s92 = sphi 0, %s78
      %s96 = sphi 0, %s96
      %s98 = sphi 0, %s96
      %s99 = sphi 0, %s98
      %s113 = sphi 0, %s99
      %s117 = sphi 0, %s117
      %s119 = sphi 0, %s117
      %s120 = sphi 0, %s119
      %s134 = sphi 0, %s120
      %s138 = sphi 0, %s138
      %s140 = sphi 0, %s138
      %s141 = sphi 0, %s140
      %s155 = sphi 0, %s141
      %s159 = sphi 0, %s159
      %s161 = sphi 0, %s159
      %s162 = sphi 0, %s161
      %s176 = sphi 0, %s162
      %s180 = sphi 0, %s180
      %s182 = sphi 0, %s180
      %s183 = sphi 0, %s182
      %s197 = sphi 0, %s183
      %s201 = sphi 0, %s201
      %s203 = sphi 0, %s201
      %s204 = sphi 0, %s203
      %s218 = sphi 0, %s204
      %s222 = sphi 0, %s222
      %s224 = sphi 0, %s222
      %s225 = sphi 0, %s224
      %s239 = sphi 0, %s225
      %s243 = sphi 0, %s243
      %s245 = sphi 0, %s243
      %s246 = sphi 0, %s245
      %s260 = sphi 0, %s246
      %s266 = sphi 0, %s268
      %s269 = sphi 0, %s266
      %s270 = sphi 0, %s269
      %s286 = sphi 0, %s270
    $region4: #{tpu_custom_call.1} parent=1 // loop_header_branch
      %23 = sbr.rel (%p21) target = $region8
    $region5: #{tpu_custom_call.1} parent=1 // loop_body
      %s25 = ssub.s32 %s20, 1
      %s26 = ssub.s32 %s20, 2
      %s27 = sadd.s32 %s20, 1
      %s28 = ssub.s32 %s20, %s27
      %p29 = scmp.eq.s32.totalorder %s28, 0
      %s31 = sadd.s32 %s30, 1
      %s32 = scalar_select %p29, %s30, %s31
      %p35 = pneg %p29
      %p36 = scmp.eq.s32.totalorder %s20, 1
      %p37 = por %p35, %p36
      %p38 = scmp.ne.s32.totalorder %s30, %s33
      %p39 = scmp.eq.s32.totalorder %s20, 0
      %p40 = por %p38, %p39
      %p41 = scmp.ne.s32.totalorder %s30, %s33
      %p42 = scmp.eq.s32.totalorder %s25, 1
      %p43 = por %p41, %p42
      %p44 = scmp.ne.s32.totalorder %s33, %s34
      %p45 = scmp.eq.s32.totalorder %s25, 0
      %p46 = por %p44, %p45
      %p47 = scmp.ne.s32.totalorder %s33, %s34
      %p48 = scmp.eq.s32.totalorder %s26, 1
      %p49 = por %p47, %p48
      %p51 = scmp.ne.s32.totalorder %s34, %s50
      %p52 = scmp.eq.s32.totalorder %s26, 0
      %p53 = por %p51, %p52
      %s55 = sadd.s32 %s54, 1
      %p58 = scmp.eq.s32.totalorder %s20, 1
      %p59 = scmp.ne.s32.totalorder %s54, %s56
      %p60 = scmp.eq.s32.totalorder %s20, 0
      %p61 = por %p59, %p60
      %p62 = scmp.ne.s32.totalorder %s54, %s56
      %p63 = scmp.eq.s32.totalorder %s25, 1
      %p64 = por %p62, %p63
      %p65 = scmp.ne.s32.totalorder %s56, %s57
      %p66 = scmp.eq.s32.totalorder %s25, 0
      %p67 = por %p65, %p66
      %p68 = scmp.ne.s32.totalorder %s56, %s57
      %p69 = scmp.eq.s32.totalorder %s26, 1
      %p70 = por %p68, %p69
      %p72 = scmp.ne.s32.totalorder %s57, %s71
      %p73 = scmp.eq.s32.totalorder %s26, 0
      %p74 = por %p72, %p73
      %s76 = sadd.s32 %s75, 1
      %p79 = scmp.eq.s32.totalorder %s20, 1
      %p80 = scmp.ne.s32.totalorder %s75, %s77
      %p81 = scmp.eq.s32.totalorder %s20, 0
      %p82 = por %p80, %p81
      %p83 = scmp.ne.s32.totalorder %s75, %s77
      %p84 = scmp.eq.s32.totalorder %s25, 1
      %p85 = por %p83, %p84
      %p86 = scmp.ne.s32.totalorder %s77, %s78
      %p87 = scmp.eq.s32.totalorder %s25, 0
      %p88 = por %p86, %p87
      %p89 = scmp.ne.s32.totalorder %s77, %s78
      %p90 = scmp.eq.s32.totalorder %s26, 1
      %p91 = por %p89, %p90
      %p93 = scmp.ne.s32.totalorder %s78, %s92
      %p94 = scmp.eq.s32.totalorder %s26, 0
      %p95 = por %p93, %p94
      %s97 = sadd.s32 %s96, 1
      %p100 = scmp.eq.s32.totalorder %s20, 1
      %p101 = scmp.ne.s32.totalorder %s96, %s98
      %p102 = scmp.eq.s32.totalorder %s20, 0
      %p103 = por %p101, %p102
      %p104 = scmp.ne.s32.totalorder %s96, %s98
      %p105 = scmp.eq.s32.totalorder %s25, 1
      %p106 = por %p104, %p105
      %p107 = scmp.ne.s32.totalorder %s98, %s99
      %p108 = scmp.eq.s32.totalorder %s25, 0
      %p109 = por %p107, %p108
      %p110 = scmp.ne.s32.totalorder %s98, %s99
      %p111 = scmp.eq.s32.totalorder %s26, 1
      %p112 = por %p110, %p111
      %p114 = scmp.ne.s32.totalorder %s99, %s113
      %p115 = scmp.eq.s32.totalorder %s26, 0
      %p116 = por %p114, %p115
      %s118 = sadd.s32 %s117, 1
      %p121 = scmp.eq.s32.totalorder %s20, 1
      %p122 = scmp.ne.s32.totalorder %s117, %s119
      %p123 = scmp.eq.s32.totalorder %s20, 0
      %p124 = por %p122, %p123
      %p125 = scmp.ne.s32.totalorder %s117, %s119
      %p126 = scmp.eq.s32.totalorder %s25, 1
      %p127 = por %p125, %p126
      %p128 = scmp.ne.s32.totalorder %s119, %s120
      %p129 = scmp.eq.s32.totalorder %s25, 0
      %p130 = por %p128, %p129
      %p131 = scmp.ne.s32.totalorder %s119, %s120
      %p132 = scmp.eq.s32.totalorder %s26, 1
      %p133 = por %p131, %p132
      %p135 = scmp.ne.s32.totalorder %s120, %s134
      %p136 = scmp.eq.s32.totalorder %s26, 0
      %p137 = por %p135, %p136
      %s139 = sadd.s32 %s138, 1
      %p142 = scmp.eq.s32.totalorder %s20, 1
      %p143 = scmp.ne.s32.totalorder %s138, %s140
      %p144 = scmp.eq.s32.totalorder %s20, 0
      %p145 = por %p143, %p144
      %p146 = scmp.ne.s32.totalorder %s138, %s140
      %p147 = scmp.eq.s32.totalorder %s25, 1
      %p148 = por %p146, %p147
      %p149 = scmp.ne.s32.totalorder %s140, %s141
      %p150 = scmp.eq.s32.totalorder %s25, 0
      %p151 = por %p149, %p150
      %p152 = scmp.ne.s32.totalorder %s140, %s141
      %p153 = scmp.eq.s32.totalorder %s26, 1
      %p154 = por %p152, %p153
      %p156 = scmp.ne.s32.totalorder %s141, %s155
      %p157 = scmp.eq.s32.totalorder %s26, 0
      %p158 = por %p156, %p157
      %s160 = sadd.s32 %s159, 1
      %p163 = scmp.eq.s32.totalorder %s20, 1
      %p164 = scmp.ne.s32.totalorder %s159, %s161
      %p165 = scmp.eq.s32.totalorder %s20, 0
      %p166 = por %p164, %p165
      %p167 = scmp.ne.s32.totalorder %s159, %s161
      %p168 = scmp.eq.s32.totalorder %s25, 1
      %p169 = por %p167, %p168
      %p170 = scmp.ne.s32.totalorder %s161, %s162
      %p171 = scmp.eq.s32.totalorder %s25, 0
      %p172 = por %p170, %p171
      %p173 = scmp.ne.s32.totalorder %s161, %s162
      %p174 = scmp.eq.s32.totalorder %s26, 1
      %p175 = por %p173, %p174
      %p177 = scmp.ne.s32.totalorder %s162, %s176
      %p178 = scmp.eq.s32.totalorder %s26, 0
      %p179 = por %p177, %p178
      %s181 = sadd.s32 %s180, 1
      %p184 = scmp.eq.s32.totalorder %s20, 1
      %p185 = scmp.ne.s32.totalorder %s180, %s182
      %p186 = scmp.eq.s32.totalorder %s20, 0
      %p187 = por %p185, %p186
      %p188 = scmp.ne.s32.totalorder %s180, %s182
      %p189 = scmp.eq.s32.totalorder %s25, 1
      %p190 = por %p188, %p189
      %p191 = scmp.ne.s32.totalorder %s182, %s183
      %p192 = scmp.eq.s32.totalorder %s25, 0
      %p193 = por %p191, %p192
      %p194 = scmp.ne.s32.totalorder %s182, %s183
      %p195 = scmp.eq.s32.totalorder %s26, 1
      %p196 = por %p194, %p195
      %p198 = scmp.ne.s32.totalorder %s183, %s197
      %p199 = scmp.eq.s32.totalorder %s26, 0
      %p200 = por %p198, %p199
      %s202 = sadd.s32 %s201, 1
      %p205 = scmp.eq.s32.totalorder %s20, 1
      %p206 = scmp.ne.s32.totalorder %s201, %s203
      %p207 = scmp.eq.s32.totalorder %s20, 0
      %p208 = por %p206, %p207
      %p209 = scmp.ne.s32.totalorder %s201, %s203
      %p210 = scmp.eq.s32.totalorder %s25, 1
      %p211 = por %p209, %p210
      %p212 = scmp.ne.s32.totalorder %s203, %s204
      %p213 = scmp.eq.s32.totalorder %s25, 0
      %p214 = por %p212, %p213
      %p215 = scmp.ne.s32.totalorder %s203, %s204
      %p216 = scmp.eq.s32.totalorder %s26, 1
      %p217 = por %p215, %p216
      %p219 = scmp.ne.s32.totalorder %s204, %s218
      %p220 = scmp.eq.s32.totalorder %s26, 0
      %p221 = por %p219, %p220
      %s223 = sadd.s32 %s222, 1
      %p226 = scmp.eq.s32.totalorder %s20, 1
      %p227 = scmp.ne.s32.totalorder %s222, %s224
      %p228 = scmp.eq.s32.totalorder %s20, 0
      %p229 = por %p227, %p228
      %p230 = scmp.ne.s32.totalorder %s222, %s224
      %p231 = scmp.eq.s32.totalorder %s25, 1
      %p232 = por %p230, %p231
      %p233 = scmp.ne.s32.totalorder %s224, %s225
      %p234 = scmp.eq.s32.totalorder %s25, 0
      %p235 = por %p233, %p234
      %p236 = scmp.ne.s32.totalorder %s224, %s225
      %p237 = scmp.eq.s32.totalorder %s26, 1
      %p238 = por %p236, %p237
      %p240 = scmp.ne.s32.totalorder %s225, %s239
      %p241 = scmp.eq.s32.totalorder %s26, 0
      %p242 = por %p240, %p241
      %s244 = sadd.s32 %s243, 1
      %p247 = scmp.eq.s32.totalorder %s20, 1
      %p248 = scmp.ne.s32.totalorder %s243, %s245
      %p249 = scmp.eq.s32.totalorder %s20, 0
      %p250 = por %p248, %p249
      %p251 = scmp.ne.s32.totalorder %s243, %s245
      %p252 = scmp.eq.s32.totalorder %s25, 1
      %p253 = por %p251, %p252
      %p254 = scmp.ne.s32.totalorder %s245, %s246
      %p255 = scmp.eq.s32.totalorder %s25, 0
      %p256 = por %p254, %p255
      %p257 = scmp.ne.s32.totalorder %s245, %s246
      %p258 = scmp.eq.s32.totalorder %s26, 1
      %p259 = por %p257, %p258
      %p261 = scmp.ne.s32.totalorder %s246, %s260
      %p262 = scmp.eq.s32.totalorder %s26, 0
      %p263 = por %p261, %p262
      %s264 = ssub.s32 %s20, %s27
      %p265 = scmp.eq.s32.totalorder %s264, 0
      %s267 = sadd.s32 %s266, 1
      %s268 = scalar_select %p265, %s266, %s267
      %p271 = pneg %p265
      %p272 = scmp.eq.s32.totalorder %s20, 1
      %p273 = por %p271, %p272
      %p274 = scmp.ne.s32.totalorder %s266, %s269
      %p275 = scmp.eq.s32.totalorder %s20, 0
      %p276 = por %p274, %p275
      %p277 = scmp.ne.s32.totalorder %s266, %s269
      %p278 = scmp.eq.s32.totalorder %s25, 1
      %p279 = por %p277, %p278
      %p280 = scmp.ne.s32.totalorder %s269, %s270
      %p281 = scmp.eq.s32.totalorder %s25, 0
      %p282 = por %p280, %p281
      %p283 = scmp.ne.s32.totalorder %s269, %s270
      %p284 = scmp.eq.s32.totalorder %s26, 1
      %p285 = por %p283, %p284
      %p287 = scmp.ne.s32.totalorder %s270, %s286
      %p288 = scmp.eq.s32.totalorder %s26, 0
      %p289 = por %p287, %p288
      %p290 = scmp.le.s32.totalorder 1, %s20
      %p291 = scmp.lt.s32.totalorder %s20, 3
      %p292 = pnand %p290, %p291
      %p293 = pneg %p292
      // Predicated region
      $region9: #{tpu_custom_call.1} parent=5 // pred_check
        _
      $region10: #{tpu_custom_call.1} parent=5 // pred_check_branch
        %295 = sbr.rel (%p292) target = $region12
      $region11: #{tpu_custom_call.1} parent=5 // pred_region
        %s296 = ssub.s32 %s20, 1
        // Predicated region
        $region13: #{tpu_custom_call.1} parent=11 // pred_check
          %p297 = pneg %p67
        $region14: #{tpu_custom_call.1} parent=11 // pred_check_branch
          %299 = sbr.rel (%p297) target = $region16
        $region15: #{tpu_custom_call.1} parent=11 // pred_region
          _
        $region16: #{tpu_custom_call.1} parent=11 // pred_fallthru
          _
        // Predicated region
        $region17: #{tpu_custom_call.1} parent=11 // pred_check
          %p300 = pneg %p88
        $region18: #{tpu_custom_call.1} parent=11 // pred_check_branch
          %302 = sbr.rel (%p300) target = $region20
        $region19: #{tpu_custom_call.1} parent=11 // pred_region
          _
        $region20: #{tpu_custom_call.1} parent=11 // pred_fallthru
          _
        // Predicated region
        $region21: #{tpu_custom_call.1} parent=11 // pred_check
          %p303 = pneg %p109
        $region22: #{tpu_custom_call.1} parent=11 // pred_check_branch
          %305 = sbr.rel (%p303) target = $region24
        $region23: #{tpu_custom_call.1} parent=11 // pred_region
          _
        $region24: #{tpu_custom_call.1} parent=11 // pred_fallthru
          _
        // Predicated region
        $region25: #{tpu_custom_call.1} parent=11 // pred_check
          %p306 = pneg %p130
        $region26: #{tpu_custom_call.1} parent=11 // pred_check_branch
          %308 = sbr.rel (%p306) target = $region28
        $region27: #{tpu_custom_call.1} parent=11 // pred_region
          _
        $region28: #{tpu_custom_call.1} parent=11 // pred_fallthru
          _
        // Predicated region
        $region29: #{tpu_custom_call.1} parent=11 // pred_check
          %p309 = pneg %p151
        $region30: #{tpu_custom_call.1} parent=11 // pred_check_branch
          %311 = sbr.rel (%p309) target = $region32
        $region31: #{tpu_custom_call.1} parent=11 // pred_region
          _
        $region32: #{tpu_custom_call.1} parent=11 // pred_fallthru
          _
        // Predicated region
        $region33: #{tpu_custom_call.1} parent=11 // pred_check
          %p312 = pneg %p172
        $region34: #{tpu_custom_call.1} parent=11 // pred_check_branch
          %314 = sbr.rel (%p312) target = $region36
        $region35: #{tpu_custom_call.1} parent=11 // pred_region
          _
        $region36: #{tpu_custom_call.1} parent=11 // pred_fallthru
          _
        // Predicated region
        $region37: #{tpu_custom_call.1} parent=11 // pred_check
          %p315 = pneg %p193
        $region38: #{tpu_custom_call.1} parent=11 // pred_check_branch
          %317 = sbr.rel (%p315) target = $region40
        $region39: #{tpu_custom_call.1} parent=11 // pred_region
          _
        $region40: #{tpu_custom_call.1} parent=11 // pred_fallthru
          _
        // Predicated region
        $region41: #{tpu_custom_call.1} parent=11 // pred_check
          %p318 = pneg %p214
        $region42: #{tpu_custom_call.1} parent=11 // pred_check_branch
          %320 = sbr.rel (%p318) target = $region44
        $region43: #{tpu_custom_call.1} parent=11 // pred_region
          _
        $region44: #{tpu_custom_call.1} parent=11 // pred_fallthru
          _
        // Predicated region
        $region45: #{tpu_custom_call.1} parent=11 // pred_check
          %p321 = pneg %p235
        $region46: #{tpu_custom_call.1} parent=11 // pred_check_branch
          %323 = sbr.rel (%p321) target = $region48
        $region47: #{tpu_custom_call.1} parent=11 // pred_region
          _
        $region48: #{tpu_custom_call.1} parent=11 // pred_fallthru
          _
        // Predicated region
        $region49: #{tpu_custom_call.1} parent=11 // pred_check
          %p324 = pneg %p256
        $region50: #{tpu_custom_call.1} parent=11 // pred_check_branch
          %326 = sbr.rel (%p324) target = $region52
        $region51: #{tpu_custom_call.1} parent=11 // pred_region
          _
        $region52: #{tpu_custom_call.1} parent=11 // pred_fallthru
          _
      $region12: #{tpu_custom_call.1} parent=5 // pred_fallthru
        _
      %p327 = scmp.lt.s32.totalorder %s20, 2
      // Predicated region
      $region53: #{tpu_custom_call.1} parent=5 // pred_check
        %p328 = pneg %p327
      $region54: #{tpu_custom_call.1} parent=5 // pred_check_branch
        %330 = sbr.rel (%p328) target = $region56
      $region55: #{tpu_custom_call.1} parent=5 // pred_region
        // Predicated region
        $region57: #{tpu_custom_call.1} parent=55 // pred_check
          %p331 = pneg %p40
        $region58: #{tpu_custom_call.1} parent=55 // pred_check_branch
          %333 = sbr.rel (%p331) target = $region60
        $region59: #{tpu_custom_call.1} parent=55 // pred_region
          %p334 = scmp.lt.s32.totalorder %s20, 1
          %s335 = scalar_select %p334, %s20, 1
          %s336 = smul.addr %s335, 8
          %s337 = scalar_lea.vmem %s0, %s336
        $region60: #{tpu_custom_call.1} parent=55 // pred_fallthru
          _
      $region56: #{tpu_custom_call.1} parent=5 // pred_fallthru
        _
      %p338 = scmp.le.s32.totalorder 1, %s20
      %p339 = scmp.lt.s32.totalorder %s20, 3
      %p340 = pnand %p338, %p339
      %p341 = pneg %p340
      // Predicated region
      $region61: #{tpu_custom_call.1} parent=5 // pred_check
        _
      $region62: #{tpu_custom_call.1} parent=5 // pred_check_branch
        %343 = sbr.rel (%p340) target = $region64
      $region63: #{tpu_custom_call.1} parent=5 // pred_region
        %s344 = ssub.s32 %s20, 1
        %p345 = scmp.lt.s32.totalorder %s25, 1
        %s346 = scalar_select %p345, %s25, 1
        %s347 = smul.addr %s346, 8
        %s348 = scalar_lea.vmem %s0, %s347
        %p349 = pneg %p46
        %p350 = pneg %p43
        %p351 = pneg %p67
        %p352 = pneg %p64
        %p353 = pneg %p88
        %p354 = pneg %p85
        %p355 = pneg %p109
        %p356 = pneg %p106
        %p357 = pneg %p130
        %p358 = pneg %p127
        %p359 = pneg %p151
        %p360 = pneg %p148
        %p361 = pneg %p172
        %p362 = pneg %p169
        %p363 = pneg %p193
        %p364 = pneg %p190
        %p365 = pneg %p214
        %p366 = pneg %p211
        %p367 = pneg %p235
        %p368 = pneg %p232
        %p369 = pneg %p256
        %p370 = pneg %p253
        %p371 = pneg %p282
        %p372 = pneg %p279
        %s373 = sand.u32 %s269, 1
        %s374 = scalar_lea.sflag [#allocation3], %s373
        %s375 = sand.u32 %s269, 1
        %s376 = smul.addr %s375, 8
        %s377 = scalar_lea.vmem [#allocation2], %s376
        %p378 = scmp.lt.s32.totalorder %s25, 1
        %s379 = scalar_select %p378, %s25, 1
        %s380 = smul.addr %s379, 8
        %s381 = scalar_lea.vmem %s0, %s380
        %v382 = vld [vmem:[%s381] sm:$0xff]
        %v383 = vld [vmem:[%s1] sm:$0xff]
        %v384 = vld [vmem:[%s1 + $0x8] sm:$0xff]
        %v385 = vld [vmem:[%s1 + $0x10] sm:$0xff]
        %v386 = vld [vmem:[%s1 + $0x18] sm:$0xff]
        %v387 = vld [vmem:[%s1 + $0x20] sm:$0xff]
        %v388 = vld [vmem:[%s1 + $0x28] sm:$0xff]
        %v389 = vld [vmem:[%s1 + $0x30] sm:$0xff]
        %v390 = vld [vmem:[%s1 + $0x38] sm:$0xff]
        %v391 = vld [vmem:[%s1 + $0x40] sm:$0xff]
        %v392 = vld [vmem:[%s1 + $0x48] sm:$0xff]
        %v393 = vld [vmem:[%s1 + $0x50] sm:$0xff]
        %v394 = vld [vmem:[%s1 + $0x58] sm:$0xff]
        %v395 = vld [vmem:[%s1 + $0x60] sm:$0xff]
        %v396 = vld [vmem:[%s1 + $0x68] sm:$0xff]
        %v397 = vld [vmem:[%s1 + $0x70] sm:$0xff]
        %v398 = vld [vmem:[%s1 + $0x78] sm:$0xff]
        %v399 = vld [vmem:[%s4] sm:$0x1]
        %v401 = vlaneseq
        %v402 = vshrl.u32 %v401, 7
        %v403 = vsub.s32 0, %v402
        %v404 = vrot.slane %v399, %v403
        %406 = vmatprep.subr.mxu0 0.0
        %407 = vmatpush1.msra.mxu0 %v383
        %408 = vmatprep.subr.mxu0 0.0
        %409 = vmatpush1.msra.mxu0 %v384
        %410 = vmatprep.subr.mxu0 0.0
        %411 = vmatpush1.msra.mxu0 %v385
        %412 = vmatprep.subr.mxu0 0.0
        %413 = vmatpush1.msra.mxu0 %v386
        %414 = vmatprep.subr.mxu0 0.0
        %415 = vmatpush1.msra.mxu0 %v387
        %416 = vmatprep.subr.mxu0 0.0
        %417 = vmatpush1.msra.mxu0 %v388
        %418 = vmatprep.subr.mxu0 0.0
        %419 = vmatpush1.msra.mxu0 %v389
        %420 = vmatprep.subr.mxu0 0.0
        %421 = vmatpush1.msra.mxu0 %v390
        %422 = vmatprep.subr.mxu0 0.0
        %423 = vmatpush1.msra.mxu0 %v391
        %424 = vmatprep.subr.mxu0 0.0
        %425 = vmatpush1.msra.mxu0 %v392
        %426 = vmatprep.subr.mxu0 0.0
        %427 = vmatpush1.msra.mxu0 %v393
        %428 = vmatprep.subr.mxu0 0.0
        %429 = vmatpush1.msra.mxu0 %v394
        %430 = vmatprep.subr.mxu0 0.0
        %431 = vmatpush1.msra.mxu0 %v395
        %432 = vmatprep.subr.mxu0 0.0
        %433 = vmatpush1.msra.mxu0 %v396
        %434 = vmatprep.subr.mxu0 0.0
        %435 = vmatpush1.msra.mxu0 %v397
        %436 = vmatprep.subr.mxu0 0.0
        %437 = vmatpush1.msra.mxu0 %v398
        %438 = vmatprep.subr.mxu0 0.0
        %439 = vmatpush1.msra.mxu0 0.0
        %440 = vmatprep.subr.mxu0 0.0
        %441 = vmatpush1.msra.mxu0 0.0
        %442 = vmatprep.subr.mxu0 0.0
        %443 = vmatpush1.msra.mxu0 0.0
        %444 = vmatprep.subr.mxu0 0.0
        %445 = vmatpush1.msra.mxu0 0.0
        %446 = vmatprep.subr.mxu0 0.0
        %447 = vmatpush1.msra.mxu0 0.0
        %448 = vmatprep.subr.mxu0 0.0
        %449 = vmatpush1.msra.mxu0 0.0
        %450 = vmatprep.subr.mxu0 0.0
        %451 = vmatpush1.msra.mxu0 0.0
        %452 = vmatprep.subr.mxu0 0.0
        %453 = vmatpush1.msra.mxu0 0.0
        %454 = vmatprep.subr.mxu0 0.0
        %455 = vmatpush1.msra.mxu0 0.0
        %456 = vmatprep.subr.mxu0 0.0
        %457 = vmatpush1.msra.mxu0 0.0
        %458 = vmatprep.subr.mxu0 0.0
        %459 = vmatpush1.msra.mxu0 0.0
        %460 = vmatprep.subr.mxu0 0.0
        %461 = vmatpush1.msra.mxu0 0.0
        %462 = vmatprep.subr.mxu0 0.0
        %463 = vmatpush1.msra.mxu0 0.0
        %464 = vmatprep.subr.mxu0 0.0
        %465 = vmatpush1.msra.mxu0 0.0
        %466 = vmatprep.subr.mxu0 0.0
        %467 = vmatpush1.msra.mxu0 0.0
        %468 = vmatprep.subr.mxu0 0.0
        %469 = vmatpush1.msra.mxu0 0.0
        %470 = vmatprep.mubr.f32.mxu0 0.0
        %471 = vmatmul.mubr.f32.gmra.mrb[0].mxu0 %v382
        %v472 = vpop.f32.mrb[0].mxu0
        %v473 = vadd.f32 %v404, %v472
        %v474 = vpop.f32.mrb[0].mxu0
        %475 = vdwg.mxu0
        %v476 = vld [vmem:[%s2] sm:$0xff]
        %v477 = vld [vmem:[%s2 + $0x8] sm:$0xff]
        %v478 = vld [vmem:[%s2 + $0x10] sm:$0xff]
        %v479 = vld [vmem:[%s2 + $0x18] sm:$0xff]
        %v480 = vld [vmem:[%s2 + $0x20] sm:$0xff]
        %v481 = vld [vmem:[%s2 + $0x28] sm:$0xff]
        %v482 = vld [vmem:[%s2 + $0x30] sm:$0xff]
        %v483 = vld [vmem:[%s2 + $0x38] sm:$0xff]
        %v484 = vld [vmem:[%s2 + $0x40] sm:$0xff]
        %v485 = vld [vmem:[%s2 + $0x48] sm:$0xff]
        %v486 = vld [vmem:[%s2 + $0x50] sm:$0xff]
        %v487 = vld [vmem:[%s2 + $0x58] sm:$0xff]
        %v488 = vld [vmem:[%s2 + $0x60] sm:$0xff]
        %v489 = vld [vmem:[%s2 + $0x68] sm:$0xff]
        %v490 = vld [vmem:[%s2 + $0x70] sm:$0xff]
        %v491 = vld [vmem:[%s2 + $0x78] sm:$0xff]
        %v492 = vld [vmem:[%s5] sm:$0x1]
        %v494 = vlaneseq
        %v495 = vshrl.u32 %v494, 7
        %v496 = vsub.s32 0, %v495
        %v497 = vrot.slane %v492, %v496
        %499 = vmatprep.subr.mxu0 0.0
        %500 = vmatpush1.msra.mxu0 %v476
        %501 = vmatprep.subr.mxu0 0.0
        %502 = vmatpush1.msra.mxu0 %v477
        %503 = vmatprep.subr.mxu0 0.0
        %504 = vmatpush1.msra.mxu0 %v478
        %505 = vmatprep.subr.mxu0 0.0
        %506 = vmatpush1.msra.mxu0 %v479
        %507 = vmatprep.subr.mxu0 0.0
        %508 = vmatpush1.msra.mxu0 %v480
        %509 = vmatprep.subr.mxu0 0.0
        %510 = vmatpush1.msra.mxu0 %v481
        %511 = vmatprep.subr.mxu0 0.0
        %512 = vmatpush1.msra.mxu0 %v482
        %513 = vmatprep.subr.mxu0 0.0
        %514 = vmatpush1.msra.mxu0 %v483
        %515 = vmatprep.subr.mxu0 0.0
        %516 = vmatpush1.msra.mxu0 %v484
        %517 = vmatprep.subr.mxu0 0.0
        %518 = vmatpush1.msra.mxu0 %v485
        %519 = vmatprep.subr.mxu0 0.0
        %520 = vmatpush1.msra.mxu0 %v486
        %521 = vmatprep.subr.mxu0 0.0
        %522 = vmatpush1.msra.mxu0 %v487
        %523 = vmatprep.subr.mxu0 0.0
        %524 = vmatpush1.msra.mxu0 %v488
        %525 = vmatprep.subr.mxu0 0.0
        %526 = vmatpush1.msra.mxu0 %v489
        %527 = vmatprep.subr.mxu0 0.0
        %528 = vmatpush1.msra.mxu0 %v490
        %529 = vmatprep.subr.mxu0 0.0
        %530 = vmatpush1.msra.mxu0 %v491
        %531 = vmatprep.subr.mxu0 0.0
        %532 = vmatpush1.msra.mxu0 0.0
        %533 = vmatprep.subr.mxu0 0.0
        %534 = vmatpush1.msra.mxu0 0.0
        %535 = vmatprep.subr.mxu0 0.0
        %536 = vmatpush1.msra.mxu0 0.0
        %537 = vmatprep.subr.mxu0 0.0
        %538 = vmatpush1.msra.mxu0 0.0
        %539 = vmatprep.subr.mxu0 0.0
        %540 = vmatpush1.msra.mxu0 0.0
        %541 = vmatprep.subr.mxu0 0.0
        %542 = vmatpush1.msra.mxu0 0.0
        %543 = vmatprep.subr.mxu0 0.0
        %544 = vmatpush1.msra.mxu0 0.0
        %545 = vmatprep.subr.mxu0 0.0
        %546 = vmatpush1.msra.mxu0 0.0
        %547 = vmatprep.subr.mxu0 0.0
        %548 = vmatpush1.msra.mxu0 0.0
        %549 = vmatprep.subr.mxu0 0.0
        %550 = vmatpush1.msra.mxu0 0.0
        %551 = vmatprep.subr.mxu0 0.0
        %552 = vmatpush1.msra.mxu0 0.0
        %553 = vmatprep.subr.mxu0 0.0
        %554 = vmatpush1.msra.mxu0 0.0
        %555 = vmatprep.subr.mxu0 0.0
        %556 = vmatpush1.msra.mxu0 0.0
        %557 = vmatprep.subr.mxu0 0.0
        %558 = vmatpush1.msra.mxu0 0.0
        %559 = vmatprep.subr.mxu0 0.0
        %560 = vmatpush1.msra.mxu0 0.0
        %561 = vmatprep.subr.mxu0 0.0
        %562 = vmatpush1.msra.mxu0 0.0
        %563 = vmatprep.mubr.f32.mxu0 0.0
        %564 = vmatmul.mubr.f32.gmra.mrb[0].mxu0 %v382
        %v565 = vpop.f32.mrb[0].mxu0
        %v566 = vadd.f32 %v497, %v565
        %v567 = vpop.f32.mrb[0].mxu0
        %568 = vdwg.mxu0
        %v569 = vld [vmem:[%s3] sm:$0xff]
        %v570 = vld [vmem:[%s3 + $0x8] sm:$0xff]
        %v571 = vld [vmem:[%s3 + $0x10] sm:$0xff]
        %v572 = vld [vmem:[%s3 + $0x18] sm:$0xff]
        %v573 = vld [vmem:[%s3 + $0x20] sm:$0xff]
        %v574 = vld [vmem:[%s3 + $0x28] sm:$0xff]
        %v575 = vld [vmem:[%s3 + $0x30] sm:$0xff]
        %v576 = vld [vmem:[%s3 + $0x38] sm:$0xff]
        %v577 = vld [vmem:[%s3 + $0x40] sm:$0xff]
        %v578 = vld [vmem:[%s3 + $0x48] sm:$0xff]
        %v579 = vld [vmem:[%s3 + $0x50] sm:$0xff]
        %v580 = vld [vmem:[%s3 + $0x58] sm:$0xff]
        %v581 = vld [vmem:[%s3 + $0x60] sm:$0xff]
        %v582 = vld [vmem:[%s3 + $0x68] sm:$0xff]
        %v583 = vld [vmem:[%s3 + $0x70] sm:$0xff]
        %v584 = vld [vmem:[%s3 + $0x78] sm:$0xff]
        %v585 = vld [vmem:[%s6] sm:$0x1]
        %v587 = vlaneseq
        %v588 = vshrl.u32 %v587, 7
        %v589 = vsub.s32 0, %v588
        %v590 = vrot.slane %v585, %v589
        %592 = vmatprep.subr.mxu0 0.0
        %593 = vmatpush1.msra.mxu0 %v569
        %594 = vmatprep.subr.mxu0 0.0
        %595 = vmatpush1.msra.mxu0 %v570
        %596 = vmatprep.subr.mxu0 0.0
        %597 = vmatpush1.msra.mxu0 %v571
        %598 = vmatprep.subr.mxu0 0.0
        %599 = vmatpush1.msra.mxu0 %v572
        %600 = vmatprep.subr.mxu0 0.0
        %601 = vmatpush1.msra.mxu0 %v573
        %602 = vmatprep.subr.mxu0 0.0
        %603 = vmatpush1.msra.mxu0 %v574
        %604 = vmatprep.subr.mxu0 0.0
        %605 = vmatpush1.msra.mxu0 %v575
        %606 = vmatprep.subr.mxu0 0.0
        %607 = vmatpush1.msra.mxu0 %v576
        %608 = vmatprep.subr.mxu0 0.0
        %609 = vmatpush1.msra.mxu0 %v577
        %610 = vmatprep.subr.mxu0 0.0
        %611 = vmatpush1.msra.mxu0 %v578
        %612 = vmatprep.subr.mxu0 0.0
        %613 = vmatpush1.msra.mxu0 %v579
        %614 = vmatprep.subr.mxu0 0.0
        %615 = vmatpush1.msra.mxu0 %v580
        %616 = vmatprep.subr.mxu0 0.0
        %617 = vmatpush1.msra.mxu0 %v581
        %618 = vmatprep.subr.mxu0 0.0
        %619 = vmatpush1.msra.mxu0 %v582
        %620 = vmatprep.subr.mxu0 0.0
        %621 = vmatpush1.msra.mxu0 %v583
        %622 = vmatprep.subr.mxu0 0.0
        %623 = vmatpush1.msra.mxu0 %v584
        %624 = vmatprep.subr.mxu0 0.0
        %625 = vmatpush1.msra.mxu0 0.0
        %626 = vmatprep.subr.mxu0 0.0
        %627 = vmatpush1.msra.mxu0 0.0
        %628 = vmatprep.subr.mxu0 0.0
        %629 = vmatpush1.msra.mxu0 0.0
        %630 = vmatprep.subr.mxu0 0.0
        %631 = vmatpush1.msra.mxu0 0.0
        %632 = vmatprep.subr.mxu0 0.0
        %633 = vmatpush1.msra.mxu0 0.0
        %634 = vmatprep.subr.mxu0 0.0
        %635 = vmatpush1.msra.mxu0 0.0
        %636 = vmatprep.subr.mxu0 0.0
        %637 = vmatpush1.msra.mxu0 0.0
        %638 = vmatprep.subr.mxu0 0.0
        %639 = vmatpush1.msra.mxu0 0.0
        %640 = vmatprep.subr.mxu0 0.0
        %641 = vmatpush1.msra.mxu0 0.0
        %642 = vmatprep.subr.mxu0 0.0
        %643 = vmatpush1.msra.mxu0 0.0
        %644 = vmatprep.subr.mxu0 0.0
        %645 = vmatpush1.msra.mxu0 0.0
        %646 = vmatprep.subr.mxu0 0.0
        %647 = vmatpush1.msra.mxu0 0.0
        %648 = vmatprep.subr.mxu0 0.0
        %649 = vmatpush1.msra.mxu0 0.0
        %650 = vmatprep.subr.mxu0 0.0
        %651 = vmatpush1.msra.mxu0 0.0
        %652 = vmatprep.subr.mxu0 0.0
        %653 = vmatpush1.msra.mxu0 0.0
        %654 = vmatprep.subr.mxu0 0.0
        %655 = vmatpush1.msra.mxu0 0.0
        %656 = vmatprep.mubr.f32.mxu0 0.0
        %657 = vmatmul.mubr.f32.gmra.mrb[0].mxu0 %v382
        %v658 = vpop.f32.mrb[0].mxu0
        %v659 = vadd.f32 %v590, %v658
        %v660 = vpop.f32.mrb[0].mxu0
        %661 = vdwg.mxu0
        %vm662 = vcmask 64512
        %v664 = vsel %vm662, %v473, 0
        %v667 = vsel %vm662, %v566, 0
        %669 = vmatprep.subr.mxu0 0.0
        %670 = vmatpush1.xpose.msra.mxu0 %v667
        %671 = vmatprep.subr.mxu0 0.0
        %672 = vmatpush1.xpose.msra.mxu0 0.0
        %673 = vmatprep.subr.mxu0 0.0
        %674 = vmatpush1.xpose.msra.mxu0 0.0
        %675 = vmatprep.subr.mxu0 0.0
        %676 = vmatpush1.xpose.msra.mxu0 0.0
        %677 = vmatprep.subr.mxu0 0.0
        %678 = vmatpush1.xpose.msra.mxu0 0.0
        %679 = vmatprep.subr.mxu0 0.0
        %680 = vmatpush1.xpose.msra.mxu0 0.0
        %681 = vmatprep.subr.mxu0 0.0
        %682 = vmatpush1.xpose.msra.mxu0 0.0
        %683 = vmatprep.subr.mxu0 0.0
        %684 = vmatpush1.xpose.msra.mxu0 0.0
        %685 = vmatprep.subr.mxu0 0.0
        %686 = vmatpush1.xpose.msra.mxu0 0.0
        %687 = vmatprep.subr.mxu0 0.0
        %688 = vmatpush1.xpose.msra.mxu0 0.0
        %689 = vmatprep.subr.mxu0 0.0
        %690 = vmatpush1.xpose.msra.mxu0 0.0
        %691 = vmatprep.subr.mxu0 0.0
        %692 = vmatpush1.xpose.msra.mxu0 0.0
        %693 = vmatprep.subr.mxu0 0.0
        %694 = vmatpush1.xpose.msra.mxu0 0.0
        %695 = vmatprep.subr.mxu0 0.0
        %696 = vmatpush1.xpose.msra.mxu0 0.0
        %697 = vmatprep.subr.mxu0 0.0
        %698 = vmatpush1.xpose.msra.mxu0 0.0
        %699 = vmatprep.subr.mxu0 0.0
        %700 = vmatpush1.xpose.msra.mxu0 0.0
        %701 = vmatprep.subr.mxu0 0.0
        %702 = vmatpush1.xpose.msra.mxu0 0.0
        %703 = vmatprep.subr.mxu0 0.0
        %704 = vmatpush1.xpose.msra.mxu0 0.0
        %705 = vmatprep.subr.mxu0 0.0
        %706 = vmatpush1.xpose.msra.mxu0 0.0
        %707 = vmatprep.subr.mxu0 0.0
        %708 = vmatpush1.xpose.msra.mxu0 0.0
        %709 = vmatprep.subr.mxu0 0.0
        %710 = vmatpush1.xpose.msra.mxu0 0.0
        %711 = vmatprep.subr.mxu0 0.0
        %712 = vmatpush1.xpose.msra.mxu0 0.0
        %713 = vmatprep.subr.mxu0 0.0
        %714 = vmatpush1.xpose.msra.mxu0 0.0
        %715 = vmatprep.subr.mxu0 0.0
        %716 = vmatpush1.xpose.msra.mxu0 0.0
        %717 = vmatprep.subr.mxu0 0.0
        %718 = vmatpush1.xpose.msra.mxu0 0.0
        %719 = vmatprep.subr.mxu0 0.0
        %720 = vmatpush1.xpose.msra.mxu0 0.0
        %721 = vmatprep.subr.mxu0 0.0
        %722 = vmatpush1.xpose.msra.mxu0 0.0
        %723 = vmatprep.subr.mxu0 0.0
        %724 = vmatpush1.xpose.msra.mxu0 0.0
        %725 = vmatprep.subr.mxu0 0.0
        %726 = vmatpush1.xpose.msra.mxu0 0.0
        %727 = vmatprep.subr.mxu0 0.0
        %728 = vmatpush1.xpose.msra.mxu0 0.0
        %729 = vmatprep.subr.mxu0 0.0
        %730 = vmatpush1.xpose.msra.mxu0 0.0
        %731 = vmatprep.subr.mxu0 0.0
        %732 = vmatpush1.xpose.msra.mxu0 0.0
        %733 = vmatprep.mubr.f32.mxu0 0.0
        %734 = vmatmul.mubr.f32.gmra.mrb[0].mxu0 %v664
        %v735 = vpop.f32.mrb[0].mxu0
        %v736 = vadd.f32 0.0, %v735
        %v737 = vpop.f32.mrb[0].mxu0
        %738 = vdwg.mxu0
        %v739 = vsel %vm662, %v736, -inf
        %740 = vmax.xlane.f32.xlu0 %v739
        %v741 = vpop.xlane.xlu0 %740
        %v742 = vsub.f32 %v736, %v741
        %v743 = vmul.f32 %v742, 1.442695
        %v744 = vpow.pop %v743
        %v746 = vsel %vm662, %v744, 0
        %748 = vmatprep.subr.mxu0 0.0
        %749 = vmatpush1.msra.mxu0 %v659
        %750 = vmatprep.subr.mxu0 0.0
        %751 = vmatpush1.msra.mxu0 0.0
        %752 = vmatprep.subr.mxu0 0.0
        %753 = vmatpush1.msra.mxu0 0.0
        %754 = vmatprep.subr.mxu0 0.0
        %755 = vmatpush1.msra.mxu0 0.0
        %756 = vmatprep.subr.mxu0 0.0
        %757 = vmatpush1.msra.mxu0 0.0
        %758 = vmatprep.subr.mxu0 0.0
        %759 = vmatpush1.msra.mxu0 0.0
        %760 = vmatprep.subr.mxu0 0.0
        %761 = vmatpush1.msra.mxu0 0.0
        %762 = vmatprep.subr.mxu0 0.0
        %763 = vmatpush1.msra.mxu0 0.0
        %764 = vmatprep.subr.mxu0 0.0
        %765 = vmatpush1.msra.mxu0 0.0
        %766 = vmatprep.subr.mxu0 0.0
        %767 = vmatpush1.msra.mxu0 0.0
        %768 = vmatprep.subr.mxu0 0.0
        %769 = vmatpush1.msra.mxu0 0.0
        %770 = vmatprep.subr.mxu0 0.0
        %771 = vmatpush1.msra.mxu0 0.0
        %772 = vmatprep.subr.mxu0 0.0
        %773 = vmatpush1.msra.mxu0 0.0
        %774 = vmatprep.subr.mxu0 0.0
        %775 = vmatpush1.msra.mxu0 0.0
        %776 = vmatprep.subr.mxu0 0.0
        %777 = vmatpush1.msra.mxu0 0.0
        %778 = vmatprep.subr.mxu0 0.0
        %779 = vmatpush1.msra.mxu0 0.0
        %780 = vmatprep.subr.mxu0 0.0
        %781 = vmatpush1.msra.mxu0 0.0
        %782 = vmatprep.subr.mxu0 0.0
        %783 = vmatpush1.msra.mxu0 0.0
        %784 = vmatprep.subr.mxu0 0.0
        %785 = vmatpush1.msra.mxu0 0.0
        %786 = vmatprep.subr.mxu0 0.0
        %787 = vmatpush1.msra.mxu0 0.0
        %788 = vmatprep.subr.mxu0 0.0
        %789 = vmatpush1.msra.mxu0 0.0
        %790 = vmatprep.subr.mxu0 0.0
        %791 = vmatpush1.msra.mxu0 0.0
        %792 = vmatprep.subr.mxu0 0.0
        %793 = vmatpush1.msra.mxu0 0.0
        %794 = vmatprep.subr.mxu0 0.0
        %795 = vmatpush1.msra.mxu0 0.0
        %796 = vmatprep.subr.mxu0 0.0
        %797 = vmatpush1.msra.mxu0 0.0
        %798 = vmatprep.subr.mxu0 0.0
        %799 = vmatpush1.msra.mxu0 0.0
        %800 = vmatprep.subr.mxu0 0.0
        %801 = vmatpush1.msra.mxu0 0.0
        %802 = vmatprep.subr.mxu0 0.0
        %803 = vmatpush1.msra.mxu0 0.0
        %804 = vmatprep.subr.mxu0 0.0
        %805 = vmatpush1.msra.mxu0 0.0
        %806 = vmatprep.subr.mxu0 0.0
        %807 = vmatpush1.msra.mxu0 0.0
        %808 = vmatprep.subr.mxu0 0.0
        %809 = vmatpush1.msra.mxu0 0.0
        %810 = vmatprep.subr.mxu0 0.0
        %811 = vmatpush1.msra.mxu0 0.0
        %812 = vmatprep.mubr.f32.mxu0 0.0
        %813 = vmatmul.mubr.f32.gmra.mrb[0].mxu0 %v746
        %v814 = vpop.f32.mrb[0].mxu0
        %v815 = vadd.f32 0.0, %v814
        %v816 = vpop.f32.mrb[0].mxu0
        %817 = vdwg.mxu0
        %v818 = vsel %vm662, %v744, 0.0
        %819 = vadd.xlane.f32.xlu0 %v818
        %v820 = vpop.xlane.xlu0 %819
        %v821 = vrcp.pop %v820
        %v822 = vmul.f32 %v815, %v821
        %v823 = vld [vmem:[%s7] sm:$0xff]
        %s824 = scalar_lea.vmem %s1, 128
        %v825 = vld [vmem:[%s824] sm:$0xff]
        %v826 = vld [vmem:[%s824 + $0x8] sm:$0xff]
        %v827 = vld [vmem:[%s824 + $0x10] sm:$0xff]
        %v828 = vld [vmem:[%s824 + $0x18] sm:$0xff]
        %v829 = vld [vmem:[%s824 + $0x20] sm:$0xff]
        %v830 = vld [vmem:[%s824 + $0x28] sm:$0xff]
        %v831 = vld [vmem:[%s824 + $0x30] sm:$0xff]
        %v832 = vld [vmem:[%s824 + $0x38] sm:$0xff]
        %v833 = vld [vmem:[%s824 + $0x40] sm:$0xff]
        %v834 = vld [vmem:[%s824 + $0x48] sm:$0xff]
        %v835 = vld [vmem:[%s824 + $0x50] sm:$0xff]
        %v836 = vld [vmem:[%s824 + $0x58] sm:$0xff]
        %v837 = vld [vmem:[%s824 + $0x60] sm:$0xff]
        %v838 = vld [vmem:[%s824 + $0x68] sm:$0xff]
        %v839 = vld [vmem:[%s824 + $0x70] sm:$0xff]
        %v840 = vld [vmem:[%s824 + $0x78] sm:$0xff]
        %s841 = scalar_lea.vmem %s4, 1
        %v842 = vld [vmem:[%s841] sm:$0x1]
        %v844 = vlaneseq
        %v845 = vshrl.u32 %v844, 7
        %v846 = vsub.s32 0, %v845
        %v847 = vrot.slane %v842, %v846
        %849 = vmatprep.subr.mxu0 0.0
        %850 = vmatpush1.msra.mxu0 %v825
        %851 = vmatprep.subr.mxu0 0.0
        %852 = vmatpush1.msra.mxu0 %v826
        %853 = vmatprep.subr.mxu0 0.0
        %854 = vmatpush1.msra.mxu0 %v827
        %855 = vmatprep.subr.mxu0 0.0
        %856 = vmatpush1.msra.mxu0 %v828
        %857 = vmatprep.subr.mxu0 0.0
        %858 = vmatpush1.msra.mxu0 %v829
        %859 = vmatprep.subr.mxu0 0.0
        %860 = vmatpush1.msra.mxu0 %v830
        %861 = vmatprep.subr.mxu0 0.0
        %862 = vmatpush1.msra.mxu0 %v831
        %863 = vmatprep.subr.mxu0 0.0
        %864 = vmatpush1.msra.mxu0 %v832
        %865 = vmatprep.subr.mxu0 0.0
        %866 = vmatpush1.msra.mxu0 %v833
        %867 = vmatprep.subr.mxu0 0.0
        %868 = vmatpush1.msra.mxu0 %v834
        %869 = vmatprep.subr.mxu0 0.0
        %870 = vmatpush1.msra.mxu0 %v835
        %871 = vmatprep.subr.mxu0 0.0
        %872 = vmatpush1.msra.mxu0 %v836
        %873 = vmatprep.subr.mxu0 0.0
        %874 = vmatpush1.msra.mxu0 %v837
        %875 = vmatprep.subr.mxu0 0.0
        %876 = vmatpush1.msra.mxu0 %v838
        %877 = vmatprep.subr.mxu0 0.0
        %878 = vmatpush1.msra.mxu0 %v839
        %879 = vmatprep.subr.mxu0 0.0
        %880 = vmatpush1.msra.mxu0 %v840
        %881 = vmatprep.subr.mxu0 0.0
        %882 = vmatpush1.msra.mxu0 0.0
        %883 = vmatprep.subr.mxu0 0.0
        %884 = vmatpush1.msra.mxu0 0.0
        %885 = vmatprep.subr.mxu0 0.0
        %886 = vmatpush1.msra.mxu0 0.0
        %887 = vmatprep.subr.mxu0 0.0
        %888 = vmatpush1.msra.mxu0 0.0
        %889 = vmatprep.subr.mxu0 0.0
        %890 = vmatpush1.msra.mxu0 0.0
        %891 = vmatprep.subr.mxu0 0.0
        %892 = vmatpush1.msra.mxu0 0.0
        %893 = vmatprep.subr.mxu0 0.0
        %894 = vmatpush1.msra.mxu0 0.0
        %895 = vmatprep.subr.mxu0 0.0
        %896 = vmatpush1.msra.mxu0 0.0
        %897 = vmatprep.subr.mxu0 0.0
        %898 = vmatpush1.msra.mxu0 0.0
        %899 = vmatprep.subr.mxu0 0.0
        %900 = vmatpush1.msra.mxu0 0.0
        %901 = vmatprep.subr.mxu0 0.0
        %902 = vmatpush1.msra.mxu0 0.0
        %903 = vmatprep.subr.mxu0 0.0
        %904 = vmatpush1.msra.mxu0 0.0
        %905 = vmatprep.subr.mxu0 0.0
        %906 = vmatpush1.msra.mxu0 0.0
        %907 = vmatprep.subr.mxu0 0.0
        %908 = vmatpush1.msra.mxu0 0.0
        %909 = vmatprep.subr.mxu0 0.0
        %910 = vmatpush1.msra.mxu0 0.0
        %911 = vmatprep.subr.mxu0 0.0
        %912 = vmatpush1.msra.mxu0 0.0
        %913 = vmatprep.mubr.f32.mxu0 0.0
        %914 = vmatmul.mubr.f32.gmra.mrb[0].mxu0 %v382
        %v915 = vpop.f32.mrb[0].mxu0
        %v916 = vadd.f32 %v847, %v915
        %v917 = vpop.f32.mrb[0].mxu0
        %918 = vdwg.mxu0
        %s919 = scalar_lea.vmem %s2, 128
        %v920 = vld [vmem:[%s919] sm:$0xff]
        %v921 = vld [vmem:[%s919 + $0x8] sm:$0xff]
        %v922 = vld [vmem:[%s919 + $0x10] sm:$0xff]
        %v923 = vld [vmem:[%s919 + $0x18] sm:$0xff]
        %v924 = vld [vmem:[%s919 + $0x20] sm:$0xff]
        %v925 = vld [vmem:[%s919 + $0x28] sm:$0xff]
        %v926 = vld [vmem:[%s919 + $0x30] sm:$0xff]
        %v927 = vld [vmem:[%s919 + $0x38] sm:$0xff]
        %v928 = vld [vmem:[%s919 + $0x40] sm:$0xff]
        %v929 = vld [vmem:[%s919 + $0x48] sm:$0xff]
        %v930 = vld [vmem:[%s919 + $0x50] sm:$0xff]
        %v931 = vld [vmem:[%s919 + $0x58] sm:$0xff]
        %v932 = vld [vmem:[%s919 + $0x60] sm:$0xff]
        %v933 = vld [vmem:[%s919 + $0x68] sm:$0xff]
        %v934 = vld [vmem:[%s919 + $0x70] sm:$0xff]
        %v935 = vld [vmem:[%s919 + $0x78] sm:$0xff]
        %s936 = scalar_lea.vmem %s5, 1
        %v937 = vld [vmem:[%s936] sm:$0x1]
        %v939 = vlaneseq
        %v940 = vshrl.u32 %v939, 7
        %v941 = vsub.s32 0, %v940
        %v942 = vrot.slane %v937, %v941
        %944 = vmatprep.subr.mxu0 0.0
        %945 = vmatpush1.msra.mxu0 %v920
        %946 = vmatprep.subr.mxu0 0.0
        %947 = vmatpush1.msra.mxu0 %v921
        %948 = vmatprep.subr.mxu0 0.0
        %949 = vmatpush1.msra.mxu0 %v922
        %950 = vmatprep.subr.mxu0 0.0
        %951 = vmatpush1.msra.mxu0 %v923
        %952 = vmatprep.subr.mxu0 0.0
        %953 = vmatpush1.msra.mxu0 %v924
        %954 = vmatprep.subr.mxu0 0.0
        %955 = vmatpush1.msra.mxu0 %v925
        %956 = vmatprep.subr.mxu0 0.0
        %957 = vmatpush1.msra.mxu0 %v926
        %958 = vmatprep.subr.mxu0 0.0
        %959 = vmatpush1.msra.mxu0 %v927
        %960 = vmatprep.subr.mxu0 0.0
        %961 = vmatpush1.msra.mxu0 %v928
        %962 = vmatprep.subr.mxu0 0.0
        %963 = vmatpush1.msra.mxu0 %v929
        %964 = vmatprep.subr.mxu0 0.0
        %965 = vmatpush1.msra.mxu0 %v930
        %966 = vmatprep.subr.mxu0 0.0
        %967 = vmatpush1.msra.mxu0 %v931
        %968 = vmatprep.subr.mxu0 0.0
        %969 = vmatpush1.msra.mxu0 %v932
        %970 = vmatprep.subr.mxu0 0.0
        %971 = vmatpush1.msra.mxu0 %v933
        %972 = vmatprep.subr.mxu0 0.0
        %973 = vmatpush1.msra.mxu0 %v934
        %974 = vmatprep.subr.mxu0 0.0
        %975 = vmatpush1.msra.mxu0 %v935
        %976 = vmatprep.subr.mxu0 0.0
        %977 = vmatpush1.msra.mxu0 0.0
        %978 = vmatprep.subr.mxu0 0.0
        %979 = vmatpush1.msra.mxu0 0.0
        %980 = vmatprep.subr.mxu0 0.0
        %981 = vmatpush1.msra.mxu0 0.0
        %982 = vmatprep.subr.mxu0 0.0
        %983 = vmatpush1.msra.mxu0 0.0
        %984 = vmatprep.subr.mxu0 0.0
        %985 = vmatpush1.msra.mxu0 0.0
        %986 = vmatprep.subr.mxu0 0.0
        %987 = vmatpush1.msra.mxu0 0.0
        %988 = vmatprep.subr.mxu0 0.0
        %989 = vmatpush1.msra.mxu0 0.0
        %990 = vmatprep.subr.mxu0 0.0
        %991 = vmatpush1.msra.mxu0 0.0
        %992 = vmatprep.subr.mxu0 0.0
        %993 = vmatpush1.msra.mxu0 0.0
        %994 = vmatprep.subr.mxu0 0.0
        %995 = vmatpush1.msra.mxu0 0.0
        %996 = vmatprep.subr.mxu0 0.0
        %997 = vmatpush1.msra.mxu0 0.0
        %998 = vmatprep.subr.mxu0 0.0
        %999 = vmatpush1.msra.mxu0 0.0
        %1000 = vmatprep.subr.mxu0 0.0
        %1001 = vmatpush1.msra.mxu0 0.0
        %1002 = vmatprep.subr.mxu0 0.0
        %1003 = vmatpush1.msra.mxu0 0.0
        %1004 = vmatprep.subr.mxu0 0.0
        %1005 = vmatpush1.msra.mxu0 0.0
        %1006 = vmatprep.subr.mxu0 0.0
        %1007 = vmatpush1.msra.mxu0 0.0
        %1008 = vmatprep.mubr.f32.mxu0 0.0
        %1009 = vmatmul.mubr.f32.gmra.mrb[0].mxu0 %v382
        %v1010 = vpop.f32.mrb[0].mxu0
        %v1011 = vadd.f32 %v942, %v1010
        %v1012 = vpop.f32.mrb[0].mxu0
        %1013 = vdwg.mxu0
        %s1014 = scalar_lea.vmem %s3, 128
        %v1015 = vld [vmem:[%s1014] sm:$0xff]
        %v1016 = vld [vmem:[%s1014 + $0x8] sm:$0xff]
        %v1017 = vld [vmem:[%s1014 + $0x10] sm:$0xff]
        %v1018 = vld [vmem:[%s1014 + $0x18] sm:$0xff]
        %v1019 = vld [vmem:[%s1014 + $0x20] sm:$0xff]
        %v1020 = vld [vmem:[%s1014 + $0x28] sm:$0xff]
        %v1021 = vld [vmem:[%s1014 + $0x30] sm:$0xff]
        %v1022 = vld [vmem:[%s1014 + $0x38] sm:$0xff]
        %v1023 = vld [vmem:[%s1014 + $0x40] sm:$0xff]
        %v1024 = vld [vmem:[%s1014 + $0x48] sm:$0xff]
        %v1025 = vld [vmem:[%s1014 + $0x50] sm:$0xff]
        %v1026 = vld [vmem:[%s1014 + $0x58] sm:$0xff]
        %v1027 = vld [vmem:[%s1014 + $0x60] sm:$0xff]
        %v1028 = vld [vmem:[%s1014 + $0x68] sm:$0xff]
        %v1029 = vld [vmem:[%s1014 + $0x70] sm:$0xff]
        %v1030 = vld [vmem:[%s1014 + $0x78] sm:$0xff]
        %s1031 = scalar_lea.vmem %s6, 1
        %v1032 = vld [vmem:[%s1031] sm:$0x1]
        %v1034 = vlaneseq
        %v1035 = vshrl.u32 %v1034, 7
        %v1036 = vsub.s32 0, %v1035
        %v1037 = vrot.slane %v1032, %v1036
        %1039 = vmatprep.subr.mxu0 0.0
        %1040 = vmatpush1.msra.mxu0 %v1015
        %1041 = vmatprep.subr.mxu0 0.0
        %1042 = vmatpush1.msra.mxu0 %v1016
        %1043 = vmatprep.subr.mxu0 0.0
        %1044 = vmatpush1.msra.mxu0 %v1017
        %1045 = vmatprep.subr.mxu0 0.0
        %1046 = vmatpush1.msra.mxu0 %v1018
        %1047 = vmatprep.subr.mxu0 0.0
        %1048 = vmatpush1.msra.mxu0 %v1019
        %1049 = vmatprep.subr.mxu0 0.0
        %1050 = vmatpush1.msra.mxu0 %v1020
        %1051 = vmatprep.subr.mxu0 0.0
        %1052 = vmatpush1.msra.mxu0 %v1021
        %1053 = vmatprep.subr.mxu0 0.0
        %1054 = vmatpush1.msra.mxu0 %v1022
        %1055 = vmatprep.subr.mxu0 0.0
        %1056 = vmatpush1.msra.mxu0 %v1023
        %1057 = vmatprep.subr.mxu0 0.0
        %1058 = vmatpush1.msra.mxu0 %v1024
        %1059 = vmatprep.subr.mxu0 0.0
        %1060 = vmatpush1.msra.mxu0 %v1025
        %1061 = vmatprep.subr.mxu0 0.0
        %1062 = vmatpush1.msra.mxu0 %v1026
        %1063 = vmatprep.subr.mxu0 0.0
        %1064 = vmatpush1.msra.mxu0 %v1027
        %1065 = vmatprep.subr.mxu0 0.0
        %1066 = vmatpush1.msra.mxu0 %v1028
        %1067 = vmatprep.subr.mxu0 0.0
        %1068 = vmatpush1.msra.mxu0 %v1029
        %1069 = vmatprep.subr.mxu0 0.0
        %1070 = vmatpush1.msra.mxu0 %v1030
        %1071 = vmatprep.subr.mxu0 0.0
        %1072 = vmatpush1.msra.mxu0 0.0
        %1073 = vmatprep.subr.mxu0 0.0
        %1074 = vmatpush1.msra.mxu0 0.0
        %1075 = vmatprep.subr.mxu0 0.0
        %1076 = vmatpush1.msra.mxu0 0.0
        %1077 = vmatprep.subr.mxu0 0.0
        %1078 = vmatpush1.msra.mxu0 0.0
        %1079 = vmatprep.subr.mxu0 0.0
        %1080 = vmatpush1.msra.mxu0 0.0
        %1081 = vmatprep.subr.mxu0 0.0
        %1082 = vmatpush1.msra.mxu0 0.0
        %1083 = vmatprep.subr.mxu0 0.0
        %1084 = vmatpush1.msra.mxu0 0.0
        %1085 = vmatprep.subr.mxu0 0.0
        %1086 = vmatpush1.msra.mxu0 0.0
        %1087 = vmatprep.subr.mxu0 0.0
        %1088 = vmatpush1.msra.mxu0 0.0
        %1089 = vmatprep.subr.mxu0 0.0
        %1090 = vmatpush1.msra.mxu0 0.0
        %1091 = vmatprep.subr.mxu0 0.0
        %1092 = vmatpush1.msra.mxu0 0.0
        %1093 = vmatprep.subr.mxu0 0.0
        %1094 = vmatpush1.msra.mxu0 0.0
        %1095 = vmatprep.subr.mxu0 0.0
        %1096 = vmatpush1.msra.mxu0 0.0
        %1097 = vmatprep.subr.mxu0 0.0
        %1098 = vmatpush1.msra.mxu0 0.0
        %1099 = vmatprep.subr.mxu0 0.0
        %1100 = vmatpush1.msra.mxu0 0.0
        %1101 = vmatprep.subr.mxu0 0.0
        %1102 = vmatpush1.msra.mxu0 0.0
        %1103 = vmatprep.mubr.f32.mxu0 0.0
        %1104 = vmatmul.mubr.f32.gmra.mrb[0].mxu0 %v382
        %v1105 = vpop.f32.mrb[0].mxu0
        %v1106 = vadd.f32 %v1037, %v1105
        %v1107 = vpop.f32.mrb[0].mxu0
        %1108 = vdwg.mxu0
        %v1110 = vsel %vm662, %v916, 0
        %v1113 = vsel %vm662, %v1011, 0
        %1115 = vmatprep.subr.mxu0 0.0
        %1116 = vmatpush1.xpose.msra.mxu0 %v1113
        %1117 = vmatprep.subr.mxu0 0.0
        %1118 = vmatpush1.xpose.msra.mxu0 0.0
        %1119 = vmatprep.subr.mxu0 0.0
        %1120 = vmatpush1.xpose.msra.mxu0 0.0
        %1121 = vmatprep.subr.mxu0 0.0
        %1122 = vmatpush1.xpose.msra.mxu0 0.0
        %1123 = vmatprep.subr.mxu0 0.0
        %1124 = vmatpush1.xpose.msra.mxu0 0.0
        %1125 = vmatprep.subr.mxu0 0.0
        %1126 = vmatpush1.xpose.msra.mxu0 0.0
        %1127 = vmatprep.subr.mxu0 0.0
        %1128 = vmatpush1.xpose.msra.mxu0 0.0
        %1129 = vmatprep.subr.mxu0 0.0
        %1130 = vmatpush1.xpose.msra.mxu0 0.0
        %1131 = vmatprep.subr.mxu0 0.0
        %1132 = vmatpush1.xpose.msra.mxu0 0.0
        %1133 = vmatprep.subr.mxu0 0.0
        %1134 = vmatpush1.xpose.msra.mxu0 0.0
        %1135 = vmatprep.subr.mxu0 0.0
        %1136 = vmatpush1.xpose.msra.mxu0 0.0
        %1137 = vmatprep.subr.mxu0 0.0
        %1138 = vmatpush1.xpose.msra.mxu0 0.0
        %1139 = vmatprep.subr.mxu0 0.0
        %1140 = vmatpush1.xpose.msra.mxu0 0.0
        %1141 = vmatprep.subr.mxu0 0.0
        %1142 = vmatpush1.xpose.msra.mxu0 0.0
        %1143 = vmatprep.subr.mxu0 0.0
        %1144 = vmatpush1.xpose.msra.mxu0 0.0
        %1145 = vmatprep.subr.mxu0 0.0
        %1146 = vmatpush1.xpose.msra.mxu0 0.0
        %1147 = vmatprep.subr.mxu0 0.0
        %1148 = vmatpush1.xpose.msra.mxu0 0.0
        %1149 = vmatprep.subr.mxu0 0.0
        %1150 = vmatpush1.xpose.msra.mxu0 0.0
        %1151 = vmatprep.subr.mxu0 0.0
        %1152 = vmatpush1.xpose.msra.mxu0 0.0
        %1153 = vmatprep.subr.mxu0 0.0
        %1154 = vmatpush1.xpose.msra.mxu0 0.0
        %1155 = vmatprep.subr.mxu0 0.0
        %1156 = vmatpush1.xpose.msra.mxu0 0.0
        %1157 = vmatprep.subr.mxu0 0.0
        %1158 = vmatpush1.xpose.msra.mxu0 0.0
        %1159 = vmatprep.subr.mxu0 0.0
        %1160 = vmatpush1.xpose.msra.mxu0 0.0
        %1161 = vmatprep.subr.mxu0 0.0
        %1162 = vmatpush1.xpose.msra.mxu0 0.0
        %1163 = vmatprep.subr.mxu0 0.0
        %1164 = vmatpush1.xpose.msra.mxu0 0.0
        %1165 = vmatprep.subr.mxu0 0.0
        %1166 = vmatpush1.xpose.msra.mxu0 0.0
        %1167 = vmatprep.subr.mxu0 0.0
        %1168 = vmatpush1.xpose.msra.mxu0 0.0
        %1169 = vmatprep.subr.mxu0 0.0
        %1170 = vmatpush1.xpose.msra.mxu0 0.0
        %1171 = vmatprep.subr.mxu0 0.0
        %1172 = vmatpush1.xpose.msra.mxu0 0.0
        %1173 = vmatprep.subr.mxu0 0.0
        %1174 = vmatpush1.xpose.msra.mxu0 0.0
        %1175 = vmatprep.subr.mxu0 0.0
        %1176 = vmatpush1.xpose.msra.mxu0 0.0
        %1177 = vmatprep.subr.mxu0 0.0
        %1178 = vmatpush1.xpose.msra.mxu0 0.0
        %1179 = vmatprep.mubr.f32.mxu0 0.0
        %1180 = vmatmul.mubr.f32.gmra.mrb[0].mxu0 %v1110
        %v1181 = vpop.f32.mrb[0].mxu0
        %v1182 = vadd.f32 0.0, %v1181
        %v1183 = vpop.f32.mrb[0].mxu0
        %1184 = vdwg.mxu0
        %v1185 = vsel %vm662, %v1182, -inf
        %1186 = vmax.xlane.f32.xlu0 %v1185
        %v1187 = vpop.xlane.xlu0 %1186
        %v1188 = vsub.f32 %v1182, %v1187
        %v1189 = vmul.f32 %v1188, 1.442695
        %v1190 = vpow.pop %v1189
        %v1192 = vsel %vm662, %v1190, 0
        %1194 = vmatprep.subr.mxu0 0.0
        %1195 = vmatpush1.msra.mxu0 %v1106
        %1196 = vmatprep.subr.mxu0 0.0
        %1197 = vmatpush1.msra.mxu0 0.0
        %1198 = vmatprep.subr.mxu0 0.0
        %1199 = vmatpush1.msra.mxu0 0.0
        %1200 = vmatprep.subr.mxu0 0.0
        %1201 = vmatpush1.msra.mxu0 0.0
        %1202 = vmatprep.subr.mxu0 0.0
        %1203 = vmatpush1.msra.mxu0 0.0
        %1204 = vmatprep.subr.mxu0 0.0
        %1205 = vmatpush1.msra.mxu0 0.0
        %1206 = vmatprep.subr.mxu0 0.0
        %1207 = vmatpush1.msra.mxu0 0.0
        %1208 = vmatprep.subr.mxu0 0.0
        %1209 = vmatpush1.msra.mxu0 0.0
        %1210 = vmatprep.subr.mxu0 0.0
        %1211 = vmatpush1.msra.mxu0 0.0
        %1212 = vmatprep.subr.mxu0 0.0
        %1213 = vmatpush1.msra.mxu0 0.0
        %1214 = vmatprep.subr.mxu0 0.0
        %1215 = vmatpush1.msra.mxu0 0.0
        %1216 = vmatprep.subr.mxu0 0.0
        %1217 = vmatpush1.msra.mxu0 0.0
        %1218 = vmatprep.subr.mxu0 0.0
        %1219 = vmatpush1.msra.mxu0 0.0
        %1220 = vmatprep.subr.mxu0 0.0
        %1221 = vmatpush1.msra.mxu0 0.0
        %1222 = vmatprep.subr.mxu0 0.0
        %1223 = vmatpush1.msra.mxu0 0.0
        %1224 = vmatprep.subr.mxu0 0.0
        %1225 = vmatpush1.msra.mxu0 0.0
        %1226 = vmatprep.subr.mxu0 0.0
        %1227 = vmatpush1.msra.mxu0 0.0
        %1228 = vmatprep.subr.mxu0 0.0
        %1229 = vmatpush1.msra.mxu0 0.0
        %1230 = vmatprep.subr.mxu0 0.0
        %1231 = vmatpush1.msra.mxu0 0.0
        %1232 = vmatprep.subr.mxu0 0.0
        %1233 = vmatpush1.msra.mxu0 0.0
        %1234 = vmatprep.subr.mxu0 0.0
        %1235 = vmatpush1.msra.mxu0 0.0
        %1236 = vmatprep.subr.mxu0 0.0
        %1237 = vmatpush1.msra.mxu0 0.0
        %1238 = vmatprep.subr.mxu0 0.0
        %1239 = vmatpush1.msra.mxu0 0.0
        %1240 = vmatprep.subr.mxu0 0.0
        %1241 = vmatpush1.msra.mxu0 0.0
        %1242 = vmatprep.subr.mxu0 0.0
        %1243 = vmatpush1.msra.mxu0 0.0
        %1244 = vmatprep.subr.mxu0 0.0
        %1245 = vmatpush1.msra.mxu0 0.0
        %1246 = vmatprep.subr.mxu0 0.0
        %1247 = vmatpush1.msra.mxu0 0.0
        %1248 = vmatprep.subr.mxu0 0.0
        %1249 = vmatpush1.msra.mxu0 0.0
        %1250 = vmatprep.subr.mxu0 0.0
        %1251 = vmatpush1.msra.mxu0 0.0
        %1252 = vmatprep.subr.mxu0 0.0
        %1253 = vmatpush1.msra.mxu0 0.0
        %1254 = vmatprep.subr.mxu0 0.0
        %1255 = vmatpush1.msra.mxu0 0.0
        %1256 = vmatprep.subr.mxu0 0.0
        %1257 = vmatpush1.msra.mxu0 0.0
        %1258 = vmatprep.mubr.f32.mxu0 0.0
        %1259 = vmatmul.mubr.f32.gmra.mrb[0].mxu0 %v1192
        %v1260 = vpop.f32.mrb[0].mxu0
        %v1261 = vadd.f32 0.0, %v1260
        %v1262 = vpop.f32.mrb[0].mxu0
        %1263 = vdwg.mxu0
        %v1264 = vsel %vm662, %v1190, 0.0
        %1265 = vadd.xlane.f32.xlu0 %v1264
        %v1266 = vpop.xlane.xlu0 %1265
        %v1267 = vrcp.pop %v1266
        %v1268 = vmul.f32 %v1261, %v1267
        %s1269 = scalar_lea.vmem %s7, 8
        %v1270 = vld [vmem:[%s1269] sm:$0xff]
        %v1272 = vsel %vm662, %v1268, 0
        %1274 = vmatprep.subr.mxu0 0.0
        %1275 = vmatpush1.msra.mxu0 %v1270
        %1276 = vmatprep.subr.mxu0 0.0
        %1277 = vmatpush1.msra.mxu0 0.0
        %1278 = vmatprep.subr.mxu0 0.0
        %1279 = vmatpush1.msra.mxu0 0.0
        %1280 = vmatprep.subr.mxu0 0.0
        %1281 = vmatpush1.msra.mxu0 0.0
        %1282 = vmatprep.subr.mxu0 0.0
        %1283 = vmatpush1.msra.mxu0 0.0
        %1284 = vmatprep.subr.mxu0 0.0
        %1285 = vmatpush1.msra.mxu0 0.0
        %1286 = vmatprep.subr.mxu0 0.0
        %1287 = vmatpush1.msra.mxu0 0.0
        %1288 = vmatprep.subr.mxu0 0.0
        %1289 = vmatpush1.msra.mxu0 0.0
        %1290 = vmatprep.subr.mxu0 0.0
        %1291 = vmatpush1.msra.mxu0 0.0
        %1292 = vmatprep.subr.mxu0 0.0
        %1293 = vmatpush1.msra.mxu0 0.0
        %1294 = vmatprep.subr.mxu0 0.0
        %1295 = vmatpush1.msra.mxu0 0.0
        %1296 = vmatprep.subr.mxu0 0.0
        %1297 = vmatpush1.msra.mxu0 0.0
        %1298 = vmatprep.subr.mxu0 0.0
        %1299 = vmatpush1.msra.mxu0 0.0
        %1300 = vmatprep.subr.mxu0 0.0
        %1301 = vmatpush1.msra.mxu0 0.0
        %1302 = vmatprep.subr.mxu0 0.0
        %1303 = vmatpush1.msra.mxu0 0.0
        %1304 = vmatprep.subr.mxu0 0.0
        %1305 = vmatpush1.msra.mxu0 0.0
        %1306 = vmatprep.subr.mxu0 0.0
        %1307 = vmatpush1.msra.mxu0 0.0
        %1308 = vmatprep.subr.mxu0 0.0
        %1309 = vmatpush1.msra.mxu0 0.0
        %1310 = vmatprep.subr.mxu0 0.0
        %1311 = vmatpush1.msra.mxu0 0.0
        %1312 = vmatprep.subr.mxu0 0.0
        %1313 = vmatpush1.msra.mxu0 0.0
        %1314 = vmatprep.subr.mxu0 0.0
        %1315 = vmatpush1.msra.mxu0 0.0
        %1316 = vmatprep.subr.mxu0 0.0
        %1317 = vmatpush1.msra.mxu0 0.0
        %1318 = vmatprep.subr.mxu0 0.0
        %1319 = vmatpush1.msra.mxu0 0.0
        %1320 = vmatprep.subr.mxu0 0.0
        %1321 = vmatpush1.msra.mxu0 0.0
        %1322 = vmatprep.subr.mxu0 0.0
        %1323 = vmatpush1.msra.mxu0 0.0
        %1324 = vmatprep.subr.mxu0 0.0
        %1325 = vmatpush1.msra.mxu0 0.0
        %1326 = vmatprep.subr.mxu0 0.0
        %1327 = vmatpush1.msra.mxu0 0.0
        %1328 = vmatprep.subr.mxu0 0.0
        %1329 = vmatpush1.msra.mxu0 0.0
        %1330 = vmatprep.subr.mxu0 0.0
        %1331 = vmatpush1.msra.mxu0 0.0
        %1332 = vmatprep.subr.mxu0 0.0
        %1333 = vmatpush1.msra.mxu0 0.0
        %1334 = vmatprep.subr.mxu0 0.0
        %1335 = vmatpush1.msra.mxu0 0.0
        %1336 = vmatprep.subr.mxu0 0.0
        %1337 = vmatpush1.msra.mxu0 0.0
        %1338 = vmatprep.mubr.f32.mxu0 0.0
        %1339 = vmatmul.mubr.f32.gmra.mrb[0].mxu0 %v1272
        %v1340 = vpop.f32.mrb[0].mxu0
        %v1341 = vadd.f32 0.0, %v1340
        %v1342 = vpop.f32.mrb[0].mxu0
        %1343 = vdwg.mxu0
        %v1345 = vsel %vm662, %v822, 0
        %1347 = vmatprep.subr.mxu0 0.0
        %1348 = vmatpush1.msra.mxu0 %v823
        %1349 = vmatprep.subr.mxu0 0.0
        %1350 = vmatpush1.msra.mxu0 0.0
        %1351 = vmatprep.subr.mxu0 0.0
        %1352 = vmatpush1.msra.mxu0 0.0
        %1353 = vmatprep.subr.mxu0 0.0
        %1354 = vmatpush1.msra.mxu0 0.0
        %1355 = vmatprep.subr.mxu0 0.0
        %1356 = vmatpush1.msra.mxu0 0.0
        %1357 = vmatprep.subr.mxu0 0.0
        %1358 = vmatpush1.msra.mxu0 0.0
        %1359 = vmatprep.subr.mxu0 0.0
        %1360 = vmatpush1.msra.mxu0 0.0
        %1361 = vmatprep.subr.mxu0 0.0
        %1362 = vmatpush1.msra.mxu0 0.0
        %1363 = vmatprep.subr.mxu0 0.0
        %1364 = vmatpush1.msra.mxu0 0.0
        %1365 = vmatprep.subr.mxu0 0.0
        %1366 = vmatpush1.msra.mxu0 0.0
        %1367 = vmatprep.subr.mxu0 0.0
        %1368 = vmatpush1.msra.mxu0 0.0
        %1369 = vmatprep.subr.mxu0 0.0
        %1370 = vmatpush1.msra.mxu0 0.0
        %1371 = vmatprep.subr.mxu0 0.0
        %1372 = vmatpush1.msra.mxu0 0.0
        %1373 = vmatprep.subr.mxu0 0.0
        %1374 = vmatpush1.msra.mxu0 0.0
        %1375 = vmatprep.subr.mxu0 0.0
        %1376 = vmatpush1.msra.mxu0 0.0
        %1377 = vmatprep.subr.mxu0 0.0
        %1378 = vmatpush1.msra.mxu0 0.0
        %1379 = vmatprep.subr.mxu0 0.0
        %1380 = vmatpush1.msra.mxu0 0.0
        %1381 = vmatprep.subr.mxu0 0.0
        %1382 = vmatpush1.msra.mxu0 0.0
        %1383 = vmatprep.subr.mxu0 0.0
        %1384 = vmatpush1.msra.mxu0 0.0
        %1385 = vmatprep.subr.mxu0 0.0
        %1386 = vmatpush1.msra.mxu0 0.0
        %1387 = vmatprep.subr.mxu0 0.0
        %1388 = vmatpush1.msra.mxu0 0.0
        %1389 = vmatprep.subr.mxu0 0.0
        %1390 = vmatpush1.msra.mxu0 0.0
        %1391 = vmatprep.subr.mxu0 0.0
        %1392 = vmatpush1.msra.mxu0 0.0
        %1393 = vmatprep.subr.mxu0 0.0
        %1394 = vmatpush1.msra.mxu0 0.0
        %1395 = vmatprep.subr.mxu0 0.0
        %1396 = vmatpush1.msra.mxu0 0.0
        %1397 = vmatprep.subr.mxu0 0.0
        %1398 = vmatpush1.msra.mxu0 0.0
        %1399 = vmatprep.subr.mxu0 0.0
        %1400 = vmatpush1.msra.mxu0 0.0
        %1401 = vmatprep.subr.mxu0 0.0
        %1402 = vmatpush1.msra.mxu0 0.0
        %1403 = vmatprep.subr.mxu0 0.0
        %1404 = vmatpush1.msra.mxu0 0.0
        %1405 = vmatprep.subr.mxu0 0.0
        %1406 = vmatpush1.msra.mxu0 0.0
        %1407 = vmatprep.subr.mxu0 0.0
        %1408 = vmatpush1.msra.mxu0 0.0
        %1409 = vmatprep.subr.mxu0 0.0
        %1410 = vmatpush1.msra.mxu0 0.0
        %1411 = vmatprep.mubr.f32.mxu0 0.0
        %1412 = vmatmul.mubr.f32.gmra.mrb[0].mxu0 %v1345
        %v1413 = vpop.f32.mrb[0].mxu0
        %v1414 = vadd.f32 %v1341, %v1413
        %v1415 = vpop.f32.mrb[0].mxu0
        %1416 = vdwg.mxu0
        %s1417 = scalar_lea.vmem %s1, 256
        %v1418 = vld [vmem:[%s1417] sm:$0xff]
        %v1419 = vld [vmem:[%s1417 + $0x8] sm:$0xff]
        %v1420 = vld [vmem:[%s1417 + $0x10] sm:$0xff]
        %v1421 = vld [vmem:[%s1417 + $0x18] sm:$0xff]
        %v1422 = vld [vmem:[%s1417 + $0x20] sm:$0xff]
        %v1423 = vld [vmem:[%s1417 + $0x28] sm:$0xff]
        %v1424 = vld [vmem:[%s1417 + $0x30] sm:$0xff]
        %v1425 = vld [vmem:[%s1417 + $0x38] sm:$0xff]
        %v1426 = vld [vmem:[%s1417 + $0x40] sm:$0xff]
        %v1427 = vld [vmem:[%s1417 + $0x48] sm:$0xff]
        %v1428 = vld [vmem:[%s1417 + $0x50] sm:$0xff]
        %v1429 = vld [vmem:[%s1417 + $0x58] sm:$0xff]
        %v1430 = vld [vmem:[%s1417 + $0x60] sm:$0xff]
        %v1431 = vld [vmem:[%s1417 + $0x68] sm:$0xff]
        %v1432 = vld [vmem:[%s1417 + $0x70] sm:$0xff]
        %v1433 = vld [vmem:[%s1417 + $0x78] sm:$0xff]
        %s1434 = scalar_lea.vmem %s4, 2
        %v1435 = vld [vmem:[%s1434] sm:$0x1]
        %v1437 = vlaneseq
        %v1438 = vshrl.u32 %v1437, 7
        %v1439 = vsub.s32 0, %v1438
        %v1440 = vrot.slane %v1435, %v1439
        %1442 = vmatprep.subr.mxu0 0.0
        %1443 = vmatpush1.msra.mxu0 %v1418
        %1444 = vmatprep.subr.mxu0 0.0
        %1445 = vmatpush1.msra.mxu0 %v1419
        %1446 = vmatprep.subr.mxu0 0.0
        %1447 = vmatpush1.msra.mxu0 %v1420
        %1448 = vmatprep.subr.mxu0 0.0
        %1449 = vmatpush1.msra.mxu0 %v1421
        %1450 = vmatprep.subr.mxu0 0.0
        %1451 = vmatpush1.msra.mxu0 %v1422
        %1452 = vmatprep.subr.mxu0 0.0
        %1453 = vmatpush1.msra.mxu0 %v1423
        %1454 = vmatprep.subr.mxu0 0.0
        %1455 = vmatpush1.msra.mxu0 %v1424
        %1456 = vmatprep.subr.mxu0 0.0
        %1457 = vmatpush1.msra.mxu0 %v1425
        %1458 = vmatprep.subr.mxu0 0.0
        %1459 = vmatpush1.msra.mxu0 %v1426
        %1460 = vmatprep.subr.mxu0 0.0
        %1461 = vmatpush1.msra.mxu0 %v1427
        %1462 = vmatprep.subr.mxu0 0.0
        %1463 = vmatpush1.msra.mxu0 %v1428
        %1464 = vmatprep.subr.mxu0 0.0
        %1465 = vmatpush1.msra.mxu0 %v1429
        %1466 = vmatprep.subr.mxu0 0.0
        %1467 = vmatpush1.msra.mxu0 %v1430
        %1468 = vmatprep.subr.mxu0 0.0
        %1469 = vmatpush1.msra.mxu0 %v1431
        %1470 = vmatprep.subr.mxu0 0.0
        %1471 = vmatpush1.msra.mxu0 %v1432
        %1472 = vmatprep.subr.mxu0 0.0
        %1473 = vmatpush1.msra.mxu0 %v1433
        %1474 = vmatprep.subr.mxu0 0.0
        %1475 = vmatpush1.msra.mxu0 0.0
        %1476 = vmatprep.subr.mxu0 0.0
        %1477 = vmatpush1.msra.mxu0 0.0
        %1478 = vmatprep.subr.mxu0 0.0
        %1479 = vmatpush1.msra.mxu0 0.0
        %1480 = vmatprep.subr.mxu0 0.0
        %1481 = vmatpush1.msra.mxu0 0.0
        %1482 = vmatprep.subr.mxu0 0.0
        %1483 = vmatpush1.msra.mxu0 0.0
        %1484 = vmatprep.subr.mxu0 0.0
        %1485 = vmatpush1.msra.mxu0 0.0
        %1486 = vmatprep.subr.mxu0 0.0
        %1487 = vmatpush1.msra.mxu0 0.0
        %1488 = vmatprep.subr.mxu0 0.0
        %1489 = vmatpush1.msra.mxu0 0.0
        %1490 = vmatprep.subr.mxu0 0.0
        %1491 = vmatpush1.msra.mxu0 0.0
        %1492 = vmatprep.subr.mxu0 0.0
        %1493 = vmatpush1.msra.mxu0 0.0
        %1494 = vmatprep.subr.mxu0 0.0
        %1495 = vmatpush1.msra.mxu0 0.0
        %1496 = vmatprep.subr.mxu0 0.0
        %1497 = vmatpush1.msra.mxu0 0.0
        %1498 = vmatprep.subr.mxu0 0.0
        %1499 = vmatpush1.msra.mxu0 0.0
        %1500 = vmatprep.subr.mxu0 0.0
        %1501 = vmatpush1.msra.mxu0 0.0
        %1502 = vmatprep.subr.mxu0 0.0
        %1503 = vmatpush1.msra.mxu0 0.0
        %1504 = vmatprep.subr.mxu0 0.0
        %1505 = vmatpush1.msra.mxu0 0.0
        %1506 = vmatprep.mubr.f32.mxu0 0.0
        %1507 = vmatmul.mubr.f32.gmra.mrb[0].mxu0 %v382
        %v1508 = vpop.f32.mrb[0].mxu0
        %v1509 = vadd.f32 %v1440, %v1508
        %v1510 = vpop.f32.mrb[0].mxu0
        %1511 = vdwg.mxu0
        %s1512 = scalar_lea.vmem %s2, 256
        %v1513 = vld [vmem:[%s1512] sm:$0xff]
        %v1514 = vld [vmem:[%s1512 + $0x8] sm:$0xff]
        %v1515 = vld [vmem:[%s1512 + $0x10] sm:$0xff]
        %v1516 = vld [vmem:[%s1512 + $0x18] sm:$0xff]
        %v1517 = vld [vmem:[%s1512 + $0x20] sm:$0xff]
        %v1518 = vld [vmem:[%s1512 + $0x28] sm:$0xff]
        %v1519 = vld [vmem:[%s1512 + $0x30] sm:$0xff]
        %v1520 = vld [vmem:[%s1512 + $0x38] sm:$0xff]
        %v1521 = vld [vmem:[%s1512 + $0x40] sm:$0xff]
        %v1522 = vld [vmem:[%s1512 + $0x48] sm:$0xff]
        %v1523 = vld [vmem:[%s1512 + $0x50] sm:$0xff]
        %v1524 = vld [vmem:[%s1512 + $0x58] sm:$0xff]
        %v1525 = vld [vmem:[%s1512 + $0x60] sm:$0xff]
        %v1526 = vld [vmem:[%s1512 + $0x68] sm:$0xff]
        %v1527 = vld [vmem:[%s1512 + $0x70] sm:$0xff]
        %v1528 = vld [vmem:[%s1512 + $0x78] sm:$0xff]
        %s1529 = scalar_lea.vmem %s5, 2
        %v1530 = vld [vmem:[%s1529] sm:$0x1]
        %v1532 = vlaneseq
        %v1533 = vshrl.u32 %v1532, 7
        %v1534 = vsub.s32 0, %v1533
        %v1535 = vrot.slane %v1530, %v1534
        %1537 = vmatprep.subr.mxu0 0.0
        %1538 = vmatpush1.msra.mxu0 %v1513
        %1539 = vmatprep.subr.mxu0 0.0
        %1540 = vmatpush1.msra.mxu0 %v1514
        %1541 = vmatprep.subr.mxu0 0.0
        %1542 = vmatpush1.msra.mxu0 %v1515
        %1543 = vmatprep.subr.mxu0 0.0
        %1544 = vmatpush1.msra.mxu0 %v1516
        %1545 = vmatprep.subr.mxu0 0.0
        %1546 = vmatpush1.msra.mxu0 %v1517
        %1547 = vmatprep.subr.mxu0 0.0
        %1548 = vmatpush1.msra.mxu0 %v1518
        %1549 = vmatprep.subr.mxu0 0.0
        %1550 = vmatpush1.msra.mxu0 %v1519
        %1551 = vmatprep.subr.mxu0 0.0
        %1552 = vmatpush1.msra.mxu0 %v1520
        %1553 = vmatprep.subr.mxu0 0.0
        %1554 = vmatpush1.msra.mxu0 %v1521
        %1555 = vmatprep.subr.mxu0 0.0
        %1556 = vmatpush1.msra.mxu0 %v1522
        %1557 = vmatprep.subr.mxu0 0.0
        %1558 = vmatpush1.msra.mxu0 %v1523
        %1559 = vmatprep.subr.mxu0 0.0
        %1560 = vmatpush1.msra.mxu0 %v1524
        %1561 = vmatprep.subr.mxu0 0.0
        %1562 = vmatpush1.msra.mxu0 %v1525
        %1563 = vmatprep.subr.mxu0 0.0
        %1564 = vmatpush1.msra.mxu0 %v1526
        %1565 = vmatprep.subr.mxu0 0.0
        %1566 = vmatpush1.msra.mxu0 %v1527
        %1567 = vmatprep.subr.mxu0 0.0
        %1568 = vmatpush1.msra.mxu0 %v1528
        %1569 = vmatprep.subr.mxu0 0.0
        %1570 = vmatpush1.msra.mxu0 0.0
        %1571 = vmatprep.subr.mxu0 0.0
        %1572 = vmatpush1.msra.mxu0 0.0
        %1573 = vmatprep.subr.mxu0 0.0
        %1574 = vmatpush1.msra.mxu0 0.0
        %1575 = vmatprep.subr.mxu0 0.0
        %1576 = vmatpush1.msra.mxu0 0.0
        %1577 = vmatprep.subr.mxu0 0.0
        %1578 = vmatpush1.msra.mxu0 0.0
        %1579 = vmatprep.subr.mxu0 0.0
        %1580 = vmatpush1.msra.mxu0 0.0
        %1581 = vmatprep.subr.mxu0 0.0
        %1582 = vmatpush1.msra.mxu0 0.0
        %1583 = vmatprep.subr.mxu0 0.0
        %1584 = vmatpush1.msra.mxu0 0.0
        %1585 = vmatprep.subr.mxu0 0.0
        %1586 = vmatpush1.msra.mxu0 0.0
        %1587 = vmatprep.subr.mxu0 0.0
        %1588 = vmatpush1.msra.mxu0 0.0
        %1589 = vmatprep.subr.mxu0 0.0
        %1590 = vmatpush1.msra.mxu0 0.0
        %1591 = vmatprep.subr.mxu0 0.0
        %1592 = vmatpush1.msra.mxu0 0.0
        %1593 = vmatprep.subr.mxu0 0.0
        %1594 = vmatpush1.msra.mxu0 0.0
        %1595 = vmatprep.subr.mxu0 0.0
        %1596 = vmatpush1.msra.mxu0 0.0
        %1597 = vmatprep.subr.mxu0 0.0
        %1598 = vmatpush1.msra.mxu0 0.0
        %1599 = vmatprep.subr.mxu0 0.0
        %1600 = vmatpush1.msra.mxu0 0.0
        %1601 = vmatprep.mubr.f32.mxu0 0.0
        %1602 = vmatmul.mubr.f32.gmra.mrb[0].mxu0 %v382
        %v1603 = vpop.f32.mrb[0].mxu0
        %v1604 = vadd.f32 %v1535, %v1603
        %v1605 = vpop.f32.mrb[0].mxu0
        %1606 = vdwg.mxu0
        %s1607 = scalar_lea.vmem %s3, 256
        %v1608 = vld [vmem:[%s1607] sm:$0xff]
        %v1609 = vld [vmem:[%s1607 + $0x8] sm:$0xff]
        %v1610 = vld [vmem:[%s1607 + $0x10] sm:$0xff]
        %v1611 = vld [vmem:[%s1607 + $0x18] sm:$0xff]
        %v1612 = vld [vmem:[%s1607 + $0x20] sm:$0xff]
        %v1613 = vld [vmem:[%s1607 + $0x28] sm:$0xff]
        %v1614 = vld [vmem:[%s1607 + $0x30] sm:$0xff]
        %v1615 = vld [vmem:[%s1607 + $0x38] sm:$0xff]
        %v1616 = vld [vmem:[%s1607 + $0x40] sm:$0xff]
        %v1617 = vld [vmem:[%s1607 + $0x48] sm:$0xff]
        %v1618 = vld [vmem:[%s1607 + $0x50] sm:$0xff]
        %v1619 = vld [vmem:[%s1607 + $0x58] sm:$0xff]
        %v1620 = vld [vmem:[%s1607 + $0x60] sm:$0xff]
        %v1621 = vld [vmem:[%s1607 + $0x68] sm:$0xff]
        %v1622 = vld [vmem:[%s1607 + $0x70] sm:$0xff]
        %v1623 = vld [vmem:[%s1607 + $0x78] sm:$0xff]
        %s1624 = scalar_lea.vmem %s6, 2
        %v1625 = vld [vmem:[%s1624] sm:$0x1]
        %v1627 = vlaneseq
        %v1628 = vshrl.u32 %v1627, 7
        %v1629 = vsub.s32 0, %v1628
        %v1630 = vrot.slane %v1625, %v1629
        %1632 = vmatprep.subr.mxu0 0.0
        %1633 = vmatpush1.msra.mxu0 %v1608
        %1634 = vmatprep.subr.mxu0 0.0
        %1635 = vmatpush1.msra.mxu0 %v1609
        %1636 = vmatprep.subr.mxu0 0.0
        %1637 = vmatpush1.msra.mxu0 %v1610
        %1638 = vmatprep.subr.mxu0 0.0
        %1639 = vmatpush1.msra.mxu0 %v1611
        %1640 = vmatprep.subr.mxu0 0.0
        %1641 = vmatpush1.msra.mxu0 %v1612
        %1642 = vmatprep.subr.mxu0 0.0
        %1643 = vmatpush1.msra.mxu0 %v1613
        %1644 = vmatprep.subr.mxu0 0.0
        %1645 = vmatpush1.msra.mxu0 %v1614
        %1646 = vmatprep.subr.mxu0 0.0
        %1647 = vmatpush1.msra.mxu0 %v1615
        %1648 = vmatprep.subr.mxu0 0.0
        %1649 = vmatpush1.msra.mxu0 %v1616
        %1650 = vmatprep.subr.mxu0 0.0
        %1651 = vmatpush1.msra.mxu0 %v1617
        %1652 = vmatprep.subr.mxu0 0.0
        %1653 = vmatpush1.msra.mxu0 %v1618
        %1654 = vmatprep.subr.mxu0 0.0
        %1655 = vmatpush1.msra.mxu0 %v1619
        %1656 = vmatprep.subr.mxu0 0.0
        %1657 = vmatpush1.msra.mxu0 %v1620
        %1658 = vmatprep.subr.mxu0 0.0
        %1659 = vmatpush1.msra.mxu0 %v1621
        %1660 = vmatprep.subr.mxu0 0.0
        %1661 = vmatpush1.msra.mxu0 %v1622
        %1662 = vmatprep.subr.mxu0 0.0
        %1663 = vmatpush1.msra.mxu0 %v1623
        %1664 = vmatprep.subr.mxu0 0.0
        %1665 = vmatpush1.msra.mxu0 0.0
        %1666 = vmatprep.subr.mxu0 0.0
        %1667 = vmatpush1.msra.mxu0 0.0
        %1668 = vmatprep.subr.mxu0 0.0
        %1669 = vmatpush1.msra.mxu0 0.0
        %1670 = vmatprep.subr.mxu0 0.0
        %1671 = vmatpush1.msra.mxu0 0.0
        %1672 = vmatprep.subr.mxu0 0.0
        %1673 = vmatpush1.msra.mxu0 0.0
        %1674 = vmatprep.subr.mxu0 0.0
        %1675 = vmatpush1.msra.mxu0 0.0
        %1676 = vmatprep.subr.mxu0 0.0
        %1677 = vmatpush1.msra.mxu0 0.0
        %1678 = vmatprep.subr.mxu0 0.0
        %1679 = vmatpush1.msra.mxu0 0.0
        %1680 = vmatprep.subr.mxu0 0.0
        %1681 = vmatpush1.msra.mxu0 0.0
        %1682 = vmatprep.subr.mxu0 0.0
        %1683 = vmatpush1.msra.mxu0 0.0
        %1684 = vmatprep.subr.mxu0 0.0
        %1685 = vmatpush1.msra.mxu0 0.0
        %1686 = vmatprep.subr.mxu0 0.0
        %1687 = vmatpush1.msra.mxu0 0.0
        %1688 = vmatprep.subr.mxu0 0.0
        %1689 = vmatpush1.msra.mxu0 0.0
        %1690 = vmatprep.subr.mxu0 0.0
        %1691 = vmatpush1.msra.mxu0 0.0
        %1692 = vmatprep.subr.mxu0 0.0
        %1693 = vmatpush1.msra.mxu0 0.0
        %1694 = vmatprep.subr.mxu0 0.0
        %1695 = vmatpush1.msra.mxu0 0.0
        %1696 = vmatprep.mubr.f32.mxu0 0.0
        %1697 = vmatmul.mubr.f32.gmra.mrb[0].mxu0 %v382
        %v1698 = vpop.f32.mrb[0].mxu0
        %v1699 = vadd.f32 %v1630, %v1698
        %v1700 = vpop.f32.mrb[0].mxu0
        %1701 = vdwg.mxu0
        %v1703 = vsel %vm662, %v1509, 0
        %v1706 = vsel %vm662, %v1604, 0
        %1708 = vmatprep.subr.mxu0 0.0
        %1709 = vmatpush1.xpose.msra.mxu0 %v1706
        %1710 = vmatprep.subr.mxu0 0.0
        %1711 = vmatpush1.xpose.msra.mxu0 0.0
        %1712 = vmatprep.subr.mxu0 0.0
        %1713 = vmatpush1.xpose.msra.mxu0 0.0
        %1714 = vmatprep.subr.mxu0 0.0
        %1715 = vmatpush1.xpose.msra.mxu0 0.0
        %1716 = vmatprep.subr.mxu0 0.0
        %1717 = vmatpush1.xpose.msra.mxu0 0.0
        %1718 = vmatprep.subr.mxu0 0.0
        %1719 = vmatpush1.xpose.msra.mxu0 0.0
        %1720 = vmatprep.subr.mxu0 0.0
        %1721 = vmatpush1.xpose.msra.mxu0 0.0
        %1722 = vmatprep.subr.mxu0 0.0
        %1723 = vmatpush1.xpose.msra.mxu0 0.0
        %1724 = vmatprep.subr.mxu0 0.0
        %1725 = vmatpush1.xpose.msra.mxu0 0.0
        %1726 = vmatprep.subr.mxu0 0.0
        %1727 = vmatpush1.xpose.msra.mxu0 0.0
        %1728 = vmatprep.subr.mxu0 0.0
        %1729 = vmatpush1.xpose.msra.mxu0 0.0
        %1730 = vmatprep.subr.mxu0 0.0
        %1731 = vmatpush1.xpose.msra.mxu0 0.0
        %1732 = vmatprep.subr.mxu0 0.0
        %1733 = vmatpush1.xpose.msra.mxu0 0.0
        %1734 = vmatprep.subr.mxu0 0.0
        %1735 = vmatpush1.xpose.msra.mxu0 0.0
        %1736 = vmatprep.subr.mxu0 0.0
        %1737 = vmatpush1.xpose.msra.mxu0 0.0
        %1738 = vmatprep.subr.mxu0 0.0
        %1739 = vmatpush1.xpose.msra.mxu0 0.0
        %1740 = vmatprep.subr.mxu0 0.0
        %1741 = vmatpush1.xpose.msra.mxu0 0.0
        %1742 = vmatprep.subr.mxu0 0.0
        %1743 = vmatpush1.xpose.msra.mxu0 0.0
        %1744 = vmatprep.subr.mxu0 0.0
        %1745 = vmatpush1.xpose.msra.mxu0 0.0
        %1746 = vmatprep.subr.mxu0 0.0
        %1747 = vmatpush1.xpose.msra.mxu0 0.0
        %1748 = vmatprep.subr.mxu0 0.0
        %1749 = vmatpush1.xpose.msra.mxu0 0.0
        %1750 = vmatprep.subr.mxu0 0.0
        %1751 = vmatpush1.xpose.msra.mxu0 0.0
        %1752 = vmatprep.subr.mxu0 0.0
        %1753 = vmatpush1.xpose.msra.mxu0 0.0
        %1754 = vmatprep.subr.mxu0 0.0
        %1755 = vmatpush1.xpose.msra.mxu0 0.0
        %1756 = vmatprep.subr.mxu0 0.0
        %1757 = vmatpush1.xpose.msra.mxu0 0.0
        %1758 = vmatprep.subr.mxu0 0.0
        %1759 = vmatpush1.xpose.msra.mxu0 0.0
        %1760 = vmatprep.subr.mxu0 0.0
        %1761 = vmatpush1.xpose.msra.mxu0 0.0
        %1762 = vmatprep.subr.mxu0 0.0
        %1763 = vmatpush1.xpose.msra.mxu0 0.0
        %1764 = vmatprep.subr.mxu0 0.0
        %1765 = vmatpush1.xpose.msra.mxu0 0.0
        %1766 = vmatprep.subr.mxu0 0.0
        %1767 = vmatpush1.xpose.msra.mxu0 0.0
        %1768 = vmatprep.subr.mxu0 0.0
        %1769 = vmatpush1.xpose.msra.mxu0 0.0
        %1770 = vmatprep.subr.mxu0 0.0
        %1771 = vmatpush1.xpose.msra.mxu0 0.0
        %1772 = vmatprep.mubr.f32.mxu0 0.0
        %1773 = vmatmul.mubr.f32.gmra.mrb[0].mxu0 %v1703
        %v1774 = vpop.f32.mrb[0].mxu0
        %v1775 = vadd.f32 0.0, %v1774
        %v1776 = vpop.f32.mrb[0].mxu0
        %1777 = vdwg.mxu0
        %v1778 = vsel %vm662, %v1775, -inf
        %1779 = vmax.xlane.f32.xlu0 %v1778
        %v1780 = vpop.xlane.xlu0 %1779
        %v1781 = vsub.f32 %v1775, %v1780
        %v1782 = vmul.f32 %v1781, 1.442695
        %v1783 = vpow.pop %v1782
        %v1785 = vsel %vm662, %v1783, 0
        %1787 = vmatprep.subr.mxu0 0.0
        %1788 = vmatpush1.msra.mxu0 %v1699
        %1789 = vmatprep.subr.mxu0 0.0
        %1790 = vmatpush1.msra.mxu0 0.0
        %1791 = vmatprep.subr.mxu0 0.0
        %1792 = vmatpush1.msra.mxu0 0.0
        %1793 = vmatprep.subr.mxu0 0.0
        %1794 = vmatpush1.msra.mxu0 0.0
        %1795 = vmatprep.subr.mxu0 0.0
        %1796 = vmatpush1.msra.mxu0 0.0
        %1797 = vmatprep.subr.mxu0 0.0
        %1798 = vmatpush1.msra.mxu0 0.0
        %1799 = vmatprep.subr.mxu0 0.0
        %1800 = vmatpush1.msra.mxu0 0.0
        %1801 = vmatprep.subr.mxu0 0.0
        %1802 = vmatpush1.msra.mxu0 0.0
        %1803 = vmatprep.subr.mxu0 0.0
        %1804 = vmatpush1.msra.mxu0 0.0
        %1805 = vmatprep.subr.mxu0 0.0
        %1806 = vmatpush1.msra.mxu0 0.0
        %1807 = vmatprep.subr.mxu0 0.0
        %1808 = vmatpush1.msra.mxu0 0.0
        %1809 = vmatprep.subr.mxu0 0.0
        %1810 = vmatpush1.msra.mxu0 0.0
        %1811 = vmatprep.subr.mxu0 0.0
        %1812 = vmatpush1.msra.mxu0 0.0
        %1813 = vmatprep.subr.mxu0 0.0
        %1814 = vmatpush1.msra.mxu0 0.0
        %1815 = vmatprep.subr.mxu0 0.0
        %1816 = vmatpush1.msra.mxu0 0.0
        %1817 = vmatprep.subr.mxu0 0.0
        %1818 = vmatpush1.msra.mxu0 0.0
        %1819 = vmatprep.subr.mxu0 0.0
        %1820 = vmatpush1.msra.mxu0 0.0
        %1821 = vmatprep.subr.mxu0 0.0
        %1822 = vmatpush1.msra.mxu0 0.0
        %1823 = vmatprep.subr.mxu0 0.0
        %1824 = vmatpush1.msra.mxu0 0.0
        %1825 = vmatprep.subr.mxu0 0.0
        %1826 = vmatpush1.msra.mxu0 0.0
        %1827 = vmatprep.subr.mxu0 0.0
        %1828 = vmatpush1.msra.mxu0 0.0
        %1829 = vmatprep.subr.mxu0 0.0
        %1830 = vmatpush1.msra.mxu0 0.0
        %1831 = vmatprep.subr.mxu0 0.0
        %1832 = vmatpush1.msra.mxu0 0.0
        %1833 = vmatprep.subr.mxu0 0.0
        %1834 = vmatpush1.msra.mxu0 0.0
        %1835 = vmatprep.subr.mxu0 0.0
        %1836 = vmatpush1.msra.mxu0 0.0
        %1837 = vmatprep.subr.mxu0 0.0
        %1838 = vmatpush1.msra.mxu0 0.0
        %1839 = vmatprep.subr.mxu0 0.0
        %1840 = vmatpush1.msra.mxu0 0.0
        %1841 = vmatprep.subr.mxu0 0.0
        %1842 = vmatpush1.msra.mxu0 0.0
        %1843 = vmatprep.subr.mxu0 0.0
        %1844 = vmatpush1.msra.mxu0 0.0
        %1845 = vmatprep.subr.mxu0 0.0
        %1846 = vmatpush1.msra.mxu0 0.0
        %1847 = vmatprep.subr.mxu0 0.0
        %1848 = vmatpush1.msra.mxu0 0.0
        %1849 = vmatprep.subr.mxu0 0.0
        %1850 = vmatpush1.msra.mxu0 0.0
        %1851 = vmatprep.mubr.f32.mxu0 0.0
        %1852 = vmatmul.mubr.f32.gmra.mrb[0].mxu0 %v1785
        %v1853 = vpop.f32.mrb[0].mxu0
        %v1854 = vadd.f32 0.0, %v1853
        %v1855 = vpop.f32.mrb[0].mxu0
        %1856 = vdwg.mxu0
        %v1857 = vsel %vm662, %v1783, 0.0
        %1858 = vadd.xlane.f32.xlu0 %v1857
        %v1859 = vpop.xlane.xlu0 %1858
        %v1860 = vrcp.pop %v1859
        %v1861 = vmul.f32 %v1854, %v1860
        %s1862 = scalar_lea.vmem %s7, 16
        %v1863 = vld [vmem:[%s1862] sm:$0xff]
        %v1865 = vsel %vm662, %v1861, 0
        %1867 = vmatprep.subr.mxu0 0.0
        %1868 = vmatpush1.msra.mxu0 %v1863
        %1869 = vmatprep.subr.mxu0 0.0
        %1870 = vmatpush1.msra.mxu0 0.0
        %1871 = vmatprep.subr.mxu0 0.0
        %1872 = vmatpush1.msra.mxu0 0.0
        %1873 = vmatprep.subr.mxu0 0.0
        %1874 = vmatpush1.msra.mxu0 0.0
        %1875 = vmatprep.subr.mxu0 0.0
        %1876 = vmatpush1.msra.mxu0 0.0
        %1877 = vmatprep.subr.mxu0 0.0
        %1878 = vmatpush1.msra.mxu0 0.0
        %1879 = vmatprep.subr.mxu0 0.0
        %1880 = vmatpush1.msra.mxu0 0.0
        %1881 = vmatprep.subr.mxu0 0.0
        %1882 = vmatpush1.msra.mxu0 0.0
        %1883 = vmatprep.subr.mxu0 0.0
        %1884 = vmatpush1.msra.mxu0 0.0
        %1885 = vmatprep.subr.mxu0 0.0
        %1886 = vmatpush1.msra.mxu0 0.0
        %1887 = vmatprep.subr.mxu0 0.0
        %1888 = vmatpush1.msra.mxu0 0.0
        %1889 = vmatprep.subr.mxu0 0.0
        %1890 = vmatpush1.msra.mxu0 0.0
        %1891 = vmatprep.subr.mxu0 0.0
        %1892 = vmatpush1.msra.mxu0 0.0
        %1893 = vmatprep.subr.mxu0 0.0
        %1894 = vmatpush1.msra.mxu0 0.0
        %1895 = vmatprep.subr.mxu0 0.0
        %1896 = vmatpush1.msra.mxu0 0.0
        %1897 = vmatprep.subr.mxu0 0.0
        %1898 = vmatpush1.msra.mxu0 0.0
        %1899 = vmatprep.subr.mxu0 0.0
        %1900 = vmatpush1.msra.mxu0 0.0
        %1901 = vmatprep.subr.mxu0 0.0
        %1902 = vmatpush1.msra.mxu0 0.0
        %1903 = vmatprep.subr.mxu0 0.0
        %1904 = vmatpush1.msra.mxu0 0.0
        %1905 = vmatprep.subr.mxu0 0.0
        %1906 = vmatpush1.msra.mxu0 0.0
        %1907 = vmatprep.subr.mxu0 0.0
        %1908 = vmatpush1.msra.mxu0 0.0
        %1909 = vmatprep.subr.mxu0 0.0
        %1910 = vmatpush1.msra.mxu0 0.0
        %1911 = vmatprep.subr.mxu0 0.0
        %1912 = vmatpush1.msra.mxu0 0.0
        %1913 = vmatprep.subr.mxu0 0.0
        %1914 = vmatpush1.msra.mxu0 0.0
        %1915 = vmatprep.subr.mxu0 0.0
        %1916 = vmatpush1.msra.mxu0 0.0
        %1917 = vmatprep.subr.mxu0 0.0
        %1918 = vmatpush1.msra.mxu0 0.0
        %1919 = vmatprep.subr.mxu0 0.0
        %1920 = vmatpush1.msra.mxu0 0.0
        %1921 = vmatprep.subr.mxu0 0.0
        %1922 = vmatpush1.msra.mxu0 0.0
        %1923 = vmatprep.subr.mxu0 0.0
        %1924 = vmatpush1.msra.mxu0 0.0
        %1925 = vmatprep.subr.mxu0 0.0
        %1926 = vmatpush1.msra.mxu0 0.0
        %1927 = vmatprep.subr.mxu0 0.0
        %1928 = vmatpush1.msra.mxu0 0.0
        %1929 = vmatprep.subr.mxu0 0.0
        %1930 = vmatpush1.msra.mxu0 0.0
        %1931 = vmatprep.mubr.f32.mxu0 0.0
        %1932 = vmatmul.mubr.f32.gmra.mrb[0].mxu0 %v1865
        %v1933 = vpop.f32.mrb[0].mxu0
        %v1934 = vadd.f32 0.0, %v1933
        %v1935 = vpop.f32.mrb[0].mxu0
        %1936 = vdwg.mxu0
        %v1937 = vadd.f32 %v1414, %v1934
        %s1938 = scalar_lea.vmem %s1, 384
        %v1939 = vld [vmem:[%s1938] sm:$0xff]
        %v1940 = vld [vmem:[%s1938 + $0x8] sm:$0xff]
        %v1941 = vld [vmem:[%s1938 + $0x10] sm:$0xff]
        %v1942 = vld [vmem:[%s1938 + $0x18] sm:$0xff]
        %v1943 = vld [vmem:[%s1938 + $0x20] sm:$0xff]
        %v1944 = vld [vmem:[%s1938 + $0x28] sm:$0xff]
        %v1945 = vld [vmem:[%s1938 + $0x30] sm:$0xff]
        %v1946 = vld [vmem:[%s1938 + $0x38] sm:$0xff]
        %v1947 = vld [vmem:[%s1938 + $0x40] sm:$0xff]
        %v1948 = vld [vmem:[%s1938 + $0x48] sm:$0xff]
        %v1949 = vld [vmem:[%s1938 + $0x50] sm:$0xff]
        %v1950 = vld [vmem:[%s1938 + $0x58] sm:$0xff]
        %v1951 = vld [vmem:[%s1938 + $0x60] sm:$0xff]
        %v1952 = vld [vmem:[%s1938 + $0x68] sm:$0xff]
        %v1953 = vld [vmem:[%s1938 + $0x70] sm:$0xff]
        %v1954 = vld [vmem:[%s1938 + $0x78] sm:$0xff]
        %s1955 = scalar_lea.vmem %s4, 3
        %v1956 = vld [vmem:[%s1955] sm:$0x1]
        %v1958 = vlaneseq
        %v1959 = vshrl.u32 %v1958, 7
        %v1960 = vsub.s32 0, %v1959
        %v1961 = vrot.slane %v1956, %v1960
        %1963 = vmatprep.subr.mxu0 0.0
        %1964 = vmatpush1.msra.mxu0 %v1939
        %1965 = vmatprep.subr.mxu0 0.0
        %1966 = vmatpush1.msra.mxu0 %v1940
        %1967 = vmatprep.subr.mxu0 0.0
        %1968 = vmatpush1.msra.mxu0 %v1941
        %1969 = vmatprep.subr.mxu0 0.0
        %1970 = vmatpush1.msra.mxu0 %v1942
        %1971 = vmatprep.subr.mxu0 0.0
        %1972 = vmatpush1.msra.mxu0 %v1943
        %1973 = vmatprep.subr.mxu0 0.0
        %1974 = vmatpush1.msra.mxu0 %v1944
        %1975 = vmatprep.subr.mxu0 0.0
        %1976 = vmatpush1.msra.mxu0 %v1945
        %1977 = vmatprep.subr.mxu0 0.0
        %1978 = vmatpush1.msra.mxu0 %v1946
        %1979 = vmatprep.subr.mxu0 0.0
        %1980 = vmatpush1.msra.mxu0 %v1947
        %1981 = vmatprep.subr.mxu0 0.0
        %1982 = vmatpush1.msra.mxu0 %v1948
        %1983 = vmatprep.subr.mxu0 0.0
        %1984 = vmatpush1.msra.mxu0 %v1949
        %1985 = vmatprep.subr.mxu0 0.0
        %1986 = vmatpush1.msra.mxu0 %v1950
        %1987 = vmatprep.subr.mxu0 0.0
        %1988 = vmatpush1.msra.mxu0 %v1951
        %1989 = vmatprep.subr.mxu0 0.0
        %1990 = vmatpush1.msra.mxu0 %v1952
        %1991 = vmatprep.subr.mxu0 0.0
        %1992 = vmatpush1.msra.mxu0 %v1953
        %1993 = vmatprep.subr.mxu0 0.0
        %1994 = vmatpush1.msra.mxu0 %v1954
        %1995 = vmatprep.subr.mxu0 0.0
        %1996 = vmatpush1.msra.mxu0 0.0
        %1997 = vmatprep.subr.mxu0 0.0
        %1998 = vmatpush1.msra.mxu0 0.0
        %1999 = vmatprep.subr.mxu0 0.0
        %2000 = vmatpush1.msra.mxu0 0.0
        %2001 = vmatprep.subr.mxu0 0.0
        %2002 = vmatpush1.msra.mxu0 0.0
        %2003 = vmatprep.subr.mxu0 0.0
        %2004 = vmatpush1.msra.mxu0 0.0
        %2005 = vmatprep.subr.mxu0 0.0
        %2006 = vmatpush1.msra.mxu0 0.0
        %2007 = vmatprep.subr.mxu0 0.0
        %2008 = vmatpush1.msra.mxu0 0.0
        %2009 = vmatprep.subr.mxu0 0.0
        %2010 = vmatpush1.msra.mxu0 0.0
        %2011 = vmatprep.subr.mxu0 0.0
        %2012 = vmatpush1.msra.mxu0 0.0
        %2013 = vmatprep.subr.mxu0 0.0
        %2014 = vmatpush1.msra.mxu0 0.0
        %2015 = vmatprep.subr.mxu0 0.0
        %2016 = vmatpush1.msra.mxu0 0.0
        %2017 = vmatprep.subr.mxu0 0.0
        %2018 = vmatpush1.msra.mxu0 0.0
        %2019 = vmatprep.subr.mxu0 0.0
        %2020 = vmatpush1.msra.mxu0 0.0
        %2021 = vmatprep.subr.mxu0 0.0
        %2022 = vmatpush1.msra.mxu0 0.0
        %2023 = vmatprep.subr.mxu0 0.0
        %2024 = vmatpush1.msra.mxu0 0.0
        %2025 = vmatprep.subr.mxu0 0.0
        %2026 = vmatpush1.msra.mxu0 0.0
        %2027 = vmatprep.mubr.f32.mxu0 0.0
        %2028 = vmatmul.mubr.f32.gmra.mrb[0].mxu0 %v382
        %v2029 = vpop.f32.mrb[0].mxu0
        %v2030 = vadd.f32 %v1961, %v2029
        %v2031 = vpop.f32.mrb[0].mxu0
        %2032 = vdwg.mxu0
        %s2033 = scalar_lea.vmem %s2, 384
        %v2034 = vld [vmem:[%s2033] sm:$0xff]
        %v2035 = vld [vmem:[%s2033 + $0x8] sm:$0xff]
        %v2036 = vld [vmem:[%s2033 + $0x10] sm:$0xff]
        %v2037 = vld [vmem:[%s2033 + $0x18] sm:$0xff]
        %v2038 = vld [vmem:[%s2033 + $0x20] sm:$0xff]
        %v2039 = vld [vmem:[%s2033 + $0x28] sm:$0xff]
        %v2040 = vld [vmem:[%s2033 + $0x30] sm:$0xff]
        %v2041 = vld [vmem:[%s2033 + $0x38] sm:$0xff]
        %v2042 = vld [vmem:[%s2033 + $0x40] sm:$0xff]
        %v2043 = vld [vmem:[%s2033 + $0x48] sm:$0xff]
        %v2044 = vld [vmem:[%s2033 + $0x50] sm:$0xff]
        %v2045 = vld [vmem:[%s2033 + $0x58] sm:$0xff]
        %v2046 = vld [vmem:[%s2033 + $0x60] sm:$0xff]
        %v2047 = vld [vmem:[%s2033 + $0x68] sm:$0xff]
        %v2048 = vld [vmem:[%s2033 + $0x70] sm:$0xff]
        %v2049 = vld [vmem:[%s2033 + $0x78] sm:$0xff]
        %s2050 = scalar_lea.vmem %s5, 3
        %v2051 = vld [vmem:[%s2050] sm:$0x1]
        %v2053 = vlaneseq
        %v2054 = vshrl.u32 %v2053, 7
        %v2055 = vsub.s32 0, %v2054
        %v2056 = vrot.slane %v2051, %v2055
        %2058 = vmatprep.subr.mxu0 0.0
        %2059 = vmatpush1.msra.mxu0 %v2034
        %2060 = vmatprep.subr.mxu0 0.0
        %2061 = vmatpush1.msra.mxu0 %v2035
        %2062 = vmatprep.subr.mxu0 0.0
        %2063 = vmatpush1.msra.mxu0 %v2036
        %2064 = vmatprep.subr.mxu0 0.0
        %2065 = vmatpush1.msra.mxu0 %v2037
        %2066 = vmatprep.subr.mxu0 0.0
        %2067 = vmatpush1.msra.mxu0 %v2038
        %2068 = vmatprep.subr.mxu0 0.0
        %2069 = vmatpush1.msra.mxu0 %v2039
        %2070 = vmatprep.subr.mxu0 0.0
        %2071 = vmatpush1.msra.mxu0 %v2040
        %2072 = vmatprep.subr.mxu0 0.0
        %2073 = vmatpush1.msra.mxu0 %v2041
        %2074 = vmatprep.subr.mxu0 0.0
        %2075 = vmatpush1.msra.mxu0 %v2042
        %2076 = vmatprep.subr.mxu0 0.0
        %2077 = vmatpush1.msra.mxu0 %v2043
        %2078 = vmatprep.subr.mxu0 0.0
        %2079 = vmatpush1.msra.mxu0 %v2044
        %2080 = vmatprep.subr.mxu0 0.0
        %2081 = vmatpush1.msra.mxu0 %v2045
        %2082 = vmatprep.subr.mxu0 0.0
        %2083 = vmatpush1.msra.mxu0 %v2046
        %2084 = vmatprep.subr.mxu0 0.0
        %2085 = vmatpush1.msra.mxu0 %v2047
        %2086 = vmatprep.subr.mxu0 0.0
        %2087 = vmatpush1.msra.mxu0 %v2048
        %2088 = vmatprep.subr.mxu0 0.0
        %2089 = vmatpush1.msra.mxu0 %v2049
        %2090 = vmatprep.subr.mxu0 0.0
        %2091 = vmatpush1.msra.mxu0 0.0
        %2092 = vmatprep.subr.mxu0 0.0
        %2093 = vmatpush1.msra.mxu0 0.0
        %2094 = vmatprep.subr.mxu0 0.0
        %2095 = vmatpush1.msra.mxu0 0.0
        %2096 = vmatprep.subr.mxu0 0.0
        %2097 = vmatpush1.msra.mxu0 0.0
        %2098 = vmatprep.subr.mxu0 0.0
        %2099 = vmatpush1.msra.mxu0 0.0
        %2100 = vmatprep.subr.mxu0 0.0
        %2101 = vmatpush1.msra.mxu0 0.0
        %2102 = vmatprep.subr.mxu0 0.0
        %2103 = vmatpush1.msra.mxu0 0.0
        %2104 = vmatprep.subr.mxu0 0.0
        %2105 = vmatpush1.msra.mxu0 0.0
        %2106 = vmatprep.subr.mxu0 0.0
        %2107 = vmatpush1.msra.mxu0 0.0
        %2108 = vmatprep.subr.mxu0 0.0
        %2109 = vmatpush1.msra.mxu0 0.0
        %2110 = vmatprep.subr.mxu0 0.0
        %2111 = vmatpush1.msra.mxu0 0.0
        %2112 = vmatprep.subr.mxu0 0.0
        %2113 = vmatpush1.msra.mxu0 0.0
        %2114 = vmatprep.subr.mxu0 0.0
        %2115 = vmatpush1.msra.mxu0 0.0
        %2116 = vmatprep.subr.mxu0 0.0
        %2117 = vmatpush1.msra.mxu0 0.0
        %2118 = vmatprep.subr.mxu0 0.0
        %2119 = vmatpush1.msra.mxu0 0.0
        %2120 = vmatprep.subr.mxu0 0.0
        %2121 = vmatpush1.msra.mxu0 0.0
        %2122 = vmatprep.mubr.f32.mxu0 0.0
        %2123 = vmatmul.mubr.f32.gmra.mrb[0].mxu0 %v382
        %v2124 = vpop.f32.mrb[0].mxu0
        %v2125 = vadd.f32 %v2056, %v2124
        %v2126 = vpop.f32.mrb[0].mxu0
        %2127 = vdwg.mxu0
        %s2128 = scalar_lea.vmem %s3, 384
        %v2129 = vld [vmem:[%s2128] sm:$0xff]
        %v2130 = vld [vmem:[%s2128 + $0x8] sm:$0xff]
        %v2131 = vld [vmem:[%s2128 + $0x10] sm:$0xff]
        %v2132 = vld [vmem:[%s2128 + $0x18] sm:$0xff]
        %v2133 = vld [vmem:[%s2128 + $0x20] sm:$0xff]
        %v2134 = vld [vmem:[%s2128 + $0x28] sm:$0xff]
        %v2135 = vld [vmem:[%s2128 + $0x30] sm:$0xff]
        %v2136 = vld [vmem:[%s2128 + $0x38] sm:$0xff]
        %v2137 = vld [vmem:[%s2128 + $0x40] sm:$0xff]
        %v2138 = vld [vmem:[%s2128 + $0x48] sm:$0xff]
        %v2139 = vld [vmem:[%s2128 + $0x50] sm:$0xff]
        %v2140 = vld [vmem:[%s2128 + $0x58] sm:$0xff]
        %v2141 = vld [vmem:[%s2128 + $0x60] sm:$0xff]
        %v2142 = vld [vmem:[%s2128 + $0x68] sm:$0xff]
        %v2143 = vld [vmem:[%s2128 + $0x70] sm:$0xff]
        %v2144 = vld [vmem:[%s2128 + $0x78] sm:$0xff]
        %s2145 = scalar_lea.vmem %s6, 3
        %v2146 = vld [vmem:[%s2145] sm:$0x1]
        %v2148 = vlaneseq
        %v2149 = vshrl.u32 %v2148, 7
        %v2150 = vsub.s32 0, %v2149
        %v2151 = vrot.slane %v2146, %v2150
        %2153 = vmatprep.subr.mxu0 0.0
        %2154 = vmatpush1.msra.mxu0 %v2129
        %2155 = vmatprep.subr.mxu0 0.0
        %2156 = vmatpush1.msra.mxu0 %v2130
        %2157 = vmatprep.subr.mxu0 0.0
        %2158 = vmatpush1.msra.mxu0 %v2131
        %2159 = vmatprep.subr.mxu0 0.0
        %2160 = vmatpush1.msra.mxu0 %v2132
        %2161 = vmatprep.subr.mxu0 0.0
        %2162 = vmatpush1.msra.mxu0 %v2133
        %2163 = vmatprep.subr.mxu0 0.0
        %2164 = vmatpush1.msra.mxu0 %v2134
        %2165 = vmatprep.subr.mxu0 0.0
        %2166 = vmatpush1.msra.mxu0 %v2135
        %2167 = vmatprep.subr.mxu0 0.0
        %2168 = vmatpush1.msra.mxu0 %v2136
        %2169 = vmatprep.subr.mxu0 0.0
        %2170 = vmatpush1.msra.mxu0 %v2137
        %2171 = vmatprep.subr.mxu0 0.0
        %2172 = vmatpush1.msra.mxu0 %v2138
        %2173 = vmatprep.subr.mxu0 0.0
        %2174 = vmatpush1.msra.mxu0 %v2139
        %2175 = vmatprep.subr.mxu0 0.0
        %2176 = vmatpush1.msra.mxu0 %v2140
        %2177 = vmatprep.subr.mxu0 0.0
        %2178 = vmatpush1.msra.mxu0 %v2141
        %2179 = vmatprep.subr.mxu0 0.0
        %2180 = vmatpush1.msra.mxu0 %v2142
        %2181 = vmatprep.subr.mxu0 0.0
        %2182 = vmatpush1.msra.mxu0 %v2143
        %2183 = vmatprep.subr.mxu0 0.0
        %2184 = vmatpush1.msra.mxu0 %v2144
        %2185 = vmatprep.subr.mxu0 0.0
        %2186 = vmatpush1.msra.mxu0 0.0
        %2187 = vmatprep.subr.mxu0 0.0
        %2188 = vmatpush1.msra.mxu0 0.0
        %2189 = vmatprep.subr.mxu0 0.0
        %2190 = vmatpush1.msra.mxu0 0.0
        %2191 = vmatprep.subr.mxu0 0.0
        %2192 = vmatpush1.msra.mxu0 0.0
        %2193 = vmatprep.subr.mxu0 0.0
        %2194 = vmatpush1.msra.mxu0 0.0
        %2195 = vmatprep.subr.mxu0 0.0
        %2196 = vmatpush1.msra.mxu0 0.0
        %2197 = vmatprep.subr.mxu0 0.0
        %2198 = vmatpush1.msra.mxu0 0.0
        %2199 = vmatprep.subr.mxu0 0.0
        %2200 = vmatpush1.msra.mxu0 0.0
        %2201 = vmatprep.subr.mxu0 0.0
        %2202 = vmatpush1.msra.mxu0 0.0
        %2203 = vmatprep.subr.mxu0 0.0
        %2204 = vmatpush1.msra.mxu0 0.0
        %2205 = vmatprep.subr.mxu0 0.0
        %2206 = vmatpush1.msra.mxu0 0.0
        %2207 = vmatprep.subr.mxu0 0.0
        %2208 = vmatpush1.msra.mxu0 0.0
        %2209 = vmatprep.subr.mxu0 0.0
        %2210 = vmatpush1.msra.mxu0 0.0
        %2211 = vmatprep.subr.mxu0 0.0
        %2212 = vmatpush1.msra.mxu0 0.0
        %2213 = vmatprep.subr.mxu0 0.0
        %2214 = vmatpush1.msra.mxu0 0.0
        %2215 = vmatprep.subr.mxu0 0.0
        %2216 = vmatpush1.msra.mxu0 0.0
        %2217 = vmatprep.mubr.f32.mxu0 0.0
        %2218 = vmatmul.mubr.f32.gmra.mrb[0].mxu0 %v382
        %v2219 = vpop.f32.mrb[0].mxu0
        %v2220 = vadd.f32 %v2151, %v2219
        %v2221 = vpop.f32.mrb[0].mxu0
        %2222 = vdwg.mxu0
        %v2224 = vsel %vm662, %v2030, 0
        %v2227 = vsel %vm662, %v2125, 0
        %2229 = vmatprep.subr.mxu0 0.0
        %2230 = vmatpush1.xpose.msra.mxu0 %v2227
        %2231 = vmatprep.subr.mxu0 0.0
        %2232 = vmatpush1.xpose.msra.mxu0 0.0
        %2233 = vmatprep.subr.mxu0 0.0
        %2234 = vmatpush1.xpose.msra.mxu0 0.0
        %2235 = vmatprep.subr.mxu0 0.0
        %2236 = vmatpush1.xpose.msra.mxu0 0.0
        %2237 = vmatprep.subr.mxu0 0.0
        %2238 = vmatpush1.xpose.msra.mxu0 0.0
        %2239 = vmatprep.subr.mxu0 0.0
        %2240 = vmatpush1.xpose.msra.mxu0 0.0
        %2241 = vmatprep.subr.mxu0 0.0
        %2242 = vmatpush1.xpose.msra.mxu0 0.0
        %2243 = vmatprep.subr.mxu0 0.0
        %2244 = vmatpush1.xpose.msra.mxu0 0.0
        %2245 = vmatprep.subr.mxu0 0.0
        %2246 = vmatpush1.xpose.msra.mxu0 0.0
        %2247 = vmatprep.subr.mxu0 0.0
        %2248 = vmatpush1.xpose.msra.mxu0 0.0
        %2249 = vmatprep.subr.mxu0 0.0
        %2250 = vmatpush1.xpose.msra.mxu0 0.0
        %2251 = vmatprep.subr.mxu0 0.0
        %2252 = vmatpush1.xpose.msra.mxu0 0.0
        %2253 = vmatprep.subr.mxu0 0.0
        %2254 = vmatpush1.xpose.msra.mxu0 0.0
        %2255 = vmatprep.subr.mxu0 0.0
        %2256 = vmatpush1.xpose.msra.mxu0 0.0
        %2257 = vmatprep.subr.mxu0 0.0
        %2258 = vmatpush1.xpose.msra.mxu0 0.0
        %2259 = vmatprep.subr.mxu0 0.0
        %2260 = vmatpush1.xpose.msra.mxu0 0.0
        %2261 = vmatprep.subr.mxu0 0.0
        %2262 = vmatpush1.xpose.msra.mxu0 0.0
        %2263 = vmatprep.subr.mxu0 0.0
        %2264 = vmatpush1.xpose.msra.mxu0 0.0
        %2265 = vmatprep.subr.mxu0 0.0
        %2266 = vmatpush1.xpose.msra.mxu0 0.0
        %2267 = vmatprep.subr.mxu0 0.0
        %2268 = vmatpush1.xpose.msra.mxu0 0.0
        %2269 = vmatprep.subr.mxu0 0.0
        %2270 = vmatpush1.xpose.msra.mxu0 0.0
        %2271 = vmatprep.subr.mxu0 0.0
        %2272 = vmatpush1.xpose.msra.mxu0 0.0
        %2273 = vmatprep.subr.mxu0 0.0
        %2274 = vmatpush1.xpose.msra.mxu0 0.0
        %2275 = vmatprep.subr.mxu0 0.0
        %2276 = vmatpush1.xpose.msra.mxu0 0.0
        %2277 = vmatprep.subr.mxu0 0.0
        %2278 = vmatpush1.xpose.msra.mxu0 0.0
        %2279 = vmatprep.subr.mxu0 0.0
        %2280 = vmatpush1.xpose.msra.mxu0 0.0
        %2281 = vmatprep.subr.mxu0 0.0
        %2282 = vmatpush1.xpose.msra.mxu0 0.0
        %2283 = vmatprep.subr.mxu0 0.0
        %2284 = vmatpush1.xpose.msra.mxu0 0.0
        %2285 = vmatprep.subr.mxu0 0.0
        %2286 = vmatpush1.xpose.msra.mxu0 0.0
        %2287 = vmatprep.subr.mxu0 0.0
        %2288 = vmatpush1.xpose.msra.mxu0 0.0
        %2289 = vmatprep.subr.mxu0 0.0
        %2290 = vmatpush1.xpose.msra.mxu0 0.0
        %2291 = vmatprep.subr.mxu0 0.0
        %2292 = vmatpush1.xpose.msra.mxu0 0.0
        %2293 = vmatprep.mubr.f32.mxu0 0.0
        %2294 = vmatmul.mubr.f32.gmra.mrb[0].mxu0 %v2224
        %v2295 = vpop.f32.mrb[0].mxu0
        %v2296 = vadd.f32 0.0, %v2295
        %v2297 = vpop.f32.mrb[0].mxu0
        %2298 = vdwg.mxu0
        %v2299 = vsel %vm662, %v2296, -inf
        %2300 = vmax.xlane.f32.xlu0 %v2299
        %v2301 = vpop.xlane.xlu0 %2300
        %v2302 = vsub.f32 %v2296, %v2301
        %v2303 = vmul.f32 %v2302, 1.442695
        %v2304 = vpow.pop %v2303
        %v2306 = vsel %vm662, %v2304, 0
        %2308 = vmatprep.subr.mxu0 0.0
        %2309 = vmatpush1.msra.mxu0 %v2220
        %2310 = vmatprep.subr.mxu0 0.0
        %2311 = vmatpush1.msra.mxu0 0.0
        %2312 = vmatprep.subr.mxu0 0.0
        %2313 = vmatpush1.msra.mxu0 0.0
        %2314 = vmatprep.subr.mxu0 0.0
        %2315 = vmatpush1.msra.mxu0 0.0
        %2316 = vmatprep.subr.mxu0 0.0
        %2317 = vmatpush1.msra.mxu0 0.0
        %2318 = vmatprep.subr.mxu0 0.0
        %2319 = vmatpush1.msra.mxu0 0.0
        %2320 = vmatprep.subr.mxu0 0.0
        %2321 = vmatpush1.msra.mxu0 0.0
        %2322 = vmatprep.subr.mxu0 0.0
        %2323 = vmatpush1.msra.mxu0 0.0
        %2324 = vmatprep.subr.mxu0 0.0
        %2325 = vmatpush1.msra.mxu0 0.0
        %2326 = vmatprep.subr.mxu0 0.0
        %2327 = vmatpush1.msra.mxu0 0.0
        %2328 = vmatprep.subr.mxu0 0.0
        %2329 = vmatpush1.msra.mxu0 0.0
        %2330 = vmatprep.subr.mxu0 0.0
        %2331 = vmatpush1.msra.mxu0 0.0
        %2332 = vmatprep.subr.mxu0 0.0
        %2333 = vmatpush1.msra.mxu0 0.0
        %2334 = vmatprep.subr.mxu0 0.0
        %2335 = vmatpush1.msra.mxu0 0.0
        %2336 = vmatprep.subr.mxu0 0.0
        %2337 = vmatpush1.msra.mxu0 0.0
        %2338 = vmatprep.subr.mxu0 0.0
        %2339 = vmatpush1.msra.mxu0 0.0
        %2340 = vmatprep.subr.mxu0 0.0
        %2341 = vmatpush1.msra.mxu0 0.0
        %2342 = vmatprep.subr.mxu0 0.0
        %2343 = vmatpush1.msra.mxu0 0.0
        %2344 = vmatprep.subr.mxu0 0.0
        %2345 = vmatpush1.msra.mxu0 0.0
        %2346 = vmatprep.subr.mxu0 0.0
        %2347 = vmatpush1.msra.mxu0 0.0
        %2348 = vmatprep.subr.mxu0 0.0
        %2349 = vmatpush1.msra.mxu0 0.0
        %2350 = vmatprep.subr.mxu0 0.0
        %2351 = vmatpush1.msra.mxu0 0.0
        %2352 = vmatprep.subr.mxu0 0.0
        %2353 = vmatpush1.msra.mxu0 0.0
        %2354 = vmatprep.subr.mxu0 0.0
        %2355 = vmatpush1.msra.mxu0 0.0
        %2356 = vmatprep.subr.mxu0 0.0
        %2357 = vmatpush1.msra.mxu0 0.0
        %2358 = vmatprep.subr.mxu0 0.0
        %2359 = vmatpush1.msra.mxu0 0.0
        %2360 = vmatprep.subr.mxu0 0.0
        %2361 = vmatpush1.msra.mxu0 0.0
        %2362 = vmatprep.subr.mxu0 0.0
        %2363 = vmatpush1.msra.mxu0 0.0
        %2364 = vmatprep.subr.mxu0 0.0
        %2365 = vmatpush1.msra.mxu0 0.0
        %2366 = vmatprep.subr.mxu0 0.0
        %2367 = vmatpush1.msra.mxu0 0.0
        %2368 = vmatprep.subr.mxu0 0.0
        %2369 = vmatpush1.msra.mxu0 0.0
        %2370 = vmatprep.subr.mxu0 0.0
        %2371 = vmatpush1.msra.mxu0 0.0
        %2372 = vmatprep.mubr.f32.mxu0 0.0
        %2373 = vmatmul.mubr.f32.gmra.mrb[0].mxu0 %v2306
        %v2374 = vpop.f32.mrb[0].mxu0
        %v2375 = vadd.f32 0.0, %v2374
        %v2376 = vpop.f32.mrb[0].mxu0
        %2377 = vdwg.mxu0
        %v2378 = vsel %vm662, %v2304, 0.0
        %2379 = vadd.xlane.f32.xlu0 %v2378
        %v2380 = vpop.xlane.xlu0 %2379
        %v2381 = vrcp.pop %v2380
        %v2382 = vmul.f32 %v2375, %v2381
        %s2383 = scalar_lea.vmem %s7, 24
        %v2384 = vld [vmem:[%s2383] sm:$0xff]
        %v2386 = vsel %vm662, %v2382, 0
        %2388 = vmatprep.subr.mxu0 0.0
        %2389 = vmatpush1.msra.mxu0 %v2384
        %2390 = vmatprep.subr.mxu0 0.0
        %2391 = vmatpush1.msra.mxu0 0.0
        %2392 = vmatprep.subr.mxu0 0.0
        %2393 = vmatpush1.msra.mxu0 0.0
        %2394 = vmatprep.subr.mxu0 0.0
        %2395 = vmatpush1.msra.mxu0 0.0
        %2396 = vmatprep.subr.mxu0 0.0
        %2397 = vmatpush1.msra.mxu0 0.0
        %2398 = vmatprep.subr.mxu0 0.0
        %2399 = vmatpush1.msra.mxu0 0.0
        %2400 = vmatprep.subr.mxu0 0.0
        %2401 = vmatpush1.msra.mxu0 0.0
        %2402 = vmatprep.subr.mxu0 0.0
        %2403 = vmatpush1.msra.mxu0 0.0
        %2404 = vmatprep.subr.mxu0 0.0
        %2405 = vmatpush1.msra.mxu0 0.0
        %2406 = vmatprep.subr.mxu0 0.0
        %2407 = vmatpush1.msra.mxu0 0.0
        %2408 = vmatprep.subr.mxu0 0.0
        %2409 = vmatpush1.msra.mxu0 0.0
        %2410 = vmatprep.subr.mxu0 0.0
        %2411 = vmatpush1.msra.mxu0 0.0
        %2412 = vmatprep.subr.mxu0 0.0
        %2413 = vmatpush1.msra.mxu0 0.0
        %2414 = vmatprep.subr.mxu0 0.0
        %2415 = vmatpush1.msra.mxu0 0.0
        %2416 = vmatprep.subr.mxu0 0.0
        %2417 = vmatpush1.msra.mxu0 0.0
        %2418 = vmatprep.subr.mxu0 0.0
        %2419 = vmatpush1.msra.mxu0 0.0
        %2420 = vmatprep.subr.mxu0 0.0
        %2421 = vmatpush1.msra.mxu0 0.0
        %2422 = vmatprep.subr.mxu0 0.0
        %2423 = vmatpush1.msra.mxu0 0.0
        %2424 = vmatprep.subr.mxu0 0.0
        %2425 = vmatpush1.msra.mxu0 0.0
        %2426 = vmatprep.subr.mxu0 0.0
        %2427 = vmatpush1.msra.mxu0 0.0
        %2428 = vmatprep.subr.mxu0 0.0
        %2429 = vmatpush1.msra.mxu0 0.0
        %2430 = vmatprep.subr.mxu0 0.0
        %2431 = vmatpush1.msra.mxu0 0.0
        %2432 = vmatprep.subr.mxu0 0.0
        %2433 = vmatpush1.msra.mxu0 0.0
        %2434 = vmatprep.subr.mxu0 0.0
        %2435 = vmatpush1.msra.mxu0 0.0
        %2436 = vmatprep.subr.mxu0 0.0
        %2437 = vmatpush1.msra.mxu0 0.0
        %2438 = vmatprep.subr.mxu0 0.0
        %2439 = vmatpush1.msra.mxu0 0.0
        %2440 = vmatprep.subr.mxu0 0.0
        %2441 = vmatpush1.msra.mxu0 0.0
        %2442 = vmatprep.subr.mxu0 0.0
        %2443 = vmatpush1.msra.mxu0 0.0
        %2444 = vmatprep.subr.mxu0 0.0
        %2445 = vmatpush1.msra.mxu0 0.0
        %2446 = vmatprep.subr.mxu0 0.0
        %2447 = vmatpush1.msra.mxu0 0.0
        %2448 = vmatprep.subr.mxu0 0.0
        %2449 = vmatpush1.msra.mxu0 0.0
        %2450 = vmatprep.subr.mxu0 0.0
        %2451 = vmatpush1.msra.mxu0 0.0
        %2452 = vmatprep.mubr.f32.mxu0 0.0
        %2453 = vmatmul.mubr.f32.gmra.mrb[0].mxu0 %v2386
        %v2454 = vpop.f32.mrb[0].mxu0
        %v2455 = vadd.f32 0.0, %v2454
        %v2456 = vpop.f32.mrb[0].mxu0
        %2457 = vdwg.mxu0
        %v2458 = vadd.f32 %v1937, %v2455
        %v2459 = vld [vmem:[%s8] sm:$0x1]
        %v2461 = vlaneseq
        %v2462 = vshrl.u32 %v2461, 7
        %v2463 = vsub.s32 0, %v2462
        %v2464 = vrot.slane %v2459, %v2463
        %v2466 = vadd.f32 %v2458, %v2464
        %v2467 = vadd.f32 %v2466, %v382
        %2468 = vadd.xlane.f32.xlu0 %v2467
        %v2469 = vpop.xlane.xlu0 %2468
        %v2470 = vrot.slane %v2469, 4
        %v2471 = vadd.f32 %v2469, %v2470
        %v2472 = vrot.slane %v2471, 2
        %v2473 = vadd.f32 %v2471, %v2472
        %v2474 = vrot.slane %v2473, 1
        %v2475 = vadd.f32 %v2473, %v2474
        %v2476 = vmul.f32 %v2467, %v2467
        %2477 = vadd.xlane.f32.xlu0 %v2476
        %v2478 = vpop.xlane.xlu0 %2477
        %v2479 = vrot.slane %v2478, 4
        %v2480 = vadd.f32 %v2478, %v2479
        %v2481 = vrot.slane %v2480, 2
        %v2482 = vadd.f32 %v2480, %v2481
        %v2483 = vrot.slane %v2482, 1
        %v2484 = vadd.f32 %v2482, %v2483
        %v2485 = vmul.f32 %v2475, 0.00390625
        %v2486 = vmul.f32 %v2484, 0.00390625
        %v2487 = vmul.f32 %v2485, %v2485
        %v2488 = vsub.f32 %v2486, %v2487
        %v2489 = vsub.f32 %v2467, %v2485
        %v2490 = vadd.f32 %v2488, 1e-12
        %v2491 = vrsqrt.pop %v2490
        %v2492 = vmul.f32 %v2489, %v2491
        %v2493 = vld [vmem:[%s9] sm:$0x1]
        %v2495 = vlaneseq
        %v2496 = vshrl.u32 %v2495, 7
        %v2497 = vsub.s32 0, %v2496
        %v2498 = vrot.slane %v2493, %v2497
        %v2500 = vmul.f32 %v2492, %v2498
        %v2501 = vld [vmem:[%s10] sm:$0x1]
        %v2503 = vlaneseq
        %v2504 = vshrl.u32 %v2503, 7
        %v2505 = vsub.s32 0, %v2504
        %v2506 = vrot.slane %v2501, %v2505
        %v2508 = vadd.f32 %v2500, %v2506
        %2509 = vst [vmem:[%s377] sm:$0xff] %v2508
        %s2510 = sand.u32 %s269, 1
        %s2511 = scalar_lea.sflag [#allocation3], %s2510
        %s2512 = sand.u32 %s269, 1
        %s2513 = smul.addr %s2512, 8
        %s2514 = scalar_lea.vmem [#allocation2], %s2513
        // Predicated region
        $region65: #{tpu_custom_call.1} parent=63 // pred_check
          %p2515 = pneg %p279
        $region66: #{tpu_custom_call.1} parent=63 // pred_check_branch
          %2517 = sbr.rel (%p2515) target = $region68
        $region67: #{tpu_custom_call.1} parent=63 // pred_region
          %s2519 = ssub.s32 128, 128
          %2520 = vsyncadd %s2511, %s2519
          %s2521 = smul.addr %s25, 128
          %s2522 = scalar_lea.hbm %s11, %s2521
          %s2524 = sshll.u32 %s2514, 4
          %s2525 = int_to_ptr.vmem [resolvable:$true] %s2524
          %2527 = dma.vmem_to_hbm [thread:$0]  %s2525, 128, %s2522, %s2511
        $region68: #{tpu_custom_call.1} parent=63 // pred_fallthru
          _
      $region64: #{tpu_custom_call.1} parent=5 // pred_fallthru
        _
      %p2528 = scmp.le.s32.totalorder 2, %s20
      // Predicated region
      $region69: #{tpu_custom_call.1} parent=5 // pred_check
        %p2529 = pneg %p2528
      $region70: #{tpu_custom_call.1} parent=5 // pred_check_branch
        %2531 = sbr.rel (%p2529) target = $region72
      $region71: #{tpu_custom_call.1} parent=5 // pred_region
        %s2532 = ssub.s32 %s20, 2
        // Predicated region
        $region73: #{tpu_custom_call.1} parent=71 // pred_check
          %p2533 = pneg %p285
        $region74: #{tpu_custom_call.1} parent=71 // pred_check_branch
          %2535 = sbr.rel (%p2533) target = $region76
        $region75: #{tpu_custom_call.1} parent=71 // pred_region
          %s2536 = sand.u32 %s270, 1
          %s2537 = scalar_lea.sflag [#allocation3], %s2536
          %s2538 = sand.u32 %s270, 1
          %s2539 = smul.addr %s2538, 8
          %s2540 = scalar_lea.vmem [#allocation2], %s2539
          %2541 = dma.done %s2537, 128
        $region76: #{tpu_custom_call.1} parent=71 // pred_fallthru
          _
      $region72: #{tpu_custom_call.1} parent=5 // pred_fallthru
        _
    $region6: #{tpu_custom_call.1} parent=1 // loop_footer
      %s24 = sadd.s32 1, %s20
    $region7: #{tpu_custom_call.1} parent=1 // loop_footer_branch
      %19 = sbr.rel target = $region3
    $region8: #{tpu_custom_call.1} parent=1 // loop_exit
      _
    %2542 = vsyncpa [#allocation3], 1
    %s2543 = scalar_lea.sflag [#allocation3], 1
    %2544 = vsyncpa %s2543, 1

</llo_original>
